<compile_context>
chip_gen: v7x
topology: tpu7x:2x2x1
jax: 0.10.0
libtpu: 0.0.40
codegen_flags: <defaults>
</compile_context>

<pallas_src>
import jax
import jax.numpy as jnp
from jax.experimental import pallas as pl
from jax.experimental.pallas import tpu as pltpu


IN_F = 5000
H1 = 100
H1_PAD = 128   # padded hidden width (lane-dense for the MXU)
H2 = 10
OUT_F = 2


def mlp_kernel(x_ref, w1_ref, b1_ref, w2_ref, b2_ref, w3_ref, b3_ref, o_ref):
    # layer 1: (TB, 5000) -> bf16 cast (VPU, hidden under DMA) -> MXU f32 acc
    xb = x_ref[...].astype(jnp.bfloat16)
    h1 = jnp.dot(xb, w1_ref[...], preferred_element_type=jnp.float32)
    h1 = jnp.maximum(h1 + b1_ref[...], 0.0)
    # layer 2: (TB, 128) @ (128, 10) + (1, 10) -> ReLU  (pad rows of w2 are 0)
    h2 = jnp.dot(h1.astype(jnp.bfloat16), w2_ref[...],
                 preferred_element_type=jnp.float32)
    h2 = jnp.maximum(h2 + b2_ref[...], 0.0)
    # layer 3: (TB, 10) @ (10, 2) + (1, 2)   (no activation)
    out = jnp.dot(h2.astype(jnp.bfloat16), w3_ref[...],
                  preferred_element_type=jnp.float32)
    o_ref[...] = (out + b3_ref[...]).astype(o_ref.dtype)


def _round_up(n, m):
    return ((n + m - 1) // m) * m


def prepare_params(w1, b1, w2, b2, w3, b3):
    """One-time layout plumbing (call at init, NOT per forward).

    w*: transposed PyTorch weights, shape (in, out), f32.  b*: (1, out), f32.
    Pads hidden 100 -> 128 (zero cols in w1/b1, zero rows in w2 -> exact) and
    casts weights to bf16 (MXU inputs); biases stay f32 for exact adds.
    """
    w1p = jnp.zeros((IN_F, H1_PAD), jnp.float32).at[:, :H1].set(w1)
    b1p = jnp.zeros((1, H1_PAD), jnp.float32).at[:, :H1].set(b1)
    w2p = jnp.zeros((H1_PAD, H2), jnp.float32).at[:H1, :].set(w2)
    return (w1p.astype(jnp.bfloat16),
            b1p,
            w2p.astype(jnp.bfloat16),
            jnp.asarray(b2, jnp.float32),
            jnp.asarray(w3, jnp.float32).astype(jnp.bfloat16),
            jnp.asarray(b3, jnp.float32))


def logistic_regression_forward(x, params, *, block_b=512, core_parallel=False,
                                vmem_limit_bytes=None):
    """x: (B, 5000) f32 or bf16.  params: output of prepare_params().

    block_b=512 (bf16 x tile ~5 MB double-buffered ~10 MB + ~1.3 MB resident
    w1) fits the default scoped VMEM on v5e/v6e/v7x.  On v6e raise to 1024,
    or 2048 with vmem_limit_bytes~=48<<20; cap at ~1024 on v7x (64 MiB VMEM).
    """
    w1p, b1p, w2p, b2, w3p, b3 = params
    B, D = x.shape
    assert D == IN_F

    tb = min(block_b, _round_up(B, 8))      # tile rows: multiple of 8 sublanes
    grid = (pl.cdiv(B, tb),)                # ragged final block handled by Pallas

    def build(single_buffer_weights):
        def wspec(shape):
            # Weights/biases: constant block index -> loaded once, resident in
            # VMEM across all grid steps.  Single-buffer them to save VMEM.
            if single_buffer_weights:
                return pl.BlockSpec(shape, lambda i: (0, 0),
                                    pipeline_mode=pl.Buffered(1))
            return pl.BlockSpec(shape, lambda i: (0, 0))

        dim_sem = (pltpu.CORE_PARALLEL,) if core_parallel else ("parallel",)
        return pl.pallas_call(
            mlp_kernel,
            out_shape=jax.ShapeDtypeStruct((B, OUT_F), jnp.float32),
            grid=grid,
            in_specs=[
                # x: one batch tile per grid step (double-buffered / pipelined)
                pl.BlockSpec((tb, D), lambda i: (i, 0)),
                wspec((D, H1_PAD)),
                wspec((1, H1_PAD)),
                wspec((H1_PAD, H2)),
                wspec((1, H2)),
                wspec((H2, OUT_F)),
                wspec((1, OUT_F)),
            ],
            out_specs=pl.BlockSpec((tb, OUT_F), lambda i: (i, 0)),
            compiler_params=pltpu.CompilerParams(
                dimension_semantics=dim_sem,
                vmem_limit_bytes=vmem_limit_bytes,
            ),
        )

    try:
        # eager-mode helper; block so any deferred compile error surfaces here
        return jax.block_until_ready(build(True)(x, w1p, b1p, w2p, b2, w3p, b3))
    except Exception:
        # Fallback for toolchains without BlockSpec pipeline_mode support.
        return build(False)(x, w1p, b1p, w2p, b2, w3p, b3)


def init_params(key):
    """Deterministic init matching PyTorch Linear shapes (stored transposed)."""
    k1, k2, k3, k4, k5, k6 = jax.random.split(key, 6)

    def uniform(k, shape, fan_in):
        bound = 1.0 / jnp.sqrt(fan_in)
        return jax.random.uniform(k, shape, jnp.float32, -bound, bound)

    w1 = uniform(k1, (IN_F, H1), IN_F)    # linear1.weight^T
    b1 = uniform(k2, (1, H1), IN_F)       # linear1.bias
    w2 = uniform(k3, (H1, H2), H1)        # linear2.weight^T
    b2 = uniform(k4, (1, H2), H1)         # linear2.bias
    w3 = uniform(k5, (H2, OUT_F), H2)     # linear3.weight^T
    b3 = uniform(k6, (1, OUT_F), H2)      # linear3.bias
    return w1, b1, w2, b2, w3, b3


def _ref_matched(x, params):
    """Pure-JAX reference mirroring the kernel's bf16 quantization points."""
    w1p, b1p, w2p, b2, w3p, b3 = params
    h1 = jnp.dot(x.astype(jnp.bfloat16), w1p, preferred_element_type=jnp.float32)
    h1 = jnp.maximum(h1 + b1p, 0.0)
    h2 = jnp.dot(h1.astype(jnp.bfloat16), w2p, preferred_element_type=jnp.float32)
    h2 = jnp.maximum(h2 + b2, 0.0)
    out = jnp.dot(h2.astype(jnp.bfloat16), w3p, preferred_element_type=jnp.float32)
    return out + b3


if __name__ == "__main__":
    key = jax.random.PRNGKey(0)
    kx, kp = jax.random.split(key)

    batch = 8
    x = jax.random.normal(kx, (batch, IN_F), jnp.float32)
    raw = init_params(kp)
    params = prepare_params(*raw)          # hoisted out of the forward path

    out = jax.block_until_ready(logistic_regression_forward(x, params))
    assert out.shape == (batch, OUT_F), out.shape

    # Quantization-matched reference (bf16 MXU inputs, f32 accumulation).
    refm = _ref_matched(x, params)
    assert jnp.allclose(out, refm, atol=2e-3, rtol=2e-3), "mismatch vs matched ref"

    # Sanity vs the pure-f32 PyTorch-equivalent forward (bf16 cast error only).
    w1, b1, w2, b2, w3, b3 = raw
    ref32 = jnp.maximum(x @ w1 + b1, 0.0)
    ref32 = jnp.maximum(ref32 @ w2 + b2, 0.0)
    ref32 = ref32 @ w3 + b3
    assert jnp.allclose(out, ref32, atol=5e-2, rtol=5e-2), "drifted from f32 ref"

    # Ragged batch: multi-step grid + partial final block (no zero-pad copy).
    batch2 = 20
    x2 = jax.random.normal(jax.random.PRNGKey(1), (batch2, IN_F), jnp.float32)
    out2 = jax.block_until_ready(
        logistic_regression_forward(x2, params, block_b=8))
    assert out2.shape == (batch2, OUT_F), out2.shape
    refm2 = _ref_matched(x2, params)
    assert jnp.allclose(out2, refm2, atol=2e-3, rtol=2e-3), "ragged-batch mismatch"

    print("KERNEL_OK")
</pallas_src>

<mosaic_0001>
module attributes {stable_mosaic.version = 11 : i64} {
  func.func @mlp_kernel(%arg0: i32, %arg1: memref<8x5000xf32, #tpu.memory_space<vmem>>, %arg2: memref<5000x128xbf16, #tpu.memory_space<vmem>>, %arg3: memref<1x128xf32, #tpu.memory_space<vmem>>, %arg4: memref<128x10xbf16, #tpu.memory_space<vmem>>, %arg5: memref<1x10xf32, #tpu.memory_space<vmem>>, %arg6: memref<10x2xbf16, #tpu.memory_space<vmem>>, %arg7: memref<1x2xf32, #tpu.memory_space<vmem>>, %arg8: memref<8x2xf32, #tpu.memory_space<vmem>>) attributes {dimension_semantics = [#tpu.dimension_semantics<parallel>], iteration_bounds = array<i64: 1>, scalar_prefetch = 0 : i64, scratch_operands = 0 : i64, tpu.core_type = #tpu.core_type<tc>, window_params = [{transform_indices = @transform_0, window_bounds = array<i64: 8, 5000>}, {pipeline_mode = #tpu.pipeline_mode<synchronous>, transform_indices = @transform_1, window_bounds = array<i64: 5000, 128>}, {pipeline_mode = #tpu.pipeline_mode<synchronous>, transform_indices = @transform_2, window_bounds = array<i64: 1, 128>}, {pipeline_mode = #tpu.pipeline_mode<synchronous>, transform_indices = @transform_3, window_bounds = array<i64: 128, 10>}, {pipeline_mode = #tpu.pipeline_mode<synchronous>, transform_indices = @transform_4, window_bounds = array<i64: 1, 10>}, {pipeline_mode = #tpu.pipeline_mode<synchronous>, transform_indices = @transform_5, window_bounds = array<i64: 10, 2>}, {pipeline_mode = #tpu.pipeline_mode<synchronous>, transform_indices = @transform_6, window_bounds = array<i64: 1, 2>}, {transform_indices = @transform_7, window_bounds = array<i64: 8, 2>}]} {
    %c0 = arith.constant 0 : index
    %c0_0 = arith.constant 0 : index
    %0 = vector.load %arg1[%c0, %c0_0] : memref<8x5000xf32, #tpu.memory_space<vmem>>, vector<8x5000xf32>
    %1 = arith.truncf %0 : vector<8x5000xf32> to vector<8x5000xbf16>
    %c0_1 = arith.constant 0 : index
    %c0_2 = arith.constant 0 : index
    %2 = vector.load %arg2[%c0_1, %c0_2] : memref<5000x128xbf16, #tpu.memory_space<vmem>>, vector<5000x128xbf16>
    %cst = arith.constant dense<0.000000e+00> : vector<8x128xf32>
    %3 = tpu.matmul %1, %2, %cst {dimension_numbers = #tpu.dot_dimension_numbers<[1], [0], [0], [1], [0, 0, 1, 1], [], []>} : vector<8x5000xbf16>, vector<5000x128xbf16>, vector<8x128xf32> -> vector<8x128xf32>
    %c0_3 = arith.constant 0 : index
    %c0_4 = arith.constant 0 : index
    %4 = vector.load %arg3[%c0_3, %c0_4] : memref<1x128xf32, #tpu.memory_space<vmem>>, vector<1x128xf32>
    %5 = vector.broadcast %4 : vector<1x128xf32> to vector<8x128xf32>
    %6 = arith.addf %3, %5 : vector<8x128xf32>
    %cst_5 = arith.constant 0.000000e+00 : f32
    %7 = vector.broadcast %cst_5 : f32 to vector<8x128xf32>
    %8 = arith.maximumf %6, %7 : vector<8x128xf32>
    %9 = arith.truncf %8 : vector<8x128xf32> to vector<8x128xbf16>
    %c0_6 = arith.constant 0 : index
    %c0_7 = arith.constant 0 : index
    %10 = vector.load %arg4[%c0_6, %c0_7] : memref<128x10xbf16, #tpu.memory_space<vmem>>, vector<128x10xbf16>
    %cst_8 = arith.constant dense<0.000000e+00> : vector<8x10xf32>
    %11 = tpu.matmul %9, %10, %cst_8 {dimension_numbers = #tpu.dot_dimension_numbers<[1], [0], [0], [1], [0, 0, 1, 1], [], []>} : vector<8x128xbf16>, vector<128x10xbf16>, vector<8x10xf32> -> vector<8x10xf32>
    %c0_9 = arith.constant 0 : index
    %c0_10 = arith.constant 0 : index
    %12 = vector.load %arg5[%c0_9, %c0_10] : memref<1x10xf32, #tpu.memory_space<vmem>>, vector<1x10xf32>
    %13 = vector.broadcast %12 : vector<1x10xf32> to vector<8x10xf32>
    %14 = arith.addf %11, %13 : vector<8x10xf32>
    %cst_11 = arith.constant 0.000000e+00 : f32
    %15 = vector.broadcast %cst_11 : f32 to vector<8x10xf32>
    %16 = arith.maximumf %14, %15 : vector<8x10xf32>
    %17 = arith.truncf %16 : vector<8x10xf32> to vector<8x10xbf16>
    %c0_12 = arith.constant 0 : index
    %c0_13 = arith.constant 0 : index
    %18 = vector.load %arg6[%c0_12, %c0_13] : memref<10x2xbf16, #tpu.memory_space<vmem>>, vector<10x2xbf16>
    %cst_14 = arith.constant dense<0.000000e+00> : vector<8x2xf32>
    %19 = tpu.matmul %17, %18, %cst_14 {dimension_numbers = #tpu.dot_dimension_numbers<[1], [0], [0], [1], [0, 0, 1, 1], [], []>} : vector<8x10xbf16>, vector<10x2xbf16>, vector<8x2xf32> -> vector<8x2xf32>
    %c0_15 = arith.constant 0 : index
    %c0_16 = arith.constant 0 : index
    %20 = vector.load %arg7[%c0_15, %c0_16] : memref<1x2xf32, #tpu.memory_space<vmem>>, vector<1x2xf32>
    %21 = vector.broadcast %20 : vector<1x2xf32> to vector<8x2xf32>
    %22 = arith.addf %19, %21 : vector<8x2xf32>
    %c0_17 = arith.constant 0 : index
    %c0_18 = arith.constant 0 : index
    %23 = vector.load %arg8[%c0_17, %c0_18] : memref<8x2xf32, #tpu.memory_space<vmem>>, vector<8x2xf32>
    tpu.vector_store %arg8[%c0_17, %c0_18], %22 {strides = array<i32>} : memref<8x2xf32, #tpu.memory_space<vmem>>, vector<8x2xf32>,
    return
  }
  func.func @transform_0(%arg0: i32) -> (i32, i32) {
    %c0_i32 = arith.constant 0 : i32
    %c0_i32_0 = arith.constant 0 : i32
    return %arg0, %c0_i32 : i32, i32
  }
  func.func @transform_1(%arg0: i32) -> (i32, i32) {
    %c0_i32 = arith.constant 0 : i32
    %c0_i32_0 = arith.constant 0 : i32
    %c0_i32_1 = arith.constant 0 : i32
    return %c0_i32, %c0_i32_0 : i32, i32
  }
  func.func @transform_2(%arg0: i32) -> (i32, i32) {
    %c0_i32 = arith.constant 0 : i32
    %c0_i32_0 = arith.constant 0 : i32
    %c0_i32_1 = arith.constant 0 : i32
    return %c0_i32, %c0_i32_0 : i32, i32
  }
  func.func @transform_3(%arg0: i32) -> (i32, i32) {
    %c0_i32 = arith.constant 0 : i32
    %c0_i32_0 = arith.constant 0 : i32
    %c0_i32_1 = arith.constant 0 : i32
    return %c0_i32, %c0_i32_0 : i32, i32
  }
  func.func @transform_4(%arg0: i32) -> (i32, i32) {
    %c0_i32 = arith.constant 0 : i32
    %c0_i32_0 = arith.constant 0 : i32
    %c0_i32_1 = arith.constant 0 : i32
    return %c0_i32, %c0_i32_0 : i32, i32
  }
  func.func @transform_5(%arg0: i32) -> (i32, i32) {
    %c0_i32 = arith.constant 0 : i32
    %c0_i32_0 = arith.constant 0 : i32
    %c0_i32_1 = arith.constant 0 : i32
    return %c0_i32, %c0_i32_0 : i32, i32
  }
  func.func @transform_6(%arg0: i32) -> (i32, i32) {
    %c0_i32 = arith.constant 0 : i32
    %c0_i32_0 = arith.constant 0 : i32
    %c0_i32_1 = arith.constant 0 : i32
    return %c0_i32, %c0_i32_0 : i32, i32
  }
  func.func @transform_7(%arg0: i32) -> (i32, i32) {
    %c0_i32 = arith.constant 0 : i32
    %c0_i32_0 = arith.constant 0 : i32
    return %arg0, %c0_i32 : i32, i32
  }
}

module attributes {stable_mosaic.version = 11 : i64} {
  func.func @mlp_kernel(%arg0: i32, %arg1: memref<8x5000xf32, #tpu.memory_space<vmem>>, %arg2: memref<5000x128xbf16, #tpu.memory_space<vmem>>, %arg3: memref<1x128xf32, #tpu.memory_space<vmem>>, %arg4: memref<128x10xbf16, #tpu.memory_space<vmem>>, %arg5: memref<1x10xf32, #tpu.memory_space<vmem>>, %arg6: memref<10x2xbf16, #tpu.memory_space<vmem>>, %arg7: memref<1x2xf32, #tpu.memory_space<vmem>>, %arg8: memref<8x2xf32, #tpu.memory_space<vmem>>) attributes {dimension_semantics = [#tpu.dimension_semantics<parallel>], iteration_bounds = array<i64: 1>, scalar_prefetch = 0 : i64, scratch_operands = 0 : i64, tpu.core_type = #tpu.core_type<tc>, window_params = [{transform_indices = @transform_0, window_bounds = array<i64: 8, 5000>}, {pipeline_mode = #tpu.pipeline_mode<synchronous>, transform_indices = @transform_1, window_bounds = array<i64: 5000, 128>}, {pipeline_mode = #tpu.pipeline_mode<synchronous>, transform_indices = @transform_2, window_bounds = array<i64: 1, 128>}, {pipeline_mode = #tpu.pipeline_mode<synchronous>, transform_indices = @transform_3, window_bounds = array<i64: 128, 10>}, {pipeline_mode = #tpu.pipeline_mode<synchronous>, transform_indices = @transform_4, window_bounds = array<i64: 1, 10>}, {pipeline_mode = #tpu.pipeline_mode<synchronous>, transform_indices = @transform_5, window_bounds = array<i64: 10, 2>}, {pipeline_mode = #tpu.pipeline_mode<synchronous>, transform_indices = @transform_6, window_bounds = array<i64: 1, 2>}, {transform_indices = @transform_7, window_bounds = array<i64: 8, 2>}]} {
    %c0 = arith.constant 0 : index
    %c0_0 = arith.constant 0 : index
    %0 = vector.load %arg1[%c0, %c0_0] : memref<8x5000xf32, #tpu.memory_space<vmem>>, vector<8x5000xf32>
    %1 = arith.truncf %0 : vector<8x5000xf32> to vector<8x5000xbf16>
    %c0_1 = arith.constant 0 : index
    %c0_2 = arith.constant 0 : index
    %2 = vector.load %arg2[%c0_1, %c0_2] : memref<5000x128xbf16, #tpu.memory_space<vmem>>, vector<5000x128xbf16>
    %cst = arith.constant dense<0.000000e+00> : vector<8x128xf32>
    %3 = tpu.matmul %1, %2, %cst {dimension_numbers = #tpu.dot_dimension_numbers<[1], [0], [0], [1], [0, 0, 1, 1], [], []>} : vector<8x5000xbf16>, vector<5000x128xbf16>, vector<8x128xf32> -> vector<8x128xf32>
    %c0_3 = arith.constant 0 : index
    %c0_4 = arith.constant 0 : index
    %4 = vector.load %arg3[%c0_3, %c0_4] : memref<1x128xf32, #tpu.memory_space<vmem>>, vector<1x128xf32>
    %5 = vector.broadcast %4 : vector<1x128xf32> to vector<8x128xf32>
    %6 = arith.addf %3, %5 : vector<8x128xf32>
    %cst_5 = arith.constant 0.000000e+00 : f32
    %7 = vector.broadcast %cst_5 : f32 to vector<8x128xf32>
    %8 = arith.maximumf %6, %7 : vector<8x128xf32>
    %9 = arith.truncf %8 : vector<8x128xf32> to vector<8x128xbf16>
    %c0_6 = arith.constant 0 : index
    %c0_7 = arith.constant 0 : index
    %10 = vector.load %arg4[%c0_6, %c0_7] : memref<128x10xbf16, #tpu.memory_space<vmem>>, vector<128x10xbf16>
    %cst_8 = arith.constant dense<0.000000e+00> : vector<8x10xf32>
    %11 = tpu.matmul %9, %10, %cst_8 {dimension_numbers = #tpu.dot_dimension_numbers<[1], [0], [0], [1], [0, 0, 1, 1], [], []>} : vector<8x128xbf16>, vector<128x10xbf16>, vector<8x10xf32> -> vector<8x10xf32>
    %c0_9 = arith.constant 0 : index
    %c0_10 = arith.constant 0 : index
    %12 = vector.load %arg5[%c0_9, %c0_10] : memref<1x10xf32, #tpu.memory_space<vmem>>, vector<1x10xf32>
    %13 = vector.broadcast %12 : vector<1x10xf32> to vector<8x10xf32>
    %14 = arith.addf %11, %13 : vector<8x10xf32>
    %cst_11 = arith.constant 0.000000e+00 : f32
    %15 = vector.broadcast %cst_11 : f32 to vector<8x10xf32>
    %16 = arith.maximumf %14, %15 : vector<8x10xf32>
    %17 = arith.truncf %16 : vector<8x10xf32> to vector<8x10xbf16>
    %c0_12 = arith.constant 0 : index
    %c0_13 = arith.constant 0 : index
    %18 = vector.load %arg6[%c0_12, %c0_13] : memref<10x2xbf16, #tpu.memory_space<vmem>>, vector<10x2xbf16>
    %cst_14 = arith.constant dense<0.000000e+00> : vector<8x2xf32>
    %19 = tpu.matmul %17, %18, %cst_14 {dimension_numbers = #tpu.dot_dimension_numbers<[1], [0], [0], [1], [0, 0, 1, 1], [], []>} : vector<8x10xbf16>, vector<10x2xbf16>, vector<8x2xf32> -> vector<8x2xf32>
    %c0_15 = arith.constant 0 : index
    %c0_16 = arith.constant 0 : index
    %20 = vector.load %arg7[%c0_15, %c0_16] : memref<1x2xf32, #tpu.memory_space<vmem>>, vector<1x2xf32>
    %21 = vector.broadcast %20 : vector<1x2xf32> to vector<8x2xf32>
    %22 = arith.addf %19, %21 : vector<8x2xf32>
    %c0_17 = arith.constant 0 : index
    %c0_18 = arith.constant 0 : index
    %23 = vector.load %arg8[%c0_17, %c0_18] : memref<8x2xf32, #tpu.memory_space<vmem>>, vector<8x2xf32>
    tpu.vector_store %arg8[%c0_17, %c0_18], %22 {strides = array<i32>} : memref<8x2xf32, #tpu.memory_space<vmem>>, vector<8x2xf32>,
    return
  }
  func.func @transform_0(%arg0: i32) -> (i32, i32) {
    %c0_i32 = arith.constant 0 : i32
    %c0_i32_0 = arith.constant 0 : i32
    return %arg0, %c0_i32 : i32, i32
  }
  func.func @transform_1(%arg0: i32) -> (i32, i32) {
    %c0_i32 = arith.constant 0 : i32
    %c0_i32_0 = arith.constant 0 : i32
    %c0_i32_1 = arith.constant 0 : i32
    return %c0_i32, %c0_i32_0 : i32, i32
  }
  func.func @transform_2(%arg0: i32) -> (i32, i32) {
    %c0_i32 = arith.constant 0 : i32
    %c0_i32_0 = arith.constant 0 : i32
    %c0_i32_1 = arith.constant 0 : i32
    return %c0_i32, %c0_i32_0 : i32, i32
  }
  func.func @transform_3(%arg0: i32) -> (i32, i32) {
    %c0_i32 = arith.constant 0 : i32
    %c0_i32_0 = arith.constant 0 : i32
    %c0_i32_1 = arith.constant 0 : i32
    return %c0_i32, %c0_i32_0 : i32, i32
  }
  func.func @transform_4(%arg0: i32) -> (i32, i32) {
    %c0_i32 = arith.constant 0 : i32
    %c0_i32_0 = arith.constant 0 : i32
    %c0_i32_1 = arith.constant 0 : i32
    return %c0_i32, %c0_i32_0 : i32, i32
  }
  func.func @transform_5(%arg0: i32) -> (i32, i32) {
    %c0_i32 = arith.constant 0 : i32
    %c0_i32_0 = arith.constant 0 : i32
    %c0_i32_1 = arith.constant 0 : i32
    return %c0_i32, %c0_i32_0 : i32, i32
  }
  func.func @transform_6(%arg0: i32) -> (i32, i32) {
    %c0_i32 = arith.constant 0 : i32
    %c0_i32_0 = arith.constant 0 : i32
    %c0_i32_1 = arith.constant 0 : i32
    return %c0_i32, %c0_i32_0 : i32, i32
  }
  func.func @transform_7(%arg0: i32) -> (i32, i32) {
    %c0_i32 = arith.constant 0 : i32
    %c0_i32_0 = arith.constant 0 : i32
    return %arg0, %c0_i32 : i32, i32
  }
}

</mosaic_0001>

<llo_original>
// kernel: tpu_custom_call.1
$region0: #{tpu_custom_call.1}
  #allocation0 [shape = 'u32[]', space=smem, size = 0x4, offset = 0x4, fixed_abs, tag = 'smem constant byte address 0x4 - core index']
  #allocation1 [shape = 'u32[144,128]{1,0:T(1,128)}', space=vmem, size = 0x12000, scoped, tag = 'internal scratch']
  %s0 = inlined_call_operand.hbm [shape: f32[8,5000], index: 0, kind: input, shape index: {}]
  %s1 = inlined_call_operand.hbm [shape: bf16[5000,128], index: 1, kind: input, shape index: {}]
  %s2 = inlined_call_operand.hbm [shape: f32[1,128], index: 2, kind: input, shape index: {}]
  %s3 = inlined_call_operand.vmem [shape: bf16[128,10], index: 3, kind: input, shape index: {}]
  %s4 = inlined_call_operand.hbm [shape: f32[1,10], index: 4, kind: input, shape index: {}]
  %s5 = inlined_call_operand.vmem [shape: bf16[10,2], index: 5, kind: input, shape index: {}]
  %s6 = inlined_call_operand.hbm [shape: f32[1,2], index: 6, kind: input, shape index: {}]
  %s7 = inlined_call_operand.vmem [shape: f32[8,2], index: 7, kind: output, shape index: {}]
  %s8 = sld [smem:[#allocation0]]
  $region58: #{tpu_custom_call.1} parent=0
    _
  %s10 = ssub.s32 1, %s8
  %s11 = scalar_select 0, %s10, %s8
  $region1: #{tpu_custom_call.1} parent=0
    #allocation2 [shape = 'u8[163840]{0}', space=vmem, size = 0x28000, scoped, tag = 'input window, operand 0, single buffered']
    #allocation3 [shape = 's32[1]{0}', space=sflag, size = 0x4, scoped, tag = 'scoped memory for tpu_custom_call.1']
    #allocation4 [shape = 'u8[1280000]{0}', space=vmem, size = 0x138800, scoped, tag = 'input window, operand 1, single buffered']
    #allocation5 [shape = 's32[1]{0}', space=sflag, size = 0x4, scoped, tag = 'scoped memory for tpu_custom_call.1']
    #allocation6 [shape = 'u8[512]{0}', space=vmem, size = 0x400, scoped, tag = 'input window, operand 2, single buffered']
    #allocation7 [shape = 'u8[512]{0}', space=vmem, size = 0x400, scoped, tag = 'input window, operand 4, single buffered']
    #allocation8 [shape = 's32[1]{0}', space=sflag, size = 0x4, scoped, tag = 'scoped memory for tpu_custom_call.1']
    #allocation9 [shape = 'u8[512]{0}', space=vmem, size = 0x400, scoped, tag = 'input window, operand 6, single buffered']
    %12 = vsyncpa [#allocation3], 0
    %13 = vsyncpa [#allocation5], 0
    %14 = vsyncpa [#allocation8], 0
    // Predicated region
    $region2: #{tpu_custom_call.1} parent=1 // pred_check
      _
    $region3: #{tpu_custom_call.1} parent=1 // pred_check_branch
      %16 = sbr.rel (0) target = $region5
    $region4: #{tpu_custom_call.1} parent=1 // pred_region
      %s18 = ssub.s32 5120, 5120
      %19 = vsyncadd [#allocation3], %s18
      %s21 = sshll.u32 [#allocation2], 4
      %s22 = int_to_ptr.vmem [resolvable:$true] %s21
      %24 = dma.hbm_to_vmem [thread:$0]  %s0, 5120, %s22, [#allocation3]
    $region5: #{tpu_custom_call.1} parent=1 // pred_fallthru
      _
    // Predicated region
    $region6: #{tpu_custom_call.1} parent=1 // pred_check
      _
    $region7: #{tpu_custom_call.1} parent=1 // pred_check_branch
      %26 = sbr.rel (0) target = $region9
    $region8: #{tpu_custom_call.1} parent=1 // pred_region
      %s28 = ssub.s32 40000, 40000
      %29 = vsyncadd [#allocation5], %s28
      %s30 = sshll.u32 [#allocation4], 4
      %s31 = int_to_ptr.vmem [resolvable:$true] %s30
      %36 = dma.hbm_to_vmem [thread:$0]  %s1, 40000, %s31, [#allocation5], 64, 64, 4
    $region9: #{tpu_custom_call.1} parent=1 // pred_fallthru
      _
    // Predicated region
    $region10: #{tpu_custom_call.1} parent=1 // pred_check
      _
    $region11: #{tpu_custom_call.1} parent=1 // pred_check_branch
      %38 = sbr.rel (0) target = $region13
    $region12: #{tpu_custom_call.1} parent=1 // pred_region
      %s40 = ssub.s32 16, 16
      %41 = vsyncadd [#allocation5], %s40
      %s43 = sshll.u32 [#allocation6], 4
      %s44 = int_to_ptr.vmem [resolvable:$true] %s43
      %46 = dma.hbm_to_vmem [thread:$0]  %s2, 16, %s44, [#allocation5]
    $region13: #{tpu_custom_call.1} parent=1 // pred_fallthru
      _
    // Predicated region
    $region14: #{tpu_custom_call.1} parent=1 // pred_check
      _
    $region15: #{tpu_custom_call.1} parent=1 // pred_check_branch
      %48 = sbr.rel (0) target = $region17
    $region16: #{tpu_custom_call.1} parent=1 // pred_region
      _
    $region17: #{tpu_custom_call.1} parent=1 // pred_fallthru
      _
    // Predicated region
    $region18: #{tpu_custom_call.1} parent=1 // pred_check
      _
    $region19: #{tpu_custom_call.1} parent=1 // pred_check_branch
      %50 = sbr.rel (0) target = $region21
    $region20: #{tpu_custom_call.1} parent=1 // pred_region
      %s52 = ssub.s32 16, 16
      %53 = vsyncadd [#allocation8], %s52
      %s55 = sshll.u32 [#allocation7], 4
      %s56 = int_to_ptr.vmem [resolvable:$true] %s55
      %58 = dma.hbm_to_vmem [thread:$0]  %s4, 16, %s56, [#allocation8]
    $region21: #{tpu_custom_call.1} parent=1 // pred_fallthru
      _
    // Predicated region
    $region22: #{tpu_custom_call.1} parent=1 // pred_check
      _
    $region23: #{tpu_custom_call.1} parent=1 // pred_check_branch
      %60 = sbr.rel (0) target = $region25
    $region24: #{tpu_custom_call.1} parent=1 // pred_region
      _
    $region25: #{tpu_custom_call.1} parent=1 // pred_fallthru
      _
    // Predicated region
    $region26: #{tpu_custom_call.1} parent=1 // pred_check
      _
    $region27: #{tpu_custom_call.1} parent=1 // pred_check_branch
      %62 = sbr.rel (0) target = $region29
    $region28: #{tpu_custom_call.1} parent=1 // pred_region
      %s64 = ssub.s32 16, 16
      %65 = vsyncadd [#allocation8], %s64
      %s67 = sshll.u32 [#allocation9], 4
      %s68 = int_to_ptr.vmem [resolvable:$true] %s67
      %70 = dma.hbm_to_vmem [thread:$0]  %s6, 16, %s68, [#allocation8]
    $region29: #{tpu_custom_call.1} parent=1 // pred_fallthru
      _
    // Predicated region
    $region30: #{tpu_custom_call.1} parent=1 // pred_check
      _
    $region31: #{tpu_custom_call.1} parent=1 // pred_check_branch
      %72 = sbr.rel (0) target = $region33
    $region32: #{tpu_custom_call.1} parent=1 // pred_region
      %73 = dma.done [#allocation3], 5120
    $region33: #{tpu_custom_call.1} parent=1 // pred_fallthru
      _
    // Predicated region
    $region34: #{tpu_custom_call.1} parent=1 // pred_check
      _
    $region35: #{tpu_custom_call.1} parent=1 // pred_check_branch
      %75 = sbr.rel (0) target = $region37
    $region36: #{tpu_custom_call.1} parent=1 // pred_region
      %76 = dma.done [#allocation5], 40000
    $region37: #{tpu_custom_call.1} parent=1 // pred_fallthru
      _
    // Predicated region
    $region38: #{tpu_custom_call.1} parent=1 // pred_check
      _
    $region39: #{tpu_custom_call.1} parent=1 // pred_check_branch
      %78 = sbr.rel (0) target = $region41
    $region40: #{tpu_custom_call.1} parent=1 // pred_region
      %79 = dma.done [#allocation5], 16
    $region41: #{tpu_custom_call.1} parent=1 // pred_fallthru
      _
    // Predicated region
    $region42: #{tpu_custom_call.1} parent=1 // pred_check
      _
    $region43: #{tpu_custom_call.1} parent=1 // pred_check_branch
      %81 = sbr.rel (0) target = $region45
    $region44: #{tpu_custom_call.1} parent=1 // pred_region
      %82 = dma.done [#allocation8], 16
    $region45: #{tpu_custom_call.1} parent=1 // pred_fallthru
      _
    // Predicated region
    $region46: #{tpu_custom_call.1} parent=1 // pred_check
      _
    $region47: #{tpu_custom_call.1} parent=1 // pred_check_branch
      %84 = sbr.rel (0) target = $region49
    $region48: #{tpu_custom_call.1} parent=1 // pred_region
      %85 = dma.done [#allocation8], 16
    $region49: #{tpu_custom_call.1} parent=1 // pred_fallthru
      _
    %v87 = vld [vmem:[#allocation2] sm:$0xff]
    %v88 = vld [vmem:[#allocation2 + $0x8] sm:$0xff]
    %v89 = vld [vmem:[#allocation2 + $0x10] sm:$0xff]
    %v90 = vld [vmem:[#allocation2 + $0x18] sm:$0xff]
    %v91 = vld [vmem:[#allocation2 + $0x20] sm:$0xff]
    %v92 = vld [vmem:[#allocation2 + $0x28] sm:$0xff]
    %v93 = vld [vmem:[#allocation2 + $0x30] sm:$0xff]
    %v94 = vld [vmem:[#allocation2 + $0x38] sm:$0xff]
    %v95 = vld [vmem:[#allocation2 + $0x40] sm:$0xff]
    %v96 = vld [vmem:[#allocation2 + $0x48] sm:$0xff]
    %v97 = vld [vmem:[#allocation2 + $0x50] sm:$0xff]
    %v98 = vld [vmem:[#allocation2 + $0x58] sm:$0xff]
    %v99 = vld [vmem:[#allocation2 + $0x60] sm:$0xff]
    %v100 = vld [vmem:[#allocation2 + $0x68] sm:$0xff]
    %v101 = vld [vmem:[#allocation2 + $0x70] sm:$0xff]
    %v102 = vld [vmem:[#allocation2 + $0x78] sm:$0xff]
    %v103 = vld [vmem:[#allocation2 + $0x80] sm:$0xff]
    %v104 = vld [vmem:[#allocation2 + $0x88] sm:$0xff]
    %v105 = vld [vmem:[#allocation2 + $0x90] sm:$0xff]
    %v106 = vld [vmem:[#allocation2 + $0x98] sm:$0xff]
    %v107 = vld [vmem:[#allocation2 + $0xa0] sm:$0xff]
    %v108 = vld [vmem:[#allocation2 + $0xa8] sm:$0xff]
    %v109 = vld [vmem:[#allocation2 + $0xb0] sm:$0xff]
    %v110 = vld [vmem:[#allocation2 + $0xb8] sm:$0xff]
    %v111 = vld [vmem:[#allocation2 + $0xc0] sm:$0xff]
    %v112 = vld [vmem:[#allocation2 + $0xc8] sm:$0xff]
    %v113 = vld [vmem:[#allocation2 + $0xd0] sm:$0xff]
    %v114 = vld [vmem:[#allocation2 + $0xd8] sm:$0xff]
    %v115 = vld [vmem:[#allocation2 + $0xe0] sm:$0xff]
    %v116 = vld [vmem:[#allocation2 + $0xe8] sm:$0xff]
    %v117 = vld [vmem:[#allocation2 + $0xf0] sm:$0xff]
    %v118 = vld [vmem:[#allocation2 + $0xf8] sm:$0xff]
    %v119 = vld [vmem:[#allocation2 + $0x100] sm:$0xff]
    %v120 = vld [vmem:[#allocation2 + $0x108] sm:$0xff]
    %v121 = vld [vmem:[#allocation2 + $0x110] sm:$0xff]
    %v122 = vld [vmem:[#allocation2 + $0x118] sm:$0xff]
    %v123 = vld [vmem:[#allocation2 + $0x120] sm:$0xff]
    %v124 = vld [vmem:[#allocation2 + $0x128] sm:$0xff]
    %v125 = vld [vmem:[#allocation2 + $0x130] sm:$0xff]
    %v126 = vld [vmem:[#allocation2 + $0x138] sm:$0xff]
    %v127 = vpack.c.bf16 %v87, %v87
    %v128 = vpack.c.bf16 %v88, %v88
    %v129 = vpack.c.bf16 %v89, %v89
    %v130 = vpack.c.bf16 %v90, %v90
    %v131 = vpack.c.bf16 %v91, %v91
    %v132 = vpack.c.bf16 %v92, %v92
    %v133 = vpack.c.bf16 %v93, %v93
    %v134 = vpack.c.bf16 %v94, %v94
    %v135 = vpack.c.bf16 %v95, %v95
    %v136 = vpack.c.bf16 %v96, %v96
    %v137 = vpack.c.bf16 %v97, %v97
    %v138 = vpack.c.bf16 %v98, %v98
    %v139 = vpack.c.bf16 %v99, %v99
    %v140 = vpack.c.bf16 %v100, %v100
    %v141 = vpack.c.bf16 %v101, %v101
    %v142 = vpack.c.bf16 %v102, %v102
    %v143 = vpack.c.bf16 %v103, %v103
    %v144 = vpack.c.bf16 %v104, %v104
    %v145 = vpack.c.bf16 %v105, %v105
    %v146 = vpack.c.bf16 %v106, %v106
    %v147 = vpack.c.bf16 %v107, %v107
    %v148 = vpack.c.bf16 %v108, %v108
    %v149 = vpack.c.bf16 %v109, %v109
    %v150 = vpack.c.bf16 %v110, %v110
    %v151 = vpack.c.bf16 %v111, %v111
    %v152 = vpack.c.bf16 %v112, %v112
    %v153 = vpack.c.bf16 %v113, %v113
    %v154 = vpack.c.bf16 %v114, %v114
    %v155 = vpack.c.bf16 %v115, %v115
    %v156 = vpack.c.bf16 %v116, %v116
    %v157 = vpack.c.bf16 %v117, %v117
    %v158 = vpack.c.bf16 %v118, %v118
    %v159 = vpack.c.bf16 %v119, %v119
    %v160 = vpack.c.bf16 %v120, %v120
    %v161 = vpack.c.bf16 %v121, %v121
    %v162 = vpack.c.bf16 %v122, %v122
    %v163 = vpack.c.bf16 %v123, %v123
    %v164 = vpack.c.bf16 %v124, %v124
    %v165 = vpack.c.bf16 %v125, %v125
    %v166 = vpack.c.bf16 %v126, %v126
    %v167 = vld [vmem:[#allocation4] sm:$0xf]
    %v168 = vld [vmem:[#allocation4 + $0x4] sm:$0xf]
    %v169 = vld [vmem:[#allocation4 + $0x8] sm:$0xf]
    %v170 = vld [vmem:[#allocation4 + $0xc] sm:$0xf]
    %v171 = vld [vmem:[#allocation4 + $0x10] sm:$0xf]
    %v172 = vld [vmem:[#allocation4 + $0x14] sm:$0xf]
    %v173 = vld [vmem:[#allocation4 + $0x18] sm:$0xf]
    %v174 = vld [vmem:[#allocation4 + $0x1c] sm:$0xf]
    %v175 = vld [vmem:[#allocation4 + $0x20] sm:$0xf]
    %v176 = vld [vmem:[#allocation4 + $0x24] sm:$0xf]
    %v177 = vld [vmem:[#allocation4 + $0x28] sm:$0xf]
    %v178 = vld [vmem:[#allocation4 + $0x2c] sm:$0xf]
    %v179 = vld [vmem:[#allocation4 + $0x30] sm:$0xf]
    %v180 = vld [vmem:[#allocation4 + $0x34] sm:$0xf]
    %v181 = vld [vmem:[#allocation4 + $0x38] sm:$0xf]
    %v182 = vld [vmem:[#allocation4 + $0x3c] sm:$0xf]
    %v183 = vld [vmem:[#allocation4 + $0x40] sm:$0xf]
    %v184 = vld [vmem:[#allocation4 + $0x44] sm:$0xf]
    %v185 = vld [vmem:[#allocation4 + $0x48] sm:$0xf]
    %v186 = vld [vmem:[#allocation4 + $0x4c] sm:$0xf]
    %v187 = vld [vmem:[#allocation4 + $0x50] sm:$0xf]
    %v188 = vld [vmem:[#allocation4 + $0x54] sm:$0xf]
    %v189 = vld [vmem:[#allocation4 + $0x58] sm:$0xf]
    %v190 = vld [vmem:[#allocation4 + $0x5c] sm:$0xf]
    %v191 = vld [vmem:[#allocation4 + $0x60] sm:$0xf]
    %v192 = vld [vmem:[#allocation4 + $0x64] sm:$0xf]
    %v193 = vld [vmem:[#allocation4 + $0x68] sm:$0xf]
    %v194 = vld [vmem:[#allocation4 + $0x6c] sm:$0xf]
    %v195 = vld [vmem:[#allocation4 + $0x70] sm:$0xf]
    %v196 = vld [vmem:[#allocation4 + $0x74] sm:$0xf]
    %v197 = vld [vmem:[#allocation4 + $0x78] sm:$0xf]
    %v198 = vld [vmem:[#allocation4 + $0x7c] sm:$0xf]
    %v199 = vld [vmem:[#allocation4 + $0x80] sm:$0xf]
    %v200 = vld [vmem:[#allocation4 + $0x84] sm:$0xf]
    %v201 = vld [vmem:[#allocation4 + $0x88] sm:$0xf]
    %v202 = vld [vmem:[#allocation4 + $0x8c] sm:$0xf]
    %v203 = vld [vmem:[#allocation4 + $0x90] sm:$0xf]
    %v204 = vld [vmem:[#allocation4 + $0x94] sm:$0xf]
    %v205 = vld [vmem:[#allocation4 + $0x98] sm:$0xf]
    %v206 = vld [vmem:[#allocation4 + $0x9c] sm:$0xf]
    %v207 = vld [vmem:[#allocation4 + $0xa0] sm:$0xf]
    %v208 = vld [vmem:[#allocation4 + $0xa4] sm:$0xf]
    %v209 = vld [vmem:[#allocation4 + $0xa8] sm:$0xf]
    %v210 = vld [vmem:[#allocation4 + $0xac] sm:$0xf]
    %v211 = vld [vmem:[#allocation4 + $0xb0] sm:$0xf]
    %v212 = vld [vmem:[#allocation4 + $0xb4] sm:$0xf]
    %v213 = vld [vmem:[#allocation4 + $0xb8] sm:$0xf]
    %v214 = vld [vmem:[#allocation4 + $0xbc] sm:$0xf]
    %v215 = vld [vmem:[#allocation4 + $0xc0] sm:$0xf]
    %v216 = vld [vmem:[#allocation4 + $0xc4] sm:$0xf]
    %v217 = vld [vmem:[#allocation4 + $0xc8] sm:$0xf]
    %v218 = vld [vmem:[#allocation4 + $0xcc] sm:$0xf]
    %v219 = vld [vmem:[#allocation4 + $0xd0] sm:$0xf]
    %v220 = vld [vmem:[#allocation4 + $0xd4] sm:$0xf]
    %v221 = vld [vmem:[#allocation4 + $0xd8] sm:$0xf]
    %v222 = vld [vmem:[#allocation4 + $0xdc] sm:$0xf]
    %v223 = vld [vmem:[#allocation4 + $0xe0] sm:$0xf]
    %v224 = vld [vmem:[#allocation4 + $0xe4] sm:$0xf]
    %v225 = vld [vmem:[#allocation4 + $0xe8] sm:$0xf]
    %v226 = vld [vmem:[#allocation4 + $0xec] sm:$0xf]
    %v227 = vld [vmem:[#allocation4 + $0xf0] sm:$0xf]
    %v228 = vld [vmem:[#allocation4 + $0xf4] sm:$0xf]
    %v229 = vld [vmem:[#allocation4 + $0xf8] sm:$0xf]
    %v230 = vld [vmem:[#allocation4 + $0xfc] sm:$0xf]
    %v231 = vld [vmem:[#allocation4 + $0x100] sm:$0xf]
    %v232 = vld [vmem:[#allocation4 + $0x104] sm:$0xf]
    %v233 = vld [vmem:[#allocation4 + $0x108] sm:$0xf]
    %v234 = vld [vmem:[#allocation4 + $0x10c] sm:$0xf]
    %v235 = vld [vmem:[#allocation4 + $0x110] sm:$0xf]
    %v236 = vld [vmem:[#allocation4 + $0x114] sm:$0xf]
    %v237 = vld [vmem:[#allocation4 + $0x118] sm:$0xf]
    %v238 = vld [vmem:[#allocation4 + $0x11c] sm:$0xf]
    %v239 = vld [vmem:[#allocation4 + $0x120] sm:$0xf]
    %v240 = vld [vmem:[#allocation4 + $0x124] sm:$0xf]
    %v241 = vld [vmem:[#allocation4 + $0x128] sm:$0xf]
    %v242 = vld [vmem:[#allocation4 + $0x12c] sm:$0xf]
    %v243 = vld [vmem:[#allocation4 + $0x130] sm:$0xf]
    %v244 = vld [vmem:[#allocation4 + $0x134] sm:$0xf]
    %v245 = vld [vmem:[#allocation4 + $0x138] sm:$0xf]
    %v246 = vld [vmem:[#allocation4 + $0x13c] sm:$0xf]
    %v247 = vld [vmem:[#allocation4 + $0x140] sm:$0xf]
    %v248 = vld [vmem:[#allocation4 + $0x144] sm:$0xf]
    %v249 = vld [vmem:[#allocation4 + $0x148] sm:$0xf]
    %v250 = vld [vmem:[#allocation4 + $0x14c] sm:$0xf]
    %v251 = vld [vmem:[#allocation4 + $0x150] sm:$0xf]
    %v252 = vld [vmem:[#allocation4 + $0x154] sm:$0xf]
    %v253 = vld [vmem:[#allocation4 + $0x158] sm:$0xf]
    %v254 = vld [vmem:[#allocation4 + $0x15c] sm:$0xf]
    %v255 = vld [vmem:[#allocation4 + $0x160] sm:$0xf]
    %v256 = vld [vmem:[#allocation4 + $0x164] sm:$0xf]
    %v257 = vld [vmem:[#allocation4 + $0x168] sm:$0xf]
    %v258 = vld [vmem:[#allocation4 + $0x16c] sm:$0xf]
    %v259 = vld [vmem:[#allocation4 + $0x170] sm:$0xf]
    %v260 = vld [vmem:[#allocation4 + $0x174] sm:$0xf]
    %v261 = vld [vmem:[#allocation4 + $0x178] sm:$0xf]
    %v262 = vld [vmem:[#allocation4 + $0x17c] sm:$0xf]
    %v263 = vld [vmem:[#allocation4 + $0x180] sm:$0xf]
    %v264 = vld [vmem:[#allocation4 + $0x184] sm:$0xf]
    %v265 = vld [vmem:[#allocation4 + $0x188] sm:$0xf]
    %v266 = vld [vmem:[#allocation4 + $0x18c] sm:$0xf]
    %v267 = vld [vmem:[#allocation4 + $0x190] sm:$0xf]
    %v268 = vld [vmem:[#allocation4 + $0x194] sm:$0xf]
    %v269 = vld [vmem:[#allocation4 + $0x198] sm:$0xf]
    %v270 = vld [vmem:[#allocation4 + $0x19c] sm:$0xf]
    %v271 = vld [vmem:[#allocation4 + $0x1a0] sm:$0xf]
    %v272 = vld [vmem:[#allocation4 + $0x1a4] sm:$0xf]
    %v273 = vld [vmem:[#allocation4 + $0x1a8] sm:$0xf]
    %v274 = vld [vmem:[#allocation4 + $0x1ac] sm:$0xf]
    %v275 = vld [vmem:[#allocation4 + $0x1b0] sm:$0xf]
    %v276 = vld [vmem:[#allocation4 + $0x1b4] sm:$0xf]
    %v277 = vld [vmem:[#allocation4 + $0x1b8] sm:$0xf]
    %v278 = vld [vmem:[#allocation4 + $0x1bc] sm:$0xf]
    %v279 = vld [vmem:[#allocation4 + $0x1c0] sm:$0xf]
    %v280 = vld [vmem:[#allocation4 + $0x1c4] sm:$0xf]
    %v281 = vld [vmem:[#allocation4 + $0x1c8] sm:$0xf]
    %v282 = vld [vmem:[#allocation4 + $0x1cc] sm:$0xf]
    %v283 = vld [vmem:[#allocation4 + $0x1d0] sm:$0xf]
    %v284 = vld [vmem:[#allocation4 + $0x1d4] sm:$0xf]
    %v285 = vld [vmem:[#allocation4 + $0x1d8] sm:$0xf]
    %v286 = vld [vmem:[#allocation4 + $0x1dc] sm:$0xf]
    %v287 = vld [vmem:[#allocation4 + $0x1e0] sm:$0xf]
    %v288 = vld [vmem:[#allocation4 + $0x1e4] sm:$0xf]
    %v289 = vld [vmem:[#allocation4 + $0x1e8] sm:$0xf]
    %v290 = vld [vmem:[#allocation4 + $0x1ec] sm:$0xf]
    %v291 = vld [vmem:[#allocation4 + $0x1f0] sm:$0xf]
    %v292 = vld [vmem:[#allocation4 + $0x1f4] sm:$0xf]
    %v293 = vld [vmem:[#allocation4 + $0x1f8] sm:$0xf]
    %v294 = vld [vmem:[#allocation4 + $0x1fc] sm:$0xf]
    %v295 = vld [vmem:[#allocation4 + $0x200] sm:$0xf]
    %v296 = vld [vmem:[#allocation4 + $0x204] sm:$0xf]
    %v297 = vld [vmem:[#allocation4 + $0x208] sm:$0xf]
    %v298 = vld [vmem:[#allocation4 + $0x20c] sm:$0xf]
    %v299 = vld [vmem:[#allocation4 + $0x210] sm:$0xf]
    %v300 = vld [vmem:[#allocation4 + $0x214] sm:$0xf]
    %v301 = vld [vmem:[#allocation4 + $0x218] sm:$0xf]
    %v302 = vld [vmem:[#allocation4 + $0x21c] sm:$0xf]
    %v303 = vld [vmem:[#allocation4 + $0x220] sm:$0xf]
    %v304 = vld [vmem:[#allocation4 + $0x224] sm:$0xf]
    %v305 = vld [vmem:[#allocation4 + $0x228] sm:$0xf]
    %v306 = vld [vmem:[#allocation4 + $0x22c] sm:$0xf]
    %v307 = vld [vmem:[#allocation4 + $0x230] sm:$0xf]
    %v308 = vld [vmem:[#allocation4 + $0x234] sm:$0xf]
    %v309 = vld [vmem:[#allocation4 + $0x238] sm:$0xf]
    %v310 = vld [vmem:[#allocation4 + $0x23c] sm:$0xf]
    %v311 = vld [vmem:[#allocation4 + $0x240] sm:$0xf]
    %v312 = vld [vmem:[#allocation4 + $0x244] sm:$0xf]
    %v313 = vld [vmem:[#allocation4 + $0x248] sm:$0xf]
    %v314 = vld [vmem:[#allocation4 + $0x24c] sm:$0xf]
    %v315 = vld [vmem:[#allocation4 + $0x250] sm:$0xf]
    %v316 = vld [vmem:[#allocation4 + $0x254] sm:$0xf]
    %v317 = vld [vmem:[#allocation4 + $0x258] sm:$0xf]
    %v318 = vld [vmem:[#allocation4 + $0x25c] sm:$0xf]
    %v319 = vld [vmem:[#allocation4 + $0x260] sm:$0xf]
    %v320 = vld [vmem:[#allocation4 + $0x264] sm:$0xf]
    %v321 = vld [vmem:[#allocation4 + $0x268] sm:$0xf]
    %v322 = vld [vmem:[#allocation4 + $0x26c] sm:$0xf]
    %v323 = vld [vmem:[#allocation4 + $0x270] sm:$0xf]
    %v324 = vld [vmem:[#allocation4 + $0x274] sm:$0xf]
    %v325 = vld [vmem:[#allocation4 + $0x278] sm:$0xf]
    %v326 = vld [vmem:[#allocation4 + $0x27c] sm:$0xf]
    %v327 = vld [vmem:[#allocation4 + $0x280] sm:$0xf]
    %v328 = vld [vmem:[#allocation4 + $0x284] sm:$0xf]
    %v329 = vld [vmem:[#allocation4 + $0x288] sm:$0xf]
    %v330 = vld [vmem:[#allocation4 + $0x28c] sm:$0xf]
    %v331 = vld [vmem:[#allocation4 + $0x290] sm:$0xf]
    %v332 = vld [vmem:[#allocation4 + $0x294] sm:$0xf]
    %v333 = vld [vmem:[#allocation4 + $0x298] sm:$0xf]
    %v334 = vld [vmem:[#allocation4 + $0x29c] sm:$0xf]
    %v335 = vld [vmem:[#allocation4 + $0x2a0] sm:$0xf]
    %v336 = vld [vmem:[#allocation4 + $0x2a4] sm:$0xf]
    %v337 = vld [vmem:[#allocation4 + $0x2a8] sm:$0xf]
    %v338 = vld [vmem:[#allocation4 + $0x2ac] sm:$0xf]
    %v339 = vld [vmem:[#allocation4 + $0x2b0] sm:$0xf]
    %v340 = vld [vmem:[#allocation4 + $0x2b4] sm:$0xf]
    %v341 = vld [vmem:[#allocation4 + $0x2b8] sm:$0xf]
    %v342 = vld [vmem:[#allocation4 + $0x2bc] sm:$0xf]
    %v343 = vld [vmem:[#allocation4 + $0x2c0] sm:$0xf]
    %v344 = vld [vmem:[#allocation4 + $0x2c4] sm:$0xf]
    %v345 = vld [vmem:[#allocation4 + $0x2c8] sm:$0xf]
    %v346 = vld [vmem:[#allocation4 + $0x2cc] sm:$0xf]
    %v347 = vld [vmem:[#allocation4 + $0x2d0] sm:$0xf]
    %v348 = vld [vmem:[#allocation4 + $0x2d4] sm:$0xf]
    %v349 = vld [vmem:[#allocation4 + $0x2d8] sm:$0xf]
    %v350 = vld [vmem:[#allocation4 + $0x2dc] sm:$0xf]
    %v351 = vld [vmem:[#allocation4 + $0x2e0] sm:$0xf]
    %v352 = vld [vmem:[#allocation4 + $0x2e4] sm:$0xf]
    %v353 = vld [vmem:[#allocation4 + $0x2e8] sm:$0xf]
    %v354 = vld [vmem:[#allocation4 + $0x2ec] sm:$0xf]
    %v355 = vld [vmem:[#allocation4 + $0x2f0] sm:$0xf]
    %v356 = vld [vmem:[#allocation4 + $0x2f4] sm:$0xf]
    %v357 = vld [vmem:[#allocation4 + $0x2f8] sm:$0xf]
    %v358 = vld [vmem:[#allocation4 + $0x2fc] sm:$0xf]
    %v359 = vld [vmem:[#allocation4 + $0x300] sm:$0xf]
    %v360 = vld [vmem:[#allocation4 + $0x304] sm:$0xf]
    %v361 = vld [vmem:[#allocation4 + $0x308] sm:$0xf]
    %v362 = vld [vmem:[#allocation4 + $0x30c] sm:$0xf]
    %v363 = vld [vmem:[#allocation4 + $0x310] sm:$0xf]
    %v364 = vld [vmem:[#allocation4 + $0x314] sm:$0xf]
    %v365 = vld [vmem:[#allocation4 + $0x318] sm:$0xf]
    %v366 = vld [vmem:[#allocation4 + $0x31c] sm:$0xf]
    %v367 = vld [vmem:[#allocation4 + $0x320] sm:$0xf]
    %v368 = vld [vmem:[#allocation4 + $0x324] sm:$0xf]
    %v369 = vld [vmem:[#allocation4 + $0x328] sm:$0xf]
    %v370 = vld [vmem:[#allocation4 + $0x32c] sm:$0xf]
    %v371 = vld [vmem:[#allocation4 + $0x330] sm:$0xf]
    %v372 = vld [vmem:[#allocation4 + $0x334] sm:$0xf]
    %v373 = vld [vmem:[#allocation4 + $0x338] sm:$0xf]
    %v374 = vld [vmem:[#allocation4 + $0x33c] sm:$0xf]
    %v375 = vld [vmem:[#allocation4 + $0x340] sm:$0xf]
    %v376 = vld [vmem:[#allocation4 + $0x344] sm:$0xf]
    %v377 = vld [vmem:[#allocation4 + $0x348] sm:$0xf]
    %v378 = vld [vmem:[#allocation4 + $0x34c] sm:$0xf]
    %v379 = vld [vmem:[#allocation4 + $0x350] sm:$0xf]
    %v380 = vld [vmem:[#allocation4 + $0x354] sm:$0xf]
    %v381 = vld [vmem:[#allocation4 + $0x358] sm:$0xf]
    %v382 = vld [vmem:[#allocation4 + $0x35c] sm:$0xf]
    %v383 = vld [vmem:[#allocation4 + $0x360] sm:$0xf]
    %v384 = vld [vmem:[#allocation4 + $0x364] sm:$0xf]
    %v385 = vld [vmem:[#allocation4 + $0x368] sm:$0xf]
    %v386 = vld [vmem:[#allocation4 + $0x36c] sm:$0xf]
    %v387 = vld [vmem:[#allocation4 + $0x370] sm:$0xf]
    %v388 = vld [vmem:[#allocation4 + $0x374] sm:$0xf]
    %v389 = vld [vmem:[#allocation4 + $0x378] sm:$0xf]
    %v390 = vld [vmem:[#allocation4 + $0x37c] sm:$0xf]
    %v391 = vld [vmem:[#allocation4 + $0x380] sm:$0xf]
    %v392 = vld [vmem:[#allocation4 + $0x384] sm:$0xf]
    %v393 = vld [vmem:[#allocation4 + $0x388] sm:$0xf]
    %v394 = vld [vmem:[#allocation4 + $0x38c] sm:$0xf]
    %v395 = vld [vmem:[#allocation4 + $0x390] sm:$0xf]
    %v396 = vld [vmem:[#allocation4 + $0x394] sm:$0xf]
    %v397 = vld [vmem:[#allocation4 + $0x398] sm:$0xf]
    %v398 = vld [vmem:[#allocation4 + $0x39c] sm:$0xf]
    %v399 = vld [vmem:[#allocation4 + $0x3a0] sm:$0xf]
    %v400 = vld [vmem:[#allocation4 + $0x3a4] sm:$0xf]
    %v401 = vld [vmem:[#allocation4 + $0x3a8] sm:$0xf]
    %v402 = vld [vmem:[#allocation4 + $0x3ac] sm:$0xf]
    %v403 = vld [vmem:[#allocation4 + $0x3b0] sm:$0xf]
    %v404 = vld [vmem:[#allocation4 + $0x3b4] sm:$0xf]
    %v405 = vld [vmem:[#allocation4 + $0x3b8] sm:$0xf]
    %v406 = vld [vmem:[#allocation4 + $0x3bc] sm:$0xf]
    %v407 = vld [vmem:[#allocation4 + $0x3c0] sm:$0xf]
    %v408 = vld [vmem:[#allocation4 + $0x3c4] sm:$0xf]
    %v409 = vld [vmem:[#allocation4 + $0x3c8] sm:$0xf]
    %v410 = vld [vmem:[#allocation4 + $0x3cc] sm:$0xf]
    %v411 = vld [vmem:[#allocation4 + $0x3d0] sm:$0xf]
    %v412 = vld [vmem:[#allocation4 + $0x3d4] sm:$0xf]
    %v413 = vld [vmem:[#allocation4 + $0x3d8] sm:$0xf]
    %v414 = vld [vmem:[#allocation4 + $0x3dc] sm:$0xf]
    %v415 = vld [vmem:[#allocation4 + $0x3e0] sm:$0xf]
    %v416 = vld [vmem:[#allocation4 + $0x3e4] sm:$0xf]
    %v417 = vld [vmem:[#allocation4 + $0x3e8] sm:$0xf]
    %v418 = vld [vmem:[#allocation4 + $0x3ec] sm:$0xf]
    %v419 = vld [vmem:[#allocation4 + $0x3f0] sm:$0xf]
    %v420 = vld [vmem:[#allocation4 + $0x3f4] sm:$0xf]
    %v421 = vld [vmem:[#allocation4 + $0x3f8] sm:$0xf]
    %v422 = vld [vmem:[#allocation4 + $0x3fc] sm:$0xf]
    %v423 = vld [vmem:[#allocation4 + $0x400] sm:$0xf]
    %v424 = vld [vmem:[#allocation4 + $0x404] sm:$0xf]
    %v425 = vld [vmem:[#allocation4 + $0x408] sm:$0xf]
    %v426 = vld [vmem:[#allocation4 + $0x40c] sm:$0xf]
    %v427 = vld [vmem:[#allocation4 + $0x410] sm:$0xf]
    %v428 = vld [vmem:[#allocation4 + $0x414] sm:$0xf]
    %v429 = vld [vmem:[#allocation4 + $0x418] sm:$0xf]
    %v430 = vld [vmem:[#allocation4 + $0x41c] sm:$0xf]
    %v431 = vld [vmem:[#allocation4 + $0x420] sm:$0xf]
    %v432 = vld [vmem:[#allocation4 + $0x424] sm:$0xf]
    %v433 = vld [vmem:[#allocation4 + $0x428] sm:$0xf]
    %v434 = vld [vmem:[#allocation4 + $0x42c] sm:$0xf]
    %v435 = vld [vmem:[#allocation4 + $0x430] sm:$0xf]
    %v436 = vld [vmem:[#allocation4 + $0x434] sm:$0xf]
    %v437 = vld [vmem:[#allocation4 + $0x438] sm:$0xf]
    %v438 = vld [vmem:[#allocation4 + $0x43c] sm:$0xf]
    %v439 = vld [vmem:[#allocation4 + $0x440] sm:$0xf]
    %v440 = vld [vmem:[#allocation4 + $0x444] sm:$0xf]
    %v441 = vld [vmem:[#allocation4 + $0x448] sm:$0xf]
    %v442 = vld [vmem:[#allocation4 + $0x44c] sm:$0xf]
    %v443 = vld [vmem:[#allocation4 + $0x450] sm:$0xf]
    %v444 = vld [vmem:[#allocation4 + $0x454] sm:$0xf]
    %v445 = vld [vmem:[#allocation4 + $0x458] sm:$0xf]
    %v446 = vld [vmem:[#allocation4 + $0x45c] sm:$0xf]
    %v447 = vld [vmem:[#allocation4 + $0x460] sm:$0xf]
    %v448 = vld [vmem:[#allocation4 + $0x464] sm:$0xf]
    %v449 = vld [vmem:[#allocation4 + $0x468] sm:$0xf]
    %v450 = vld [vmem:[#allocation4 + $0x46c] sm:$0xf]
    %v451 = vld [vmem:[#allocation4 + $0x470] sm:$0xf]
    %v452 = vld [vmem:[#allocation4 + $0x474] sm:$0xf]
    %v453 = vld [vmem:[#allocation4 + $0x478] sm:$0xf]
    %v454 = vld [vmem:[#allocation4 + $0x47c] sm:$0xf]
    %v455 = vld [vmem:[#allocation4 + $0x480] sm:$0xf]
    %v456 = vld [vmem:[#allocation4 + $0x484] sm:$0xf]
    %v457 = vld [vmem:[#allocation4 + $0x488] sm:$0xf]
    %v458 = vld [vmem:[#allocation4 + $0x48c] sm:$0xf]
    %v459 = vld [vmem:[#allocation4 + $0x490] sm:$0xf]
    %v460 = vld [vmem:[#allocation4 + $0x494] sm:$0xf]
    %v461 = vld [vmem:[#allocation4 + $0x498] sm:$0xf]
    %v462 = vld [vmem:[#allocation4 + $0x49c] sm:$0xf]
    %v463 = vld [vmem:[#allocation4 + $0x4a0] sm:$0xf]
    %v464 = vld [vmem:[#allocation4 + $0x4a4] sm:$0xf]
    %v465 = vld [vmem:[#allocation4 + $0x4a8] sm:$0xf]
    %v466 = vld [vmem:[#allocation4 + $0x4ac] sm:$0xf]
    %v467 = vld [vmem:[#allocation4 + $0x4b0] sm:$0xf]
    %v468 = vld [vmem:[#allocation4 + $0x4b4] sm:$0xf]
    %v469 = vld [vmem:[#allocation4 + $0x4b8] sm:$0xf]
    %v470 = vld [vmem:[#allocation4 + $0x4bc] sm:$0xf]
    %v471 = vld [vmem:[#allocation4 + $0x4c0] sm:$0xf]
    %v472 = vld [vmem:[#allocation4 + $0x4c4] sm:$0xf]
    %v473 = vld [vmem:[#allocation4 + $0x4c8] sm:$0xf]
    %v474 = vld [vmem:[#allocation4 + $0x4cc] sm:$0xf]
    %v475 = vld [vmem:[#allocation4 + $0x4d0] sm:$0xf]
    %v476 = vld [vmem:[#allocation4 + $0x4d4] sm:$0xf]
    %v477 = vld [vmem:[#allocation4 + $0x4d8] sm:$0xf]
    %v478 = vld [vmem:[#allocation4 + $0x4dc] sm:$0xf]
    %v479 = vld [vmem:[#allocation4 + $0x4e0] sm:$0xf]
    %v480 = vld [vmem:[#allocation4 + $0x4e4] sm:$0xf]
    %v481 = vld [vmem:[#allocation4 + $0x4e8] sm:$0xf]
    %v482 = vld [vmem:[#allocation4 + $0x4ec] sm:$0xf]
    %v483 = vld [vmem:[#allocation4 + $0x4f0] sm:$0xf]
    %v484 = vld [vmem:[#allocation4 + $0x4f4] sm:$0xf]
    %v485 = vld [vmem:[#allocation4 + $0x4f8] sm:$0xf]
    %v486 = vld [vmem:[#allocation4 + $0x4fc] sm:$0xf]
    %v487 = vld [vmem:[#allocation4 + $0x500] sm:$0xf]
    %v488 = vld [vmem:[#allocation4 + $0x504] sm:$0xf]
    %v489 = vld [vmem:[#allocation4 + $0x508] sm:$0xf]
    %v490 = vld [vmem:[#allocation4 + $0x50c] sm:$0xf]
    %v491 = vld [vmem:[#allocation4 + $0x510] sm:$0xf]
    %v492 = vld [vmem:[#allocation4 + $0x514] sm:$0xf]
    %v493 = vld [vmem:[#allocation4 + $0x518] sm:$0xf]
    %v494 = vld [vmem:[#allocation4 + $0x51c] sm:$0xf]
    %v495 = vld [vmem:[#allocation4 + $0x520] sm:$0xf]
    %v496 = vld [vmem:[#allocation4 + $0x524] sm:$0xf]
    %v497 = vld [vmem:[#allocation4 + $0x528] sm:$0xf]
    %v498 = vld [vmem:[#allocation4 + $0x52c] sm:$0xf]
    %v499 = vld [vmem:[#allocation4 + $0x530] sm:$0xf]
    %v500 = vld [vmem:[#allocation4 + $0x534] sm:$0xf]
    %v501 = vld [vmem:[#allocation4 + $0x538] sm:$0xf]
    %v502 = vld [vmem:[#allocation4 + $0x53c] sm:$0xf]
    %v503 = vld [vmem:[#allocation4 + $0x540] sm:$0xf]
    %v504 = vld [vmem:[#allocation4 + $0x544] sm:$0xf]
    %v505 = vld [vmem:[#allocation4 + $0x548] sm:$0xf]
    %v506 = vld [vmem:[#allocation4 + $0x54c] sm:$0xf]
    %v507 = vld [vmem:[#allocation4 + $0x550] sm:$0xf]
    %v508 = vld [vmem:[#allocation4 + $0x554] sm:$0xf]
    %v509 = vld [vmem:[#allocation4 + $0x558] sm:$0xf]
    %v510 = vld [vmem:[#allocation4 + $0x55c] sm:$0xf]
    %v511 = vld [vmem:[#allocation4 + $0x560] sm:$0xf]
    %v512 = vld [vmem:[#allocation4 + $0x564] sm:$0xf]
    %v513 = vld [vmem:[#allocation4 + $0x568] sm:$0xf]
    %v514 = vld [vmem:[#allocation4 + $0x56c] sm:$0xf]
    %v515 = vld [vmem:[#allocation4 + $0x570] sm:$0xf]
    %v516 = vld [vmem:[#allocation4 + $0x574] sm:$0xf]
    %v517 = vld [vmem:[#allocation4 + $0x578] sm:$0xf]
    %v518 = vld [vmem:[#allocation4 + $0x57c] sm:$0xf]
    %v519 = vld [vmem:[#allocation4 + $0x580] sm:$0xf]
    %v520 = vld [vmem:[#allocation4 + $0x584] sm:$0xf]
    %v521 = vld [vmem:[#allocation4 + $0x588] sm:$0xf]
    %v522 = vld [vmem:[#allocation4 + $0x58c] sm:$0xf]
    %v523 = vld [vmem:[#allocation4 + $0x590] sm:$0xf]
    %v524 = vld [vmem:[#allocation4 + $0x594] sm:$0xf]
    %v525 = vld [vmem:[#allocation4 + $0x598] sm:$0xf]
    %v526 = vld [vmem:[#allocation4 + $0x59c] sm:$0xf]
    %v527 = vld [vmem:[#allocation4 + $0x5a0] sm:$0xf]
    %v528 = vld [vmem:[#allocation4 + $0x5a4] sm:$0xf]
    %v529 = vld [vmem:[#allocation4 + $0x5a8] sm:$0xf]
    %v530 = vld [vmem:[#allocation4 + $0x5ac] sm:$0xf]
    %v531 = vld [vmem:[#allocation4 + $0x5b0] sm:$0xf]
    %v532 = vld [vmem:[#allocation4 + $0x5b4] sm:$0xf]
    %v533 = vld [vmem:[#allocation4 + $0x5b8] sm:$0xf]
    %v534 = vld [vmem:[#allocation4 + $0x5bc] sm:$0xf]
    %v535 = vld [vmem:[#allocation4 + $0x5c0] sm:$0xf]
    %v536 = vld [vmem:[#allocation4 + $0x5c4] sm:$0xf]
    %v537 = vld [vmem:[#allocation4 + $0x5c8] sm:$0xf]
    %v538 = vld [vmem:[#allocation4 + $0x5cc] sm:$0xf]
    %v539 = vld [vmem:[#allocation4 + $0x5d0] sm:$0xf]
    %v540 = vld [vmem:[#allocation4 + $0x5d4] sm:$0xf]
    %v541 = vld [vmem:[#allocation4 + $0x5d8] sm:$0xf]
    %v542 = vld [vmem:[#allocation4 + $0x5dc] sm:$0xf]
    %v543 = vld [vmem:[#allocation4 + $0x5e0] sm:$0xf]
    %v544 = vld [vmem:[#allocation4 + $0x5e4] sm:$0xf]
    %v545 = vld [vmem:[#allocation4 + $0x5e8] sm:$0xf]
    %v546 = vld [vmem:[#allocation4 + $0x5ec] sm:$0xf]
    %v547 = vld [vmem:[#allocation4 + $0x5f0] sm:$0xf]
    %v548 = vld [vmem:[#allocation4 + $0x5f4] sm:$0xf]
    %v549 = vld [vmem:[#allocation4 + $0x5f8] sm:$0xf]
    %v550 = vld [vmem:[#allocation4 + $0x5fc] sm:$0xf]
    %v551 = vld [vmem:[#allocation4 + $0x600] sm:$0xf]
    %v552 = vld [vmem:[#allocation4 + $0x604] sm:$0xf]
    %v553 = vld [vmem:[#allocation4 + $0x608] sm:$0xf]
    %v554 = vld [vmem:[#allocation4 + $0x60c] sm:$0xf]
    %v555 = vld [vmem:[#allocation4 + $0x610] sm:$0xf]
    %v556 = vld [vmem:[#allocation4 + $0x614] sm:$0xf]
    %v557 = vld [vmem:[#allocation4 + $0x618] sm:$0xf]
    %v558 = vld [vmem:[#allocation4 + $0x61c] sm:$0xf]
    %v559 = vld [vmem:[#allocation4 + $0x620] sm:$0xf]
    %v560 = vld [vmem:[#allocation4 + $0x624] sm:$0xf]
    %v561 = vld [vmem:[#allocation4 + $0x628] sm:$0xf]
    %v562 = vld [vmem:[#allocation4 + $0x62c] sm:$0xf]
    %v563 = vld [vmem:[#allocation4 + $0x630] sm:$0xf]
    %v564 = vld [vmem:[#allocation4 + $0x634] sm:$0xf]
    %v565 = vld [vmem:[#allocation4 + $0x638] sm:$0xf]
    %v566 = vld [vmem:[#allocation4 + $0x63c] sm:$0xf]
    %v567 = vld [vmem:[#allocation4 + $0x640] sm:$0xf]
    %v568 = vld [vmem:[#allocation4 + $0x644] sm:$0xf]
    %v569 = vld [vmem:[#allocation4 + $0x648] sm:$0xf]
    %v570 = vld [vmem:[#allocation4 + $0x64c] sm:$0xf]
    %v571 = vld [vmem:[#allocation4 + $0x650] sm:$0xf]
    %v572 = vld [vmem:[#allocation4 + $0x654] sm:$0xf]
    %v573 = vld [vmem:[#allocation4 + $0x658] sm:$0xf]
    %v574 = vld [vmem:[#allocation4 + $0x65c] sm:$0xf]
    %v575 = vld [vmem:[#allocation4 + $0x660] sm:$0xf]
    %v576 = vld [vmem:[#allocation4 + $0x664] sm:$0xf]
    %v577 = vld [vmem:[#allocation4 + $0x668] sm:$0xf]
    %v578 = vld [vmem:[#allocation4 + $0x66c] sm:$0xf]
    %v579 = vld [vmem:[#allocation4 + $0x670] sm:$0xf]
    %v580 = vld [vmem:[#allocation4 + $0x674] sm:$0xf]
    %v581 = vld [vmem:[#allocation4 + $0x678] sm:$0xf]
    %v582 = vld [vmem:[#allocation4 + $0x67c] sm:$0xf]
    %v583 = vld [vmem:[#allocation4 + $0x680] sm:$0xf]
    %v584 = vld [vmem:[#allocation4 + $0x684] sm:$0xf]
    %v585 = vld [vmem:[#allocation4 + $0x688] sm:$0xf]
    %v586 = vld [vmem:[#allocation4 + $0x68c] sm:$0xf]
    %v587 = vld [vmem:[#allocation4 + $0x690] sm:$0xf]
    %v588 = vld [vmem:[#allocation4 + $0x694] sm:$0xf]
    %v589 = vld [vmem:[#allocation4 + $0x698] sm:$0xf]
    %v590 = vld [vmem:[#allocation4 + $0x69c] sm:$0xf]
    %v591 = vld [vmem:[#allocation4 + $0x6a0] sm:$0xf]
    %v592 = vld [vmem:[#allocation4 + $0x6a4] sm:$0xf]
    %v593 = vld [vmem:[#allocation4 + $0x6a8] sm:$0xf]
    %v594 = vld [vmem:[#allocation4 + $0x6ac] sm:$0xf]
    %v595 = vld [vmem:[#allocation4 + $0x6b0] sm:$0xf]
    %v596 = vld [vmem:[#allocation4 + $0x6b4] sm:$0xf]
    %v597 = vld [vmem:[#allocation4 + $0x6b8] sm:$0xf]
    %v598 = vld [vmem:[#allocation4 + $0x6bc] sm:$0xf]
    %v599 = vld [vmem:[#allocation4 + $0x6c0] sm:$0xf]
    %v600 = vld [vmem:[#allocation4 + $0x6c4] sm:$0xf]
    %v601 = vld [vmem:[#allocation4 + $0x6c8] sm:$0xf]
    %v602 = vld [vmem:[#allocation4 + $0x6cc] sm:$0xf]
    %v603 = vld [vmem:[#allocation4 + $0x6d0] sm:$0xf]
    %v604 = vld [vmem:[#allocation4 + $0x6d4] sm:$0xf]
    %v605 = vld [vmem:[#allocation4 + $0x6d8] sm:$0xf]
    %v606 = vld [vmem:[#allocation4 + $0x6dc] sm:$0xf]
    %v607 = vld [vmem:[#allocation4 + $0x6e0] sm:$0xf]
    %v608 = vld [vmem:[#allocation4 + $0x6e4] sm:$0xf]
    %v609 = vld [vmem:[#allocation4 + $0x6e8] sm:$0xf]
    %v610 = vld [vmem:[#allocation4 + $0x6ec] sm:$0xf]
    %v611 = vld [vmem:[#allocation4 + $0x6f0] sm:$0xf]
    %v612 = vld [vmem:[#allocation4 + $0x6f4] sm:$0xf]
    %v613 = vld [vmem:[#allocation4 + $0x6f8] sm:$0xf]
    %v614 = vld [vmem:[#allocation4 + $0x6fc] sm:$0xf]
    %v615 = vld [vmem:[#allocation4 + $0x700] sm:$0xf]
    %v616 = vld [vmem:[#allocation4 + $0x704] sm:$0xf]
    %v617 = vld [vmem:[#allocation4 + $0x708] sm:$0xf]
    %v618 = vld [vmem:[#allocation4 + $0x70c] sm:$0xf]
    %v619 = vld [vmem:[#allocation4 + $0x710] sm:$0xf]
    %v620 = vld [vmem:[#allocation4 + $0x714] sm:$0xf]
    %v621 = vld [vmem:[#allocation4 + $0x718] sm:$0xf]
    %v622 = vld [vmem:[#allocation4 + $0x71c] sm:$0xf]
    %v623 = vld [vmem:[#allocation4 + $0x720] sm:$0xf]
    %v624 = vld [vmem:[#allocation4 + $0x724] sm:$0xf]
    %v625 = vld [vmem:[#allocation4 + $0x728] sm:$0xf]
    %v626 = vld [vmem:[#allocation4 + $0x72c] sm:$0xf]
    %v627 = vld [vmem:[#allocation4 + $0x730] sm:$0xf]
    %v628 = vld [vmem:[#allocation4 + $0x734] sm:$0xf]
    %v629 = vld [vmem:[#allocation4 + $0x738] sm:$0xf]
    %v630 = vld [vmem:[#allocation4 + $0x73c] sm:$0xf]
    %v631 = vld [vmem:[#allocation4 + $0x740] sm:$0xf]
    %v632 = vld [vmem:[#allocation4 + $0x744] sm:$0xf]
    %v633 = vld [vmem:[#allocation4 + $0x748] sm:$0xf]
    %v634 = vld [vmem:[#allocation4 + $0x74c] sm:$0xf]
    %v635 = vld [vmem:[#allocation4 + $0x750] sm:$0xf]
    %v636 = vld [vmem:[#allocation4 + $0x754] sm:$0xf]
    %v637 = vld [vmem:[#allocation4 + $0x758] sm:$0xf]
    %v638 = vld [vmem:[#allocation4 + $0x75c] sm:$0xf]
    %v639 = vld [vmem:[#allocation4 + $0x760] sm:$0xf]
    %v640 = vld [vmem:[#allocation4 + $0x764] sm:$0xf]
    %v641 = vld [vmem:[#allocation4 + $0x768] sm:$0xf]
    %v642 = vld [vmem:[#allocation4 + $0x76c] sm:$0xf]
    %v643 = vld [vmem:[#allocation4 + $0x770] sm:$0xf]
    %v644 = vld [vmem:[#allocation4 + $0x774] sm:$0xf]
    %v645 = vld [vmem:[#allocation4 + $0x778] sm:$0xf]
    %v646 = vld [vmem:[#allocation4 + $0x77c] sm:$0xf]
    %v647 = vld [vmem:[#allocation4 + $0x780] sm:$0xf]
    %v648 = vld [vmem:[#allocation4 + $0x784] sm:$0xf]
    %v649 = vld [vmem:[#allocation4 + $0x788] sm:$0xf]
    %v650 = vld [vmem:[#allocation4 + $0x78c] sm:$0xf]
    %v651 = vld [vmem:[#allocation4 + $0x790] sm:$0xf]
    %v652 = vld [vmem:[#allocation4 + $0x794] sm:$0xf]
    %v653 = vld [vmem:[#allocation4 + $0x798] sm:$0xf]
    %v654 = vld [vmem:[#allocation4 + $0x79c] sm:$0xf]
    %v655 = vld [vmem:[#allocation4 + $0x7a0] sm:$0xf]
    %v656 = vld [vmem:[#allocation4 + $0x7a4] sm:$0xf]
    %v657 = vld [vmem:[#allocation4 + $0x7a8] sm:$0xf]
    %v658 = vld [vmem:[#allocation4 + $0x7ac] sm:$0xf]
    %v659 = vld [vmem:[#allocation4 + $0x7b0] sm:$0xf]
    %v660 = vld [vmem:[#allocation4 + $0x7b4] sm:$0xf]
    %v661 = vld [vmem:[#allocation4 + $0x7b8] sm:$0xf]
    %v662 = vld [vmem:[#allocation4 + $0x7bc] sm:$0xf]
    %v663 = vld [vmem:[#allocation4 + $0x7c0] sm:$0xf]
    %v664 = vld [vmem:[#allocation4 + $0x7c4] sm:$0xf]
    %v665 = vld [vmem:[#allocation4 + $0x7c8] sm:$0xf]
    %v666 = vld [vmem:[#allocation4 + $0x7cc] sm:$0xf]
    %v667 = vld [vmem:[#allocation4 + $0x7d0] sm:$0xf]
    %v668 = vld [vmem:[#allocation4 + $0x7d4] sm:$0xf]
    %v669 = vld [vmem:[#allocation4 + $0x7d8] sm:$0xf]
    %v670 = vld [vmem:[#allocation4 + $0x7dc] sm:$0xf]
    %v671 = vld [vmem:[#allocation4 + $0x7e0] sm:$0xf]
    %v672 = vld [vmem:[#allocation4 + $0x7e4] sm:$0xf]
    %v673 = vld [vmem:[#allocation4 + $0x7e8] sm:$0xf]
    %v674 = vld [vmem:[#allocation4 + $0x7ec] sm:$0xf]
    %v675 = vld [vmem:[#allocation4 + $0x7f0] sm:$0xf]
    %v676 = vld [vmem:[#allocation4 + $0x7f4] sm:$0xf]
    %v677 = vld [vmem:[#allocation4 + $0x7f8] sm:$0xf]
    %v678 = vld [vmem:[#allocation4 + $0x7fc] sm:$0xf]
    %v679 = vld [vmem:[#allocation4 + $0x800] sm:$0xf]
    %v680 = vld [vmem:[#allocation4 + $0x804] sm:$0xf]
    %v681 = vld [vmem:[#allocation4 + $0x808] sm:$0xf]
    %v682 = vld [vmem:[#allocation4 + $0x80c] sm:$0xf]
    %v683 = vld [vmem:[#allocation4 + $0x810] sm:$0xf]
    %v684 = vld [vmem:[#allocation4 + $0x814] sm:$0xf]
    %v685 = vld [vmem:[#allocation4 + $0x818] sm:$0xf]
    %v686 = vld [vmem:[#allocation4 + $0x81c] sm:$0xf]
    %v687 = vld [vmem:[#allocation4 + $0x820] sm:$0xf]
    %v688 = vld [vmem:[#allocation4 + $0x824] sm:$0xf]
    %v689 = vld [vmem:[#allocation4 + $0x828] sm:$0xf]
    %v690 = vld [vmem:[#allocation4 + $0x82c] sm:$0xf]
    %v691 = vld [vmem:[#allocation4 + $0x830] sm:$0xf]
    %v692 = vld [vmem:[#allocation4 + $0x834] sm:$0xf]
    %v693 = vld [vmem:[#allocation4 + $0x838] sm:$0xf]
    %v694 = vld [vmem:[#allocation4 + $0x83c] sm:$0xf]
    %v695 = vld [vmem:[#allocation4 + $0x840] sm:$0xf]
    %v696 = vld [vmem:[#allocation4 + $0x844] sm:$0xf]
    %v697 = vld [vmem:[#allocation4 + $0x848] sm:$0xf]
    %v698 = vld [vmem:[#allocation4 + $0x84c] sm:$0xf]
    %v699 = vld [vmem:[#allocation4 + $0x850] sm:$0xf]
    %v700 = vld [vmem:[#allocation4 + $0x854] sm:$0xf]
    %v701 = vld [vmem:[#allocation4 + $0x858] sm:$0xf]
    %v702 = vld [vmem:[#allocation4 + $0x85c] sm:$0xf]
    %v703 = vld [vmem:[#allocation4 + $0x860] sm:$0xf]
    %v704 = vld [vmem:[#allocation4 + $0x864] sm:$0xf]
    %v705 = vld [vmem:[#allocation4 + $0x868] sm:$0xf]
    %v706 = vld [vmem:[#allocation4 + $0x86c] sm:$0xf]
    %v707 = vld [vmem:[#allocation4 + $0x870] sm:$0xf]
    %v708 = vld [vmem:[#allocation4 + $0x874] sm:$0xf]
    %v709 = vld [vmem:[#allocation4 + $0x878] sm:$0xf]
    %v710 = vld [vmem:[#allocation4 + $0x87c] sm:$0xf]
    %v711 = vld [vmem:[#allocation4 + $0x880] sm:$0xf]
    %v712 = vld [vmem:[#allocation4 + $0x884] sm:$0xf]
    %v713 = vld [vmem:[#allocation4 + $0x888] sm:$0xf]
    %v714 = vld [vmem:[#allocation4 + $0x88c] sm:$0xf]
    %v715 = vld [vmem:[#allocation4 + $0x890] sm:$0xf]
    %v716 = vld [vmem:[#allocation4 + $0x894] sm:$0xf]
    %v717 = vld [vmem:[#allocation4 + $0x898] sm:$0xf]
    %v718 = vld [vmem:[#allocation4 + $0x89c] sm:$0xf]
    %v719 = vld [vmem:[#allocation4 + $0x8a0] sm:$0xf]
    %v720 = vld [vmem:[#allocation4 + $0x8a4] sm:$0xf]
    %v721 = vld [vmem:[#allocation4 + $0x8a8] sm:$0xf]
    %v722 = vld [vmem:[#allocation4 + $0x8ac] sm:$0xf]
    %v723 = vld [vmem:[#allocation4 + $0x8b0] sm:$0xf]
    %v724 = vld [vmem:[#allocation4 + $0x8b4] sm:$0xf]
    %v725 = vld [vmem:[#allocation4 + $0x8b8] sm:$0xf]
    %v726 = vld [vmem:[#allocation4 + $0x8bc] sm:$0xf]
    %v727 = vld [vmem:[#allocation4 + $0x8c0] sm:$0xf]
    %v728 = vld [vmem:[#allocation4 + $0x8c4] sm:$0xf]
    %v729 = vld [vmem:[#allocation4 + $0x8c8] sm:$0xf]
    %v730 = vld [vmem:[#allocation4 + $0x8cc] sm:$0xf]
    %v731 = vld [vmem:[#allocation4 + $0x8d0] sm:$0xf]
    %v732 = vld [vmem:[#allocation4 + $0x8d4] sm:$0xf]
    %v733 = vld [vmem:[#allocation4 + $0x8d8] sm:$0xf]
    %v734 = vld [vmem:[#allocation4 + $0x8dc] sm:$0xf]
    %v735 = vld [vmem:[#allocation4 + $0x8e0] sm:$0xf]
    %v736 = vld [vmem:[#allocation4 + $0x8e4] sm:$0xf]
    %v737 = vld [vmem:[#allocation4 + $0x8e8] sm:$0xf]
    %v738 = vld [vmem:[#allocation4 + $0x8ec] sm:$0xf]
    %v739 = vld [vmem:[#allocation4 + $0x8f0] sm:$0xf]
    %v740 = vld [vmem:[#allocation4 + $0x8f4] sm:$0xf]
    %v741 = vld [vmem:[#allocation4 + $0x8f8] sm:$0xf]
    %v742 = vld [vmem:[#allocation4 + $0x8fc] sm:$0xf]
    %v743 = vld [vmem:[#allocation4 + $0x900] sm:$0xf]
    %v744 = vld [vmem:[#allocation4 + $0x904] sm:$0xf]
    %v745 = vld [vmem:[#allocation4 + $0x908] sm:$0xf]
    %v746 = vld [vmem:[#allocation4 + $0x90c] sm:$0xf]
    %v747 = vld [vmem:[#allocation4 + $0x910] sm:$0xf]
    %v748 = vld [vmem:[#allocation4 + $0x914] sm:$0xf]
    %v749 = vld [vmem:[#allocation4 + $0x918] sm:$0xf]
    %v750 = vld [vmem:[#allocation4 + $0x91c] sm:$0xf]
    %v751 = vld [vmem:[#allocation4 + $0x920] sm:$0xf]
    %v752 = vld [vmem:[#allocation4 + $0x924] sm:$0xf]
    %v753 = vld [vmem:[#allocation4 + $0x928] sm:$0xf]
    %v754 = vld [vmem:[#allocation4 + $0x92c] sm:$0xf]
    %v755 = vld [vmem:[#allocation4 + $0x930] sm:$0xf]
    %v756 = vld [vmem:[#allocation4 + $0x934] sm:$0xf]
    %v757 = vld [vmem:[#allocation4 + $0x938] sm:$0xf]
    %v758 = vld [vmem:[#allocation4 + $0x93c] sm:$0xf]
    %v759 = vld [vmem:[#allocation4 + $0x940] sm:$0xf]
    %v760 = vld [vmem:[#allocation4 + $0x944] sm:$0xf]
    %v761 = vld [vmem:[#allocation4 + $0x948] sm:$0xf]
    %v762 = vld [vmem:[#allocation4 + $0x94c] sm:$0xf]
    %v763 = vld [vmem:[#allocation4 + $0x950] sm:$0xf]
    %v764 = vld [vmem:[#allocation4 + $0x954] sm:$0xf]
    %v765 = vld [vmem:[#allocation4 + $0x958] sm:$0xf]
    %v766 = vld [vmem:[#allocation4 + $0x95c] sm:$0xf]
    %v767 = vld [vmem:[#allocation4 + $0x960] sm:$0xf]
    %v768 = vld [vmem:[#allocation4 + $0x964] sm:$0xf]
    %v769 = vld [vmem:[#allocation4 + $0x968] sm:$0xf]
    %v770 = vld [vmem:[#allocation4 + $0x96c] sm:$0xf]
    %v771 = vld [vmem:[#allocation4 + $0x970] sm:$0xf]
    %v772 = vld [vmem:[#allocation4 + $0x974] sm:$0xf]
    %v773 = vld [vmem:[#allocation4 + $0x978] sm:$0xf]
    %v774 = vld [vmem:[#allocation4 + $0x97c] sm:$0xf]
    %v775 = vld [vmem:[#allocation4 + $0x980] sm:$0xf]
    %v776 = vld [vmem:[#allocation4 + $0x984] sm:$0xf]
    %v777 = vld [vmem:[#allocation4 + $0x988] sm:$0xf]
    %v778 = vld [vmem:[#allocation4 + $0x98c] sm:$0xf]
    %v779 = vld [vmem:[#allocation4 + $0x990] sm:$0xf]
    %v780 = vld [vmem:[#allocation4 + $0x994] sm:$0xf]
    %v781 = vld [vmem:[#allocation4 + $0x998] sm:$0xf]
    %v782 = vld [vmem:[#allocation4 + $0x99c] sm:$0xf]
    %v783 = vld [vmem:[#allocation4 + $0x9a0] sm:$0xf]
    %v784 = vld [vmem:[#allocation4 + $0x9a4] sm:$0xf]
    %v785 = vld [vmem:[#allocation4 + $0x9a8] sm:$0xf]
    %v786 = vld [vmem:[#allocation4 + $0x9ac] sm:$0xf]
    %v787 = vld [vmem:[#allocation4 + $0x9b0] sm:$0xf]
    %v788 = vld [vmem:[#allocation4 + $0x9b4] sm:$0xf]
    %v789 = vld [vmem:[#allocation4 + $0x9b8] sm:$0xf]
    %v790 = vld [vmem:[#allocation4 + $0x9bc] sm:$0xf]
    %v791 = vld [vmem:[#allocation4 + $0x9c0] sm:$0xf]
    %v792 = vld [vmem:[#allocation6] sm:$0x1]
    %v794 = vlaneseq
    %v795 = vshrl.u32 %v794, 7
    %v796 = vsub.s32 0, %v795
    %v797 = vrot.slane %v792, %v796
    %v1424 = vunpack.c.l.b16 %v167
    %v1425 = vunpack.c.l.b16 %v168
    %v1426 = vunpack.c.l.b16 %v169
    %v1427 = vunpack.c.l.b16 %v170
    %v1428 = vunpack.c.l.b16 %v171
    %v1429 = vunpack.c.l.b16 %v172
    %v1430 = vunpack.c.l.b16 %v173
    %v1431 = vunpack.c.l.b16 %v174
    %v1432 = vunpack.c.l.b16 %v175
    %v1433 = vunpack.c.l.b16 %v176
    %v1434 = vunpack.c.l.b16 %v177
    %v1435 = vunpack.c.l.b16 %v178
    %v1436 = vunpack.c.l.b16 %v179
    %v1437 = vunpack.c.l.b16 %v180
    %v1438 = vunpack.c.l.b16 %v181
    %v1439 = vunpack.c.l.b16 %v182
    %v1440 = vunpack.c.l.b16 %v183
    %v1441 = vunpack.c.l.b16 %v184
    %v1442 = vunpack.c.l.b16 %v185
    %v1443 = vunpack.c.l.b16 %v186
    %v1444 = vunpack.c.l.b16 %v187
    %v1445 = vunpack.c.l.b16 %v188
    %v1446 = vunpack.c.l.b16 %v189
    %v1447 = vunpack.c.l.b16 %v190
    %v1448 = vunpack.c.l.b16 %v191
    %v1449 = vunpack.c.l.b16 %v192
    %v1450 = vunpack.c.l.b16 %v193
    %v1451 = vunpack.c.l.b16 %v194
    %v1452 = vunpack.c.l.b16 %v195
    %v1453 = vunpack.c.l.b16 %v196
    %v1454 = vunpack.c.l.b16 %v197
    %v1455 = vunpack.c.l.b16 %v198
    %v1456 = vunpack.c.l.b16 %v199
    %v1457 = vunpack.c.l.b16 %v200
    %v1458 = vunpack.c.l.b16 %v201
    %v1459 = vunpack.c.l.b16 %v202
    %v1460 = vunpack.c.l.b16 %v203
    %v1461 = vunpack.c.l.b16 %v204
    %v1462 = vunpack.c.l.b16 %v205
    %v1463 = vunpack.c.l.b16 %v206
    %v1464 = vunpack.c.l.b16 %v207
    %v1465 = vunpack.c.l.b16 %v208
    %v1466 = vunpack.c.l.b16 %v209
    %v1467 = vunpack.c.l.b16 %v210
    %v1468 = vunpack.c.l.b16 %v211
    %v1469 = vunpack.c.l.b16 %v212
    %v1470 = vunpack.c.l.b16 %v213
    %v1471 = vunpack.c.l.b16 %v214
    %v1472 = vunpack.c.l.b16 %v215
    %v1473 = vunpack.c.l.b16 %v216
    %v1474 = vunpack.c.l.b16 %v217
    %v1475 = vunpack.c.l.b16 %v218
    %v1476 = vunpack.c.l.b16 %v219
    %v1477 = vunpack.c.l.b16 %v220
    %v1478 = vunpack.c.l.b16 %v221
    %v1479 = vunpack.c.l.b16 %v222
    %v1480 = vunpack.c.l.b16 %v223
    %v1481 = vunpack.c.l.b16 %v224
    %v1482 = vunpack.c.l.b16 %v225
    %v1483 = vunpack.c.l.b16 %v226
    %v1484 = vunpack.c.l.b16 %v227
    %v1485 = vunpack.c.l.b16 %v228
    %v1486 = vunpack.c.l.b16 %v229
    %v1487 = vunpack.c.l.b16 %v230
    %v1488 = vunpack.c.l.b16 %v231
    %v1489 = vunpack.c.l.b16 %v232
    %v1490 = vunpack.c.l.b16 %v233
    %v1491 = vunpack.c.l.b16 %v234
    %v1492 = vunpack.c.l.b16 %v235
    %v1493 = vunpack.c.l.b16 %v236
    %v1494 = vunpack.c.l.b16 %v237
    %v1495 = vunpack.c.l.b16 %v238
    %v1496 = vunpack.c.l.b16 %v239
    %v1497 = vunpack.c.l.b16 %v240
    %v1498 = vunpack.c.l.b16 %v241
    %v1499 = vunpack.c.l.b16 %v242
    %v1500 = vunpack.c.l.b16 %v243
    %v1501 = vunpack.c.l.b16 %v244
    %v1502 = vunpack.c.l.b16 %v245
    %v1503 = vunpack.c.l.b16 %v246
    %v1504 = vunpack.c.l.b16 %v247
    %v1505 = vunpack.c.l.b16 %v248
    %v1506 = vunpack.c.l.b16 %v249
    %v1507 = vunpack.c.l.b16 %v250
    %v1508 = vunpack.c.l.b16 %v251
    %v1509 = vunpack.c.l.b16 %v252
    %v1510 = vunpack.c.l.b16 %v253
    %v1511 = vunpack.c.l.b16 %v254
    %v1512 = vunpack.c.l.b16 %v255
    %v1513 = vunpack.c.l.b16 %v256
    %v1514 = vunpack.c.l.b16 %v257
    %v1515 = vunpack.c.l.b16 %v258
    %v1516 = vunpack.c.l.b16 %v259
    %v1517 = vunpack.c.l.b16 %v260
    %v1518 = vunpack.c.l.b16 %v261
    %v1519 = vunpack.c.l.b16 %v262
    %v1520 = vunpack.c.l.b16 %v263
    %v1521 = vunpack.c.l.b16 %v264
    %v1522 = vunpack.c.l.b16 %v265
    %v1523 = vunpack.c.l.b16 %v266
    %v1524 = vunpack.c.l.b16 %v267
    %v1525 = vunpack.c.l.b16 %v268
    %v1526 = vunpack.c.l.b16 %v269
    %v1527 = vunpack.c.l.b16 %v270
    %v1528 = vunpack.c.l.b16 %v271
    %v1529 = vunpack.c.l.b16 %v272
    %v1530 = vunpack.c.l.b16 %v273
    %v1531 = vunpack.c.l.b16 %v274
    %v1532 = vunpack.c.l.b16 %v275
    %v1533 = vunpack.c.l.b16 %v276
    %v1534 = vunpack.c.l.b16 %v277
    %v1535 = vunpack.c.l.b16 %v278
    %v1536 = vunpack.c.l.b16 %v279
    %v1537 = vunpack.c.l.b16 %v280
    %v1538 = vunpack.c.l.b16 %v281
    %v1539 = vunpack.c.l.b16 %v282
    %v1540 = vunpack.c.l.b16 %v283
    %v1541 = vunpack.c.l.b16 %v284
    %v1542 = vunpack.c.l.b16 %v285
    %v1543 = vunpack.c.l.b16 %v286
    %v1544 = vunpack.c.l.b16 %v287
    %v1545 = vunpack.c.l.b16 %v288
    %v1546 = vunpack.c.l.b16 %v289
    %v1547 = vunpack.c.l.b16 %v290
    %v1548 = vunpack.c.l.b16 %v291
    %v1549 = vunpack.c.l.b16 %v292
    %v1550 = vunpack.c.l.b16 %v293
    %v1551 = vunpack.c.l.b16 %v294
    %v1552 = vunpack.c.l.b16 %v295
    %v1553 = vunpack.c.l.b16 %v296
    %v1554 = vunpack.c.l.b16 %v297
    %v1555 = vunpack.c.l.b16 %v298
    %v1556 = vunpack.c.l.b16 %v299
    %v1557 = vunpack.c.l.b16 %v300
    %v1558 = vunpack.c.l.b16 %v301
    %v1559 = vunpack.c.l.b16 %v302
    %v1560 = vunpack.c.l.b16 %v303
    %v1561 = vunpack.c.l.b16 %v304
    %v1562 = vunpack.c.l.b16 %v305
    %v1563 = vunpack.c.l.b16 %v306
    %v1564 = vunpack.c.l.b16 %v307
    %v1565 = vunpack.c.l.b16 %v308
    %v1566 = vunpack.c.l.b16 %v309
    %v1567 = vunpack.c.l.b16 %v310
    %v1568 = vunpack.c.l.b16 %v311
    %v1569 = vunpack.c.l.b16 %v312
    %v1570 = vunpack.c.l.b16 %v313
    %v1571 = vunpack.c.l.b16 %v314
    %v1572 = vunpack.c.l.b16 %v315
    %v1573 = vunpack.c.l.b16 %v316
    %v1574 = vunpack.c.l.b16 %v317
    %v1575 = vunpack.c.l.b16 %v318
    %v1576 = vunpack.c.l.b16 %v319
    %v1577 = vunpack.c.l.b16 %v320
    %v1578 = vunpack.c.l.b16 %v321
    %v1579 = vunpack.c.l.b16 %v322
    %v1580 = vunpack.c.l.b16 %v323
    %v1581 = vunpack.c.l.b16 %v324
    %v1582 = vunpack.c.l.b16 %v325
    %v1583 = vunpack.c.l.b16 %v326
    %v1584 = vunpack.c.l.b16 %v327
    %v1585 = vunpack.c.l.b16 %v328
    %v1586 = vunpack.c.l.b16 %v329
    %v1587 = vunpack.c.l.b16 %v330
    %v1588 = vunpack.c.l.b16 %v331
    %v1589 = vunpack.c.l.b16 %v332
    %v1590 = vunpack.c.l.b16 %v333
    %v1591 = vunpack.c.l.b16 %v334
    %v1592 = vunpack.c.l.b16 %v335
    %v1593 = vunpack.c.l.b16 %v336
    %v1594 = vunpack.c.l.b16 %v337
    %v1595 = vunpack.c.l.b16 %v338
    %v1596 = vunpack.c.l.b16 %v339
    %v1597 = vunpack.c.l.b16 %v340
    %v1598 = vunpack.c.l.b16 %v341
    %v1599 = vunpack.c.l.b16 %v342
    %v1600 = vunpack.c.l.b16 %v343
    %v1601 = vunpack.c.l.b16 %v344
    %v1602 = vunpack.c.l.b16 %v345
    %v1603 = vunpack.c.l.b16 %v346
    %v1604 = vunpack.c.l.b16 %v347
    %v1605 = vunpack.c.l.b16 %v348
    %v1606 = vunpack.c.l.b16 %v349
    %v1607 = vunpack.c.l.b16 %v350
    %v1608 = vunpack.c.l.b16 %v351
    %v1609 = vunpack.c.l.b16 %v352
    %v1610 = vunpack.c.l.b16 %v353
    %v1611 = vunpack.c.l.b16 %v354
    %v1612 = vunpack.c.l.b16 %v355
    %v1613 = vunpack.c.l.b16 %v356
    %v1614 = vunpack.c.l.b16 %v357
    %v1615 = vunpack.c.l.b16 %v358
    %v1616 = vunpack.c.l.b16 %v359
    %v1617 = vunpack.c.l.b16 %v360
    %v1618 = vunpack.c.l.b16 %v361
    %v1619 = vunpack.c.l.b16 %v362
    %v1620 = vunpack.c.l.b16 %v363
    %v1621 = vunpack.c.l.b16 %v364
    %v1622 = vunpack.c.l.b16 %v365
    %v1623 = vunpack.c.l.b16 %v366
    %v1624 = vunpack.c.l.b16 %v367
    %v1625 = vunpack.c.l.b16 %v368
    %v1626 = vunpack.c.l.b16 %v369
    %v1627 = vunpack.c.l.b16 %v370
    %v1628 = vunpack.c.l.b16 %v371
    %v1629 = vunpack.c.l.b16 %v372
    %v1630 = vunpack.c.l.b16 %v373
    %v1631 = vunpack.c.l.b16 %v374
    %v1632 = vunpack.c.l.b16 %v375
    %v1633 = vunpack.c.l.b16 %v376
    %v1634 = vunpack.c.l.b16 %v377
    %v1635 = vunpack.c.l.b16 %v378
    %v1636 = vunpack.c.l.b16 %v379
    %v1637 = vunpack.c.l.b16 %v380
    %v1638 = vunpack.c.l.b16 %v381
    %v1639 = vunpack.c.l.b16 %v382
    %v1640 = vunpack.c.l.b16 %v383
    %v1641 = vunpack.c.l.b16 %v384
    %v1642 = vunpack.c.l.b16 %v385
    %v1643 = vunpack.c.l.b16 %v386
    %v1644 = vunpack.c.l.b16 %v387
    %v1645 = vunpack.c.l.b16 %v388
    %v1646 = vunpack.c.l.b16 %v389
    %v1647 = vunpack.c.l.b16 %v390
    %v1648 = vunpack.c.l.b16 %v391
    %v1649 = vunpack.c.l.b16 %v392
    %v1650 = vunpack.c.l.b16 %v393
    %v1651 = vunpack.c.l.b16 %v394
    %v1652 = vunpack.c.l.b16 %v395
    %v1653 = vunpack.c.l.b16 %v396
    %v1654 = vunpack.c.l.b16 %v397
    %v1655 = vunpack.c.l.b16 %v398
    %v1656 = vunpack.c.l.b16 %v399
    %v1657 = vunpack.c.l.b16 %v400
    %v1658 = vunpack.c.l.b16 %v401
    %v1659 = vunpack.c.l.b16 %v402
    %v1660 = vunpack.c.l.b16 %v403
    %v1661 = vunpack.c.l.b16 %v404
    %v1662 = vunpack.c.l.b16 %v405
    %v1663 = vunpack.c.l.b16 %v406
    %v1664 = vunpack.c.l.b16 %v407
    %v1665 = vunpack.c.l.b16 %v408
    %v1666 = vunpack.c.l.b16 %v409
    %v1667 = vunpack.c.l.b16 %v410
    %v1668 = vunpack.c.l.b16 %v411
    %v1669 = vunpack.c.l.b16 %v412
    %v1670 = vunpack.c.l.b16 %v413
    %v1671 = vunpack.c.l.b16 %v414
    %v1672 = vunpack.c.l.b16 %v415
    %v1673 = vunpack.c.l.b16 %v416
    %v1674 = vunpack.c.l.b16 %v417
    %v1675 = vunpack.c.l.b16 %v418
    %v1676 = vunpack.c.l.b16 %v419
    %v1677 = vunpack.c.l.b16 %v420
    %v1678 = vunpack.c.l.b16 %v421
    %v1679 = vunpack.c.l.b16 %v422
    %v1680 = vunpack.c.l.b16 %v423
    %v1681 = vunpack.c.l.b16 %v424
    %v1682 = vunpack.c.l.b16 %v425
    %v1683 = vunpack.c.l.b16 %v426
    %v1684 = vunpack.c.l.b16 %v427
    %v1685 = vunpack.c.l.b16 %v428
    %v1686 = vunpack.c.l.b16 %v429
    %v1687 = vunpack.c.l.b16 %v430
    %v1688 = vunpack.c.l.b16 %v431
    %v1689 = vunpack.c.l.b16 %v432
    %v1690 = vunpack.c.l.b16 %v433
    %v1691 = vunpack.c.l.b16 %v434
    %v1692 = vunpack.c.l.b16 %v435
    %v1693 = vunpack.c.l.b16 %v436
    %v1694 = vunpack.c.l.b16 %v437
    %v1695 = vunpack.c.l.b16 %v438
    %v1696 = vunpack.c.l.b16 %v439
    %v1697 = vunpack.c.l.b16 %v440
    %v1698 = vunpack.c.l.b16 %v441
    %v1699 = vunpack.c.l.b16 %v442
    %v1700 = vunpack.c.l.b16 %v443
    %v1701 = vunpack.c.l.b16 %v444
    %v1702 = vunpack.c.l.b16 %v445
    %v1703 = vunpack.c.l.b16 %v446
    %v1704 = vunpack.c.l.b16 %v447
    %v1705 = vunpack.c.l.b16 %v448
    %v1706 = vunpack.c.l.b16 %v449
    %v1707 = vunpack.c.l.b16 %v450
    %v1708 = vunpack.c.l.b16 %v451
    %v1709 = vunpack.c.l.b16 %v452
    %v1710 = vunpack.c.l.b16 %v453
    %v1711 = vunpack.c.l.b16 %v454
    %v1712 = vunpack.c.l.b16 %v455
    %v1713 = vunpack.c.l.b16 %v456
    %v1714 = vunpack.c.l.b16 %v457
    %v1715 = vunpack.c.l.b16 %v458
    %v1716 = vunpack.c.l.b16 %v459
    %v1717 = vunpack.c.l.b16 %v460
    %v1718 = vunpack.c.l.b16 %v461
    %v1719 = vunpack.c.l.b16 %v462
    %v1720 = vunpack.c.l.b16 %v463
    %v1721 = vunpack.c.l.b16 %v464
    %v1722 = vunpack.c.l.b16 %v465
    %v1723 = vunpack.c.l.b16 %v466
    %v1724 = vunpack.c.l.b16 %v467
    %v1725 = vunpack.c.l.b16 %v468
    %v1726 = vunpack.c.l.b16 %v469
    %v1727 = vunpack.c.l.b16 %v470
    %v1728 = vunpack.c.l.b16 %v471
    %v1729 = vunpack.c.l.b16 %v472
    %v1730 = vunpack.c.l.b16 %v473
    %v1731 = vunpack.c.l.b16 %v474
    %v1732 = vunpack.c.l.b16 %v475
    %v1733 = vunpack.c.l.b16 %v476
    %v1734 = vunpack.c.l.b16 %v477
    %v1735 = vunpack.c.l.b16 %v478
    %v1736 = vunpack.c.l.b16 %v479
    %v1737 = vunpack.c.l.b16 %v480
    %v1738 = vunpack.c.l.b16 %v481
    %v1739 = vunpack.c.l.b16 %v482
    %v1740 = vunpack.c.l.b16 %v483
    %v1741 = vunpack.c.l.b16 %v484
    %v1742 = vunpack.c.l.b16 %v485
    %v1743 = vunpack.c.l.b16 %v486
    %v1744 = vunpack.c.l.b16 %v487
    %v1745 = vunpack.c.l.b16 %v488
    %v1746 = vunpack.c.l.b16 %v489
    %v1747 = vunpack.c.l.b16 %v490
    %v1748 = vunpack.c.l.b16 %v491
    %v1749 = vunpack.c.l.b16 %v492
    %v1750 = vunpack.c.l.b16 %v493
    %v1751 = vunpack.c.l.b16 %v494
    %v1752 = vunpack.c.l.b16 %v495
    %v1753 = vunpack.c.l.b16 %v496
    %v1754 = vunpack.c.l.b16 %v497
    %v1755 = vunpack.c.l.b16 %v498
    %v1756 = vunpack.c.l.b16 %v499
    %v1757 = vunpack.c.l.b16 %v500
    %v1758 = vunpack.c.l.b16 %v501
    %v1759 = vunpack.c.l.b16 %v502
    %v1760 = vunpack.c.l.b16 %v503
    %v1761 = vunpack.c.l.b16 %v504
    %v1762 = vunpack.c.l.b16 %v505
    %v1763 = vunpack.c.l.b16 %v506
    %v1764 = vunpack.c.l.b16 %v507
    %v1765 = vunpack.c.l.b16 %v508
    %v1766 = vunpack.c.l.b16 %v509
    %v1767 = vunpack.c.l.b16 %v510
    %v1768 = vunpack.c.l.b16 %v511
    %v1769 = vunpack.c.l.b16 %v512
    %v1770 = vunpack.c.l.b16 %v513
    %v1771 = vunpack.c.l.b16 %v514
    %v1772 = vunpack.c.l.b16 %v515
    %v1773 = vunpack.c.l.b16 %v516
    %v1774 = vunpack.c.l.b16 %v517
    %v1775 = vunpack.c.l.b16 %v518
    %v1776 = vunpack.c.l.b16 %v519
    %v1777 = vunpack.c.l.b16 %v520
    %v1778 = vunpack.c.l.b16 %v521
    %v1779 = vunpack.c.l.b16 %v522
    %v1780 = vunpack.c.l.b16 %v523
    %v1781 = vunpack.c.l.b16 %v524
    %v1782 = vunpack.c.l.b16 %v525
    %v1783 = vunpack.c.l.b16 %v526
    %v1784 = vunpack.c.l.b16 %v527
    %v1785 = vunpack.c.l.b16 %v528
    %v1786 = vunpack.c.l.b16 %v529
    %v1787 = vunpack.c.l.b16 %v530
    %v1788 = vunpack.c.l.b16 %v531
    %v1789 = vunpack.c.l.b16 %v532
    %v1790 = vunpack.c.l.b16 %v533
    %v1791 = vunpack.c.l.b16 %v534
    %v1792 = vunpack.c.l.b16 %v535
    %v1793 = vunpack.c.l.b16 %v536
    %v1794 = vunpack.c.l.b16 %v537
    %v1795 = vunpack.c.l.b16 %v538
    %v1796 = vunpack.c.l.b16 %v539
    %v1797 = vunpack.c.l.b16 %v540
    %v1798 = vunpack.c.l.b16 %v541
    %v1799 = vunpack.c.l.b16 %v542
    %v1800 = vunpack.c.l.b16 %v543
    %v1801 = vunpack.c.l.b16 %v544
    %v1802 = vunpack.c.l.b16 %v545
    %v1803 = vunpack.c.l.b16 %v546
    %v1804 = vunpack.c.l.b16 %v547
    %v1805 = vunpack.c.l.b16 %v548
    %v1806 = vunpack.c.l.b16 %v549
    %v1807 = vunpack.c.l.b16 %v550
    %v1808 = vunpack.c.l.b16 %v551
    %v1809 = vunpack.c.l.b16 %v552
    %v1810 = vunpack.c.l.b16 %v553
    %v1811 = vunpack.c.l.b16 %v554
    %v1812 = vunpack.c.l.b16 %v555
    %v1813 = vunpack.c.l.b16 %v556
    %v1814 = vunpack.c.l.b16 %v557
    %v1815 = vunpack.c.l.b16 %v558
    %v1816 = vunpack.c.l.b16 %v559
    %v1817 = vunpack.c.l.b16 %v560
    %v1818 = vunpack.c.l.b16 %v561
    %v1819 = vunpack.c.l.b16 %v562
    %v1820 = vunpack.c.l.b16 %v563
    %v1821 = vunpack.c.l.b16 %v564
    %v1822 = vunpack.c.l.b16 %v565
    %v1823 = vunpack.c.l.b16 %v566
    %v1824 = vunpack.c.l.b16 %v567
    %v1825 = vunpack.c.l.b16 %v568
    %v1826 = vunpack.c.l.b16 %v569
    %v1827 = vunpack.c.l.b16 %v570
    %v1828 = vunpack.c.l.b16 %v571
    %v1829 = vunpack.c.l.b16 %v572
    %v1830 = vunpack.c.l.b16 %v573
    %v1831 = vunpack.c.l.b16 %v574
    %v1832 = vunpack.c.l.b16 %v575
    %v1833 = vunpack.c.l.b16 %v576
    %v1834 = vunpack.c.l.b16 %v577
    %v1835 = vunpack.c.l.b16 %v578
    %v1836 = vunpack.c.l.b16 %v579
    %v1837 = vunpack.c.l.b16 %v580
    %v1838 = vunpack.c.l.b16 %v581
    %v1839 = vunpack.c.l.b16 %v582
    %v1840 = vunpack.c.l.b16 %v583
    %v1841 = vunpack.c.l.b16 %v584
    %v1842 = vunpack.c.l.b16 %v585
    %v1843 = vunpack.c.l.b16 %v586
    %v1844 = vunpack.c.l.b16 %v587
    %v1845 = vunpack.c.l.b16 %v588
    %v1846 = vunpack.c.l.b16 %v589
    %v1847 = vunpack.c.l.b16 %v590
    %v1848 = vunpack.c.l.b16 %v591
    %v1849 = vunpack.c.l.b16 %v592
    %v1850 = vunpack.c.l.b16 %v593
    %v1851 = vunpack.c.l.b16 %v594
    %v1852 = vunpack.c.l.b16 %v595
    %v1853 = vunpack.c.l.b16 %v596
    %v1854 = vunpack.c.l.b16 %v597
    %v1855 = vunpack.c.l.b16 %v598
    %v1856 = vunpack.c.l.b16 %v599
    %v1857 = vunpack.c.l.b16 %v600
    %v1858 = vunpack.c.l.b16 %v601
    %v1859 = vunpack.c.l.b16 %v602
    %v1860 = vunpack.c.l.b16 %v603
    %v1861 = vunpack.c.l.b16 %v604
    %v1862 = vunpack.c.l.b16 %v605
    %v1863 = vunpack.c.l.b16 %v606
    %v1864 = vunpack.c.l.b16 %v607
    %v1865 = vunpack.c.l.b16 %v608
    %v1866 = vunpack.c.l.b16 %v609
    %v1867 = vunpack.c.l.b16 %v610
    %v1868 = vunpack.c.l.b16 %v611
    %v1869 = vunpack.c.l.b16 %v612
    %v1870 = vunpack.c.l.b16 %v613
    %v1871 = vunpack.c.l.b16 %v614
    %v1872 = vunpack.c.l.b16 %v615
    %v1873 = vunpack.c.l.b16 %v616
    %v1874 = vunpack.c.l.b16 %v617
    %v1875 = vunpack.c.l.b16 %v618
    %v1876 = vunpack.c.l.b16 %v619
    %v1877 = vunpack.c.l.b16 %v620
    %v1878 = vunpack.c.l.b16 %v621
    %v1879 = vunpack.c.l.b16 %v622
    %v1880 = vunpack.c.l.b16 %v623
    %v1881 = vunpack.c.l.b16 %v624
    %v1882 = vunpack.c.l.b16 %v625
    %v1883 = vunpack.c.l.b16 %v626
    %v1884 = vunpack.c.l.b16 %v627
    %v1885 = vunpack.c.l.b16 %v628
    %v1886 = vunpack.c.l.b16 %v629
    %v1887 = vunpack.c.l.b16 %v630
    %v1888 = vunpack.c.l.b16 %v631
    %v1889 = vunpack.c.l.b16 %v632
    %v1890 = vunpack.c.l.b16 %v633
    %v1891 = vunpack.c.l.b16 %v634
    %v1892 = vunpack.c.l.b16 %v635
    %v1893 = vunpack.c.l.b16 %v636
    %v1894 = vunpack.c.l.b16 %v637
    %v1895 = vunpack.c.l.b16 %v638
    %v1896 = vunpack.c.l.b16 %v639
    %v1897 = vunpack.c.l.b16 %v640
    %v1898 = vunpack.c.l.b16 %v641
    %v1899 = vunpack.c.l.b16 %v642
    %v1900 = vunpack.c.l.b16 %v643
    %v1901 = vunpack.c.l.b16 %v644
    %v1902 = vunpack.c.l.b16 %v645
    %v1903 = vunpack.c.l.b16 %v646
    %v1904 = vunpack.c.l.b16 %v647
    %v1905 = vunpack.c.l.b16 %v648
    %v1906 = vunpack.c.l.b16 %v649
    %v1907 = vunpack.c.l.b16 %v650
    %v1908 = vunpack.c.l.b16 %v651
    %v1909 = vunpack.c.l.b16 %v652
    %v1910 = vunpack.c.l.b16 %v653
    %v1911 = vunpack.c.l.b16 %v654
    %v1912 = vunpack.c.l.b16 %v655
    %v1913 = vunpack.c.l.b16 %v656
    %v1914 = vunpack.c.l.b16 %v657
    %v1915 = vunpack.c.l.b16 %v658
    %v1916 = vunpack.c.l.b16 %v659
    %v1917 = vunpack.c.l.b16 %v660
    %v1918 = vunpack.c.l.b16 %v661
    %v1919 = vunpack.c.l.b16 %v662
    %v1920 = vunpack.c.l.b16 %v663
    %v1921 = vunpack.c.l.b16 %v664
    %v1922 = vunpack.c.l.b16 %v665
    %v1923 = vunpack.c.l.b16 %v666
    %v1924 = vunpack.c.l.b16 %v667
    %v1925 = vunpack.c.l.b16 %v668
    %v1926 = vunpack.c.l.b16 %v669
    %v1927 = vunpack.c.l.b16 %v670
    %v1928 = vunpack.c.l.b16 %v671
    %v1929 = vunpack.c.l.b16 %v672
    %v1930 = vunpack.c.l.b16 %v673
    %v1931 = vunpack.c.l.b16 %v674
    %v1932 = vunpack.c.l.b16 %v675
    %v1933 = vunpack.c.l.b16 %v676
    %v1934 = vunpack.c.l.b16 %v677
    %v1935 = vunpack.c.l.b16 %v678
    %v1936 = vunpack.c.l.b16 %v679
    %v1937 = vunpack.c.l.b16 %v680
    %v1938 = vunpack.c.l.b16 %v681
    %v1939 = vunpack.c.l.b16 %v682
    %v1940 = vunpack.c.l.b16 %v683
    %v1941 = vunpack.c.l.b16 %v684
    %v1942 = vunpack.c.l.b16 %v685
    %v1943 = vunpack.c.l.b16 %v686
    %v1944 = vunpack.c.l.b16 %v687
    %v1945 = vunpack.c.l.b16 %v688
    %v1946 = vunpack.c.l.b16 %v689
    %v1947 = vunpack.c.l.b16 %v690
    %v1948 = vunpack.c.l.b16 %v691
    %v1949 = vunpack.c.l.b16 %v692
    %v1950 = vunpack.c.l.b16 %v693
    %v1951 = vunpack.c.l.b16 %v694
    %v1952 = vunpack.c.l.b16 %v695
    %v1953 = vunpack.c.l.b16 %v696
    %v1954 = vunpack.c.l.b16 %v697
    %v1955 = vunpack.c.l.b16 %v698
    %v1956 = vunpack.c.l.b16 %v699
    %v1957 = vunpack.c.l.b16 %v700
    %v1958 = vunpack.c.l.b16 %v701
    %v1959 = vunpack.c.l.b16 %v702
    %v1960 = vunpack.c.l.b16 %v703
    %v1961 = vunpack.c.l.b16 %v704
    %v1962 = vunpack.c.l.b16 %v705
    %v1963 = vunpack.c.l.b16 %v706
    %v1964 = vunpack.c.l.b16 %v707
    %v1965 = vunpack.c.l.b16 %v708
    %v1966 = vunpack.c.l.b16 %v709
    %v1967 = vunpack.c.l.b16 %v710
    %v1968 = vunpack.c.l.b16 %v711
    %v1969 = vunpack.c.l.b16 %v712
    %v1970 = vunpack.c.l.b16 %v713
    %v1971 = vunpack.c.l.b16 %v714
    %v1972 = vunpack.c.l.b16 %v715
    %v1973 = vunpack.c.l.b16 %v716
    %v1974 = vunpack.c.l.b16 %v717
    %v1975 = vunpack.c.l.b16 %v718
    %v1976 = vunpack.c.l.b16 %v719
    %v1977 = vunpack.c.l.b16 %v720
    %v1978 = vunpack.c.l.b16 %v721
    %v1979 = vunpack.c.l.b16 %v722
    %v1980 = vunpack.c.l.b16 %v723
    %v1981 = vunpack.c.l.b16 %v724
    %v1982 = vunpack.c.l.b16 %v725
    %v1983 = vunpack.c.l.b16 %v726
    %v1984 = vunpack.c.l.b16 %v727
    %v1985 = vunpack.c.l.b16 %v728
    %v1986 = vunpack.c.l.b16 %v729
    %v1987 = vunpack.c.l.b16 %v730
    %v1988 = vunpack.c.l.b16 %v731
    %v1989 = vunpack.c.l.b16 %v732
    %v1990 = vunpack.c.l.b16 %v733
    %v1991 = vunpack.c.l.b16 %v734
    %v1992 = vunpack.c.l.b16 %v735
    %v1993 = vunpack.c.l.b16 %v736
    %v1994 = vunpack.c.l.b16 %v737
    %v1995 = vunpack.c.l.b16 %v738
    %v1996 = vunpack.c.l.b16 %v739
    %v1997 = vunpack.c.l.b16 %v740
    %v1998 = vunpack.c.l.b16 %v741
    %v1999 = vunpack.c.l.b16 %v742
    %v2000 = vunpack.c.l.b16 %v743
    %v2001 = vunpack.c.l.b16 %v744
    %v2002 = vunpack.c.l.b16 %v745
    %v2003 = vunpack.c.l.b16 %v746
    %v2004 = vunpack.c.l.b16 %v747
    %v2005 = vunpack.c.l.b16 %v748
    %v2006 = vunpack.c.l.b16 %v749
    %v2007 = vunpack.c.l.b16 %v750
    %v2008 = vunpack.c.l.b16 %v751
    %v2009 = vunpack.c.l.b16 %v752
    %v2010 = vunpack.c.l.b16 %v753
    %v2011 = vunpack.c.l.b16 %v754
    %v2012 = vunpack.c.l.b16 %v755
    %v2013 = vunpack.c.l.b16 %v756
    %v2014 = vunpack.c.l.b16 %v757
    %v2015 = vunpack.c.l.b16 %v758
    %v2016 = vunpack.c.l.b16 %v759
    %v2017 = vunpack.c.l.b16 %v760
    %v2018 = vunpack.c.l.b16 %v761
    %v2019 = vunpack.c.l.b16 %v762
    %v2020 = vunpack.c.l.b16 %v763
    %v2021 = vunpack.c.l.b16 %v764
    %v2022 = vunpack.c.l.b16 %v765
    %v2023 = vunpack.c.l.b16 %v766
    %v2024 = vunpack.c.l.b16 %v767
    %v2025 = vunpack.c.l.b16 %v768
    %v2026 = vunpack.c.l.b16 %v769
    %v2027 = vunpack.c.l.b16 %v770
    %v2028 = vunpack.c.l.b16 %v771
    %v2029 = vunpack.c.l.b16 %v772
    %v2030 = vunpack.c.l.b16 %v773
    %v2031 = vunpack.c.l.b16 %v774
    %v2032 = vunpack.c.l.b16 %v775
    %v2033 = vunpack.c.l.b16 %v776
    %v2034 = vunpack.c.l.b16 %v777
    %v2035 = vunpack.c.l.b16 %v778
    %v2036 = vunpack.c.l.b16 %v779
    %v2037 = vunpack.c.l.b16 %v780
    %v2038 = vunpack.c.l.b16 %v781
    %v2039 = vunpack.c.l.b16 %v782
    %v2040 = vunpack.c.l.b16 %v783
    %v2041 = vunpack.c.l.b16 %v784
    %v2042 = vunpack.c.l.b16 %v785
    %v2043 = vunpack.c.l.b16 %v786
    %v2044 = vunpack.c.l.b16 %v787
    %v2045 = vunpack.c.l.b16 %v788
    %v2046 = vunpack.c.l.b16 %v789
    %v2047 = vunpack.c.l.b16 %v790
    %v2048 = vunpack.c.l.b16 %v791
    %v2049 = vpack.c.b16 %v1425, %v1424
    %v2050 = vpack.c.b16 %v1427, %v1426
    %v2051 = vpack.c.b16 %v1429, %v1428
    %v2052 = vpack.c.b16 %v1431, %v1430
    %v2053 = vpack.c.b16 %v1433, %v1432
    %v2054 = vpack.c.b16 %v1435, %v1434
    %v2055 = vpack.c.b16 %v1437, %v1436
    %v2056 = vpack.c.b16 %v1439, %v1438
    %v2057 = vpack.c.b16 %v1441, %v1440
    %v2058 = vpack.c.b16 %v1443, %v1442
    %v2059 = vpack.c.b16 %v1445, %v1444
    %v2060 = vpack.c.b16 %v1447, %v1446
    %v2061 = vpack.c.b16 %v1449, %v1448
    %v2062 = vpack.c.b16 %v1451, %v1450
    %v2063 = vpack.c.b16 %v1453, %v1452
    %v2064 = vpack.c.b16 %v1455, %v1454
    %v2065 = vpack.c.b16 %v1457, %v1456
    %v2066 = vpack.c.b16 %v1459, %v1458
    %v2067 = vpack.c.b16 %v1461, %v1460
    %v2068 = vpack.c.b16 %v1463, %v1462
    %v2069 = vpack.c.b16 %v1465, %v1464
    %v2070 = vpack.c.b16 %v1467, %v1466
    %v2071 = vpack.c.b16 %v1469, %v1468
    %v2072 = vpack.c.b16 %v1471, %v1470
    %v2073 = vpack.c.b16 %v1473, %v1472
    %v2074 = vpack.c.b16 %v1475, %v1474
    %v2075 = vpack.c.b16 %v1477, %v1476
    %v2076 = vpack.c.b16 %v1479, %v1478
    %v2077 = vpack.c.b16 %v1481, %v1480
    %v2078 = vpack.c.b16 %v1483, %v1482
    %v2079 = vpack.c.b16 %v1485, %v1484
    %v2080 = vpack.c.b16 %v1487, %v1486
    %v2081 = vpack.c.b16 %v1489, %v1488
    %v2082 = vpack.c.b16 %v1491, %v1490
    %v2083 = vpack.c.b16 %v1493, %v1492
    %v2084 = vpack.c.b16 %v1495, %v1494
    %v2085 = vpack.c.b16 %v1497, %v1496
    %v2086 = vpack.c.b16 %v1499, %v1498
    %v2087 = vpack.c.b16 %v1501, %v1500
    %v2088 = vpack.c.b16 %v1503, %v1502
    %v2089 = vpack.c.b16 %v1505, %v1504
    %v2090 = vpack.c.b16 %v1507, %v1506
    %v2091 = vpack.c.b16 %v1509, %v1508
    %v2092 = vpack.c.b16 %v1511, %v1510
    %v2093 = vpack.c.b16 %v1513, %v1512
    %v2094 = vpack.c.b16 %v1515, %v1514
    %v2095 = vpack.c.b16 %v1517, %v1516
    %v2096 = vpack.c.b16 %v1519, %v1518
    %v2097 = vpack.c.b16 %v1521, %v1520
    %v2098 = vpack.c.b16 %v1523, %v1522
    %v2099 = vpack.c.b16 %v1525, %v1524
    %v2100 = vpack.c.b16 %v1527, %v1526
    %v2101 = vpack.c.b16 %v1529, %v1528
    %v2102 = vpack.c.b16 %v1531, %v1530
    %v2103 = vpack.c.b16 %v1533, %v1532
    %v2104 = vpack.c.b16 %v1535, %v1534
    %v2105 = vpack.c.b16 %v1537, %v1536
    %v2106 = vpack.c.b16 %v1539, %v1538
    %v2107 = vpack.c.b16 %v1541, %v1540
    %v2108 = vpack.c.b16 %v1543, %v1542
    %v2109 = vpack.c.b16 %v1545, %v1544
    %v2110 = vpack.c.b16 %v1547, %v1546
    %v2111 = vpack.c.b16 %v1549, %v1548
    %v2112 = vpack.c.b16 %v1551, %v1550
    %v2113 = vpack.c.b16 %v1553, %v1552
    %v2114 = vpack.c.b16 %v1555, %v1554
    %v2115 = vpack.c.b16 %v1557, %v1556
    %v2116 = vpack.c.b16 %v1559, %v1558
    %v2117 = vpack.c.b16 %v1561, %v1560
    %v2118 = vpack.c.b16 %v1563, %v1562
    %v2119 = vpack.c.b16 %v1565, %v1564
    %v2120 = vpack.c.b16 %v1567, %v1566
    %v2121 = vpack.c.b16 %v1569, %v1568
    %v2122 = vpack.c.b16 %v1571, %v1570
    %v2123 = vpack.c.b16 %v1573, %v1572
    %v2124 = vpack.c.b16 %v1575, %v1574
    %v2125 = vpack.c.b16 %v1577, %v1576
    %v2126 = vpack.c.b16 %v1579, %v1578
    %v2127 = vpack.c.b16 %v1581, %v1580
    %v2128 = vpack.c.b16 %v1583, %v1582
    %v2129 = vpack.c.b16 %v1585, %v1584
    %v2130 = vpack.c.b16 %v1587, %v1586
    %v2131 = vpack.c.b16 %v1589, %v1588
    %v2132 = vpack.c.b16 %v1591, %v1590
    %v2133 = vpack.c.b16 %v1593, %v1592
    %v2134 = vpack.c.b16 %v1595, %v1594
    %v2135 = vpack.c.b16 %v1597, %v1596
    %v2136 = vpack.c.b16 %v1599, %v1598
    %v2137 = vpack.c.b16 %v1601, %v1600
    %v2138 = vpack.c.b16 %v1603, %v1602
    %v2139 = vpack.c.b16 %v1605, %v1604
    %v2140 = vpack.c.b16 %v1607, %v1606
    %v2141 = vpack.c.b16 %v1609, %v1608
    %v2142 = vpack.c.b16 %v1611, %v1610
    %v2143 = vpack.c.b16 %v1613, %v1612
    %v2144 = vpack.c.b16 %v1615, %v1614
    %v2145 = vpack.c.b16 %v1617, %v1616
    %v2146 = vpack.c.b16 %v1619, %v1618
    %v2147 = vpack.c.b16 %v1621, %v1620
    %v2148 = vpack.c.b16 %v1623, %v1622
    %v2149 = vpack.c.b16 %v1625, %v1624
    %v2150 = vpack.c.b16 %v1627, %v1626
    %v2151 = vpack.c.b16 %v1629, %v1628
    %v2152 = vpack.c.b16 %v1631, %v1630
    %v2153 = vpack.c.b16 %v1633, %v1632
    %v2154 = vpack.c.b16 %v1635, %v1634
    %v2155 = vpack.c.b16 %v1637, %v1636
    %v2156 = vpack.c.b16 %v1639, %v1638
    %v2157 = vpack.c.b16 %v1641, %v1640
    %v2158 = vpack.c.b16 %v1643, %v1642
    %v2159 = vpack.c.b16 %v1645, %v1644
    %v2160 = vpack.c.b16 %v1647, %v1646
    %v2161 = vpack.c.b16 %v1649, %v1648
    %v2162 = vpack.c.b16 %v1651, %v1650
    %v2163 = vpack.c.b16 %v1653, %v1652
    %v2164 = vpack.c.b16 %v1655, %v1654
    %v2165 = vpack.c.b16 %v1657, %v1656
    %v2166 = vpack.c.b16 %v1659, %v1658
    %v2167 = vpack.c.b16 %v1661, %v1660
    %v2168 = vpack.c.b16 %v1663, %v1662
    %v2169 = vpack.c.b16 %v1665, %v1664
    %v2170 = vpack.c.b16 %v1667, %v1666
    %v2171 = vpack.c.b16 %v1669, %v1668
    %v2172 = vpack.c.b16 %v1671, %v1670
    %v2173 = vpack.c.b16 %v1673, %v1672
    %v2174 = vpack.c.b16 %v1675, %v1674
    %v2175 = vpack.c.b16 %v1677, %v1676
    %v2176 = vpack.c.b16 %v1679, %v1678
    %v2177 = vpack.c.b16 %v1681, %v1680
    %v2178 = vpack.c.b16 %v1683, %v1682
    %v2179 = vpack.c.b16 %v1685, %v1684
    %v2180 = vpack.c.b16 %v1687, %v1686
    %v2181 = vpack.c.b16 %v1689, %v1688
    %v2182 = vpack.c.b16 %v1691, %v1690
    %v2183 = vpack.c.b16 %v1693, %v1692
    %v2184 = vpack.c.b16 %v1695, %v1694
    %v2185 = vpack.c.b16 %v1697, %v1696
    %v2186 = vpack.c.b16 %v1699, %v1698
    %v2187 = vpack.c.b16 %v1701, %v1700
    %v2188 = vpack.c.b16 %v1703, %v1702
    %v2189 = vpack.c.b16 %v1705, %v1704
    %v2190 = vpack.c.b16 %v1707, %v1706
    %v2191 = vpack.c.b16 %v1709, %v1708
    %v2192 = vpack.c.b16 %v1711, %v1710
    %v2193 = vpack.c.b16 %v1713, %v1712
    %v2194 = vpack.c.b16 %v1715, %v1714
    %v2195 = vpack.c.b16 %v1717, %v1716
    %v2196 = vpack.c.b16 %v1719, %v1718
    %v2197 = vpack.c.b16 %v1721, %v1720
    %v2198 = vpack.c.b16 %v1723, %v1722
    %v2199 = vpack.c.b16 %v1725, %v1724
    %v2200 = vpack.c.b16 %v1727, %v1726
    %v2201 = vpack.c.b16 %v1729, %v1728
    %v2202 = vpack.c.b16 %v1731, %v1730
    %v2203 = vpack.c.b16 %v1733, %v1732
    %v2204 = vpack.c.b16 %v1735, %v1734
    %v2205 = vpack.c.b16 %v1737, %v1736
    %v2206 = vpack.c.b16 %v1739, %v1738
    %v2207 = vpack.c.b16 %v1741, %v1740
    %v2208 = vpack.c.b16 %v1743, %v1742
    %v2209 = vpack.c.b16 %v1745, %v1744
    %v2210 = vpack.c.b16 %v1747, %v1746
    %v2211 = vpack.c.b16 %v1749, %v1748
    %v2212 = vpack.c.b16 %v1751, %v1750
    %v2213 = vpack.c.b16 %v1753, %v1752
    %v2214 = vpack.c.b16 %v1755, %v1754
    %v2215 = vpack.c.b16 %v1757, %v1756
    %v2216 = vpack.c.b16 %v1759, %v1758
    %v2217 = vpack.c.b16 %v1761, %v1760
    %v2218 = vpack.c.b16 %v1763, %v1762
    %v2219 = vpack.c.b16 %v1765, %v1764
    %v2220 = vpack.c.b16 %v1767, %v1766
    %v2221 = vpack.c.b16 %v1769, %v1768
    %v2222 = vpack.c.b16 %v1771, %v1770
    %v2223 = vpack.c.b16 %v1773, %v1772
    %v2224 = vpack.c.b16 %v1775, %v1774
    %v2225 = vpack.c.b16 %v1777, %v1776
    %v2226 = vpack.c.b16 %v1779, %v1778
    %v2227 = vpack.c.b16 %v1781, %v1780
    %v2228 = vpack.c.b16 %v1783, %v1782
    %v2229 = vpack.c.b16 %v1785, %v1784
    %v2230 = vpack.c.b16 %v1787, %v1786
    %v2231 = vpack.c.b16 %v1789, %v1788
    %v2232 = vpack.c.b16 %v1791, %v1790
    %v2233 = vpack.c.b16 %v1793, %v1792
    %v2234 = vpack.c.b16 %v1795, %v1794
    %v2235 = vpack.c.b16 %v1797, %v1796
    %v2236 = vpack.c.b16 %v1799, %v1798
    %v2237 = vpack.c.b16 %v1801, %v1800
    %v2238 = vpack.c.b16 %v1803, %v1802
    %v2239 = vpack.c.b16 %v1805, %v1804
    %v2240 = vpack.c.b16 %v1807, %v1806
    %v2241 = vpack.c.b16 %v1809, %v1808
    %v2242 = vpack.c.b16 %v1811, %v1810
    %v2243 = vpack.c.b16 %v1813, %v1812
    %v2244 = vpack.c.b16 %v1815, %v1814
    %v2245 = vpack.c.b16 %v1817, %v1816
    %v2246 = vpack.c.b16 %v1819, %v1818
    %v2247 = vpack.c.b16 %v1821, %v1820
    %v2248 = vpack.c.b16 %v1823, %v1822
    %v2249 = vpack.c.b16 %v1825, %v1824
    %v2250 = vpack.c.b16 %v1827, %v1826
    %v2251 = vpack.c.b16 %v1829, %v1828
    %v2252 = vpack.c.b16 %v1831, %v1830
    %v2253 = vpack.c.b16 %v1833, %v1832
    %v2254 = vpack.c.b16 %v1835, %v1834
    %v2255 = vpack.c.b16 %v1837, %v1836
    %v2256 = vpack.c.b16 %v1839, %v1838
    %v2257 = vpack.c.b16 %v1841, %v1840
    %v2258 = vpack.c.b16 %v1843, %v1842
    %v2259 = vpack.c.b16 %v1845, %v1844
    %v2260 = vpack.c.b16 %v1847, %v1846
    %v2261 = vpack.c.b16 %v1849, %v1848
    %v2262 = vpack.c.b16 %v1851, %v1850
    %v2263 = vpack.c.b16 %v1853, %v1852
    %v2264 = vpack.c.b16 %v1855, %v1854
    %v2265 = vpack.c.b16 %v1857, %v1856
    %v2266 = vpack.c.b16 %v1859, %v1858
    %v2267 = vpack.c.b16 %v1861, %v1860
    %v2268 = vpack.c.b16 %v1863, %v1862
    %v2269 = vpack.c.b16 %v1865, %v1864
    %v2270 = vpack.c.b16 %v1867, %v1866
    %v2271 = vpack.c.b16 %v1869, %v1868
    %v2272 = vpack.c.b16 %v1871, %v1870
    %v2273 = vpack.c.b16 %v1873, %v1872
    %v2274 = vpack.c.b16 %v1875, %v1874
    %v2275 = vpack.c.b16 %v1877, %v1876
    %v2276 = vpack.c.b16 %v1879, %v1878
    %v2277 = vpack.c.b16 %v1881, %v1880
    %v2278 = vpack.c.b16 %v1883, %v1882
    %v2279 = vpack.c.b16 %v1885, %v1884
    %v2280 = vpack.c.b16 %v1887, %v1886
    %v2281 = vpack.c.b16 %v1889, %v1888
    %v2282 = vpack.c.b16 %v1891, %v1890
    %v2283 = vpack.c.b16 %v1893, %v1892
    %v2284 = vpack.c.b16 %v1895, %v1894
    %v2285 = vpack.c.b16 %v1897, %v1896
    %v2286 = vpack.c.b16 %v1899, %v1898
    %v2287 = vpack.c.b16 %v1901, %v1900
    %v2288 = vpack.c.b16 %v1903, %v1902
    %v2289 = vpack.c.b16 %v1905, %v1904
    %v2290 = vpack.c.b16 %v1907, %v1906
    %v2291 = vpack.c.b16 %v1909, %v1908
    %v2292 = vpack.c.b16 %v1911, %v1910
    %v2293 = vpack.c.b16 %v1913, %v1912
    %v2294 = vpack.c.b16 %v1915, %v1914
    %v2295 = vpack.c.b16 %v1917, %v1916
    %v2296 = vpack.c.b16 %v1919, %v1918
    %v2297 = vpack.c.b16 %v1921, %v1920
    %v2298 = vpack.c.b16 %v1923, %v1922
    %v2299 = vpack.c.b16 %v1925, %v1924
    %v2300 = vpack.c.b16 %v1927, %v1926
    %v2301 = vpack.c.b16 %v1929, %v1928
    %v2302 = vpack.c.b16 %v1931, %v1930
    %v2303 = vpack.c.b16 %v1933, %v1932
    %v2304 = vpack.c.b16 %v1935, %v1934
    %v2305 = vpack.c.b16 %v1937, %v1936
    %v2306 = vpack.c.b16 %v1939, %v1938
    %v2307 = vpack.c.b16 %v1941, %v1940
    %v2308 = vpack.c.b16 %v1943, %v1942
    %v2309 = vpack.c.b16 %v1945, %v1944
    %v2310 = vpack.c.b16 %v1947, %v1946
    %v2311 = vpack.c.b16 %v1949, %v1948
    %v2312 = vpack.c.b16 %v1951, %v1950
    %v2313 = vpack.c.b16 %v1953, %v1952
    %v2314 = vpack.c.b16 %v1955, %v1954
    %v2315 = vpack.c.b16 %v1957, %v1956
    %v2316 = vpack.c.b16 %v1959, %v1958
    %v2317 = vpack.c.b16 %v1961, %v1960
    %v2318 = vpack.c.b16 %v1963, %v1962
    %v2319 = vpack.c.b16 %v1965, %v1964
    %v2320 = vpack.c.b16 %v1967, %v1966
    %v2321 = vpack.c.b16 %v1969, %v1968
    %v2322 = vpack.c.b16 %v1971, %v1970
    %v2323 = vpack.c.b16 %v1973, %v1972
    %v2324 = vpack.c.b16 %v1975, %v1974
    %v2325 = vpack.c.b16 %v1977, %v1976
    %v2326 = vpack.c.b16 %v1979, %v1978
    %v2327 = vpack.c.b16 %v1981, %v1980
    %v2328 = vpack.c.b16 %v1983, %v1982
    %v2329 = vpack.c.b16 %v1985, %v1984
    %v2330 = vpack.c.b16 %v1987, %v1986
    %v2331 = vpack.c.b16 %v1989, %v1988
    %v2332 = vpack.c.b16 %v1991, %v1990
    %v2333 = vpack.c.b16 %v1993, %v1992
    %v2334 = vpack.c.b16 %v1995, %v1994
    %v2335 = vpack.c.b16 %v1997, %v1996
    %v2336 = vpack.c.b16 %v1999, %v1998
    %v2337 = vpack.c.b16 %v2001, %v2000
    %v2338 = vpack.c.b16 %v2003, %v2002
    %v2339 = vpack.c.b16 %v2005, %v2004
    %v2340 = vpack.c.b16 %v2007, %v2006
    %v2341 = vpack.c.b16 %v2009, %v2008
    %v2342 = vpack.c.b16 %v2011, %v2010
    %v2343 = vpack.c.b16 %v2013, %v2012
    %v2344 = vpack.c.b16 %v2015, %v2014
    %v2345 = vpack.c.b16 %v2017, %v2016
    %v2346 = vpack.c.b16 %v2019, %v2018
    %v2347 = vpack.c.b16 %v2021, %v2020
    %v2348 = vpack.c.b16 %v2023, %v2022
    %v2349 = vpack.c.b16 %v2025, %v2024
    %v2350 = vpack.c.b16 %v2027, %v2026
    %v2351 = vpack.c.b16 %v2029, %v2028
    %v2352 = vpack.c.b16 %v2031, %v2030
    %v2353 = vpack.c.b16 %v2033, %v2032
    %v2354 = vpack.c.b16 %v2035, %v2034
    %v2355 = vpack.c.b16 %v2037, %v2036
    %v2356 = vpack.c.b16 %v2039, %v2038
    %v2357 = vpack.c.b16 %v2041, %v2040
    %v2358 = vpack.c.b16 %v2043, %v2042
    %v2359 = vpack.c.b16 %v2045, %v2044
    %v2360 = vpack.c.b16 %v2047, %v2046
    %v2361 = vpack.c.b16 %v2048, %v2048
    %vm2674 = vcmask 64512
    %v2676 = vsel %vm2674, %v166, 0
    %vm2678 = vcmask 1043456
    %v2680 = vsel %vm2678, %v2361, 0
    %2682 = vmatprep.subr.bf16.mxu0 0
    %2683 = vmatpush1.bf16.msra.mxu0 %v2049
    %2684 = vmatprep.subr.bf16.mxu0 0
    %2685 = vmatpush1.bf16.msra.mxu0 %v2050
    %2686 = vmatprep.subr.bf16.mxu0 0
    %2687 = vmatpush1.bf16.msra.mxu0 %v2051
    %2688 = vmatprep.subr.bf16.mxu0 0
    %2689 = vmatpush1.bf16.msra.mxu0 %v2052
    %2690 = vmatprep.subr.bf16.mxu0 0
    %2691 = vmatpush1.bf16.msra.mxu0 %v2053
    %2692 = vmatprep.subr.bf16.mxu0 0
    %2693 = vmatpush1.bf16.msra.mxu0 %v2054
    %2694 = vmatprep.subr.bf16.mxu0 0
    %2695 = vmatpush1.bf16.msra.mxu0 %v2055
    %2696 = vmatprep.subr.bf16.mxu0 0
    %2697 = vmatpush1.bf16.msra.mxu0 %v2056
    %2698 = vmatprep.subr.bf16.mxu0 0
    %2699 = vmatpush1.bf16.msra.mxu0 %v2057
    %2700 = vmatprep.subr.bf16.mxu0 0
    %2701 = vmatpush1.bf16.msra.mxu0 %v2058
    %2702 = vmatprep.subr.bf16.mxu0 0
    %2703 = vmatpush1.bf16.msra.mxu0 %v2059
    %2704 = vmatprep.subr.bf16.mxu0 0
    %2705 = vmatpush1.bf16.msra.mxu0 %v2060
    %2706 = vmatprep.subr.bf16.mxu0 0
    %2707 = vmatpush1.bf16.msra.mxu0 %v2061
    %2708 = vmatprep.subr.bf16.mxu0 0
    %2709 = vmatpush1.bf16.msra.mxu0 %v2062
    %2710 = vmatprep.subr.bf16.mxu0 0
    %2711 = vmatpush1.bf16.msra.mxu0 %v2063
    %2712 = vmatprep.subr.bf16.mxu0 0
    %2713 = vmatpush1.bf16.msra.mxu0 %v2064
    %2714 = vmatprep.mubr.bf16.mxu0 %v128
    %2715 = vmatmul.mubr.bf16.gmra.mrb[0].mxu0 %v127
    %v2716 = vpop.f32.mrb[0].mxu0
    %v2717 = vadd.f32 %v797, %v2716
    %v2718 = vpop.f32.mrb[0].mxu0
    %v2719 = vpop.f32.mrb[0].mxu0
    %v2720 = vpop.f32.mrb[0].mxu0
    %2721 = vdwg.mxu0
    %2722 = vmatprep.subr.bf16.mxu0 0
    %2723 = vmatpush1.bf16.msra.mxu0 %v2065
    %2724 = vmatprep.subr.bf16.mxu0 0
    %2725 = vmatpush1.bf16.msra.mxu0 %v2066
    %2726 = vmatprep.subr.bf16.mxu0 0
    %2727 = vmatpush1.bf16.msra.mxu0 %v2067
    %2728 = vmatprep.subr.bf16.mxu0 0
    %2729 = vmatpush1.bf16.msra.mxu0 %v2068
    %2730 = vmatprep.subr.bf16.mxu0 0
    %2731 = vmatpush1.bf16.msra.mxu0 %v2069
    %2732 = vmatprep.subr.bf16.mxu0 0
    %2733 = vmatpush1.bf16.msra.mxu0 %v2070
    %2734 = vmatprep.subr.bf16.mxu0 0
    %2735 = vmatpush1.bf16.msra.mxu0 %v2071
    %2736 = vmatprep.subr.bf16.mxu0 0
    %2737 = vmatpush1.bf16.msra.mxu0 %v2072
    %2738 = vmatprep.subr.bf16.mxu0 0
    %2739 = vmatpush1.bf16.msra.mxu0 %v2073
    %2740 = vmatprep.subr.bf16.mxu0 0
    %2741 = vmatpush1.bf16.msra.mxu0 %v2074
    %2742 = vmatprep.subr.bf16.mxu0 0
    %2743 = vmatpush1.bf16.msra.mxu0 %v2075
    %2744 = vmatprep.subr.bf16.mxu0 0
    %2745 = vmatpush1.bf16.msra.mxu0 %v2076
    %2746 = vmatprep.subr.bf16.mxu0 0
    %2747 = vmatpush1.bf16.msra.mxu0 %v2077
    %2748 = vmatprep.subr.bf16.mxu0 0
    %2749 = vmatpush1.bf16.msra.mxu0 %v2078
    %2750 = vmatprep.subr.bf16.mxu0 0
    %2751 = vmatpush1.bf16.msra.mxu0 %v2079
    %2752 = vmatprep.subr.bf16.mxu0 0
    %2753 = vmatpush1.bf16.msra.mxu0 %v2080
    %2754 = vmatprep.mubr.bf16.mxu0 %v130
    %2755 = vmatmul.mubr.bf16.gmra.mrb[0].mxu0 %v129
    %v2756 = vpop.f32.mrb[0].mxu0
    %v2757 = vadd.f32 %v2717, %v2756
    %v2758 = vpop.f32.mrb[0].mxu0
    %v2759 = vpop.f32.mrb[0].mxu0
    %v2760 = vpop.f32.mrb[0].mxu0
    %2761 = vdwg.mxu0
    %2762 = vmatprep.subr.bf16.mxu0 0
    %2763 = vmatpush1.bf16.msra.mxu0 %v2081
    %2764 = vmatprep.subr.bf16.mxu0 0
    %2765 = vmatpush1.bf16.msra.mxu0 %v2082
    %2766 = vmatprep.subr.bf16.mxu0 0
    %2767 = vmatpush1.bf16.msra.mxu0 %v2083
    %2768 = vmatprep.subr.bf16.mxu0 0
    %2769 = vmatpush1.bf16.msra.mxu0 %v2084
    %2770 = vmatprep.subr.bf16.mxu0 0
    %2771 = vmatpush1.bf16.msra.mxu0 %v2085
    %2772 = vmatprep.subr.bf16.mxu0 0
    %2773 = vmatpush1.bf16.msra.mxu0 %v2086
    %2774 = vmatprep.subr.bf16.mxu0 0
    %2775 = vmatpush1.bf16.msra.mxu0 %v2087
    %2776 = vmatprep.subr.bf16.mxu0 0
    %2777 = vmatpush1.bf16.msra.mxu0 %v2088
    %2778 = vmatprep.subr.bf16.mxu0 0
    %2779 = vmatpush1.bf16.msra.mxu0 %v2089
    %2780 = vmatprep.subr.bf16.mxu0 0
    %2781 = vmatpush1.bf16.msra.mxu0 %v2090
    %2782 = vmatprep.subr.bf16.mxu0 0
    %2783 = vmatpush1.bf16.msra.mxu0 %v2091
    %2784 = vmatprep.subr.bf16.mxu0 0
    %2785 = vmatpush1.bf16.msra.mxu0 %v2092
    %2786 = vmatprep.subr.bf16.mxu0 0
    %2787 = vmatpush1.bf16.msra.mxu0 %v2093
    %2788 = vmatprep.subr.bf16.mxu0 0
    %2789 = vmatpush1.bf16.msra.mxu0 %v2094
    %2790 = vmatprep.subr.bf16.mxu0 0
    %2791 = vmatpush1.bf16.msra.mxu0 %v2095
    %2792 = vmatprep.subr.bf16.mxu0 0
    %2793 = vmatpush1.bf16.msra.mxu0 %v2096
    %2794 = vmatprep.mubr.bf16.mxu0 %v132
    %2795 = vmatmul.mubr.bf16.gmra.mrb[0].mxu0 %v131
    %v2796 = vpop.f32.mrb[0].mxu0
    %v2797 = vadd.f32 %v2757, %v2796
    %v2798 = vpop.f32.mrb[0].mxu0
    %v2799 = vpop.f32.mrb[0].mxu0
    %v2800 = vpop.f32.mrb[0].mxu0
    %2801 = vdwg.mxu0
    %2802 = vmatprep.subr.bf16.mxu0 0
    %2803 = vmatpush1.bf16.msra.mxu0 %v2097
    %2804 = vmatprep.subr.bf16.mxu0 0
    %2805 = vmatpush1.bf16.msra.mxu0 %v2098
    %2806 = vmatprep.subr.bf16.mxu0 0
    %2807 = vmatpush1.bf16.msra.mxu0 %v2099
    %2808 = vmatprep.subr.bf16.mxu0 0
    %2809 = vmatpush1.bf16.msra.mxu0 %v2100
    %2810 = vmatprep.subr.bf16.mxu0 0
    %2811 = vmatpush1.bf16.msra.mxu0 %v2101
    %2812 = vmatprep.subr.bf16.mxu0 0
    %2813 = vmatpush1.bf16.msra.mxu0 %v2102
    %2814 = vmatprep.subr.bf16.mxu0 0
    %2815 = vmatpush1.bf16.msra.mxu0 %v2103
    %2816 = vmatprep.subr.bf16.mxu0 0
    %2817 = vmatpush1.bf16.msra.mxu0 %v2104
    %2818 = vmatprep.subr.bf16.mxu0 0
    %2819 = vmatpush1.bf16.msra.mxu0 %v2105
    %2820 = vmatprep.subr.bf16.mxu0 0
    %2821 = vmatpush1.bf16.msra.mxu0 %v2106
    %2822 = vmatprep.subr.bf16.mxu0 0
    %2823 = vmatpush1.bf16.msra.mxu0 %v2107
    %2824 = vmatprep.subr.bf16.mxu0 0
    %2825 = vmatpush1.bf16.msra.mxu0 %v2108
    %2826 = vmatprep.subr.bf16.mxu0 0
    %2827 = vmatpush1.bf16.msra.mxu0 %v2109
    %2828 = vmatprep.subr.bf16.mxu0 0
    %2829 = vmatpush1.bf16.msra.mxu0 %v2110
    %2830 = vmatprep.subr.bf16.mxu0 0
    %2831 = vmatpush1.bf16.msra.mxu0 %v2111
    %2832 = vmatprep.subr.bf16.mxu0 0
    %2833 = vmatpush1.bf16.msra.mxu0 %v2112
    %2834 = vmatprep.mubr.bf16.mxu0 %v134
    %2835 = vmatmul.mubr.bf16.gmra.mrb[0].mxu0 %v133
    %v2836 = vpop.f32.mrb[0].mxu0
    %v2837 = vadd.f32 %v2797, %v2836
    %v2838 = vpop.f32.mrb[0].mxu0
    %v2839 = vpop.f32.mrb[0].mxu0
    %v2840 = vpop.f32.mrb[0].mxu0
    %2841 = vdwg.mxu0
    %2842 = vmatprep.subr.bf16.mxu0 0
    %2843 = vmatpush1.bf16.msra.mxu0 %v2113
    %2844 = vmatprep.subr.bf16.mxu0 0
    %2845 = vmatpush1.bf16.msra.mxu0 %v2114
    %2846 = vmatprep.subr.bf16.mxu0 0
    %2847 = vmatpush1.bf16.msra.mxu0 %v2115
    %2848 = vmatprep.subr.bf16.mxu0 0
    %2849 = vmatpush1.bf16.msra.mxu0 %v2116
    %2850 = vmatprep.subr.bf16.mxu0 0
    %2851 = vmatpush1.bf16.msra.mxu0 %v2117
    %2852 = vmatprep.subr.bf16.mxu0 0
    %2853 = vmatpush1.bf16.msra.mxu0 %v2118
    %2854 = vmatprep.subr.bf16.mxu0 0
    %2855 = vmatpush1.bf16.msra.mxu0 %v2119
    %2856 = vmatprep.subr.bf16.mxu0 0
    %2857 = vmatpush1.bf16.msra.mxu0 %v2120
    %2858 = vmatprep.subr.bf16.mxu0 0
    %2859 = vmatpush1.bf16.msra.mxu0 %v2121
    %2860 = vmatprep.subr.bf16.mxu0 0
    %2861 = vmatpush1.bf16.msra.mxu0 %v2122
    %2862 = vmatprep.subr.bf16.mxu0 0
    %2863 = vmatpush1.bf16.msra.mxu0 %v2123
    %2864 = vmatprep.subr.bf16.mxu0 0
    %2865 = vmatpush1.bf16.msra.mxu0 %v2124
    %2866 = vmatprep.subr.bf16.mxu0 0
    %2867 = vmatpush1.bf16.msra.mxu0 %v2125
    %2868 = vmatprep.subr.bf16.mxu0 0
    %2869 = vmatpush1.bf16.msra.mxu0 %v2126
    %2870 = vmatprep.subr.bf16.mxu0 0
    %2871 = vmatpush1.bf16.msra.mxu0 %v2127
    %2872 = vmatprep.subr.bf16.mxu0 0
    %2873 = vmatpush1.bf16.msra.mxu0 %v2128
    %2874 = vmatprep.mubr.bf16.mxu0 %v136
    %2875 = vmatmul.mubr.bf16.gmra.mrb[0].mxu0 %v135
    %v2876 = vpop.f32.mrb[0].mxu0
    %v2877 = vadd.f32 %v2837, %v2876
    %v2878 = vpop.f32.mrb[0].mxu0
    %v2879 = vpop.f32.mrb[0].mxu0
    %v2880 = vpop.f32.mrb[0].mxu0
    %2881 = vdwg.mxu0
    %2882 = vmatprep.subr.bf16.mxu0 0
    %2883 = vmatpush1.bf16.msra.mxu0 %v2129
    %2884 = vmatprep.subr.bf16.mxu0 0
    %2885 = vmatpush1.bf16.msra.mxu0 %v2130
    %2886 = vmatprep.subr.bf16.mxu0 0
    %2887 = vmatpush1.bf16.msra.mxu0 %v2131
    %2888 = vmatprep.subr.bf16.mxu0 0
    %2889 = vmatpush1.bf16.msra.mxu0 %v2132
    %2890 = vmatprep.subr.bf16.mxu0 0
    %2891 = vmatpush1.bf16.msra.mxu0 %v2133
    %2892 = vmatprep.subr.bf16.mxu0 0
    %2893 = vmatpush1.bf16.msra.mxu0 %v2134
    %2894 = vmatprep.subr.bf16.mxu0 0
    %2895 = vmatpush1.bf16.msra.mxu0 %v2135
    %2896 = vmatprep.subr.bf16.mxu0 0
    %2897 = vmatpush1.bf16.msra.mxu0 %v2136
    %2898 = vmatprep.subr.bf16.mxu0 0
    %2899 = vmatpush1.bf16.msra.mxu0 %v2137
    %2900 = vmatprep.subr.bf16.mxu0 0
    %2901 = vmatpush1.bf16.msra.mxu0 %v2138
    %2902 = vmatprep.subr.bf16.mxu0 0
    %2903 = vmatpush1.bf16.msra.mxu0 %v2139
    %2904 = vmatprep.subr.bf16.mxu0 0
    %2905 = vmatpush1.bf16.msra.mxu0 %v2140
    %2906 = vmatprep.subr.bf16.mxu0 0
    %2907 = vmatpush1.bf16.msra.mxu0 %v2141
    %2908 = vmatprep.subr.bf16.mxu0 0
    %2909 = vmatpush1.bf16.msra.mxu0 %v2142
    %2910 = vmatprep.subr.bf16.mxu0 0
    %2911 = vmatpush1.bf16.msra.mxu0 %v2143
    %2912 = vmatprep.subr.bf16.mxu0 0
    %2913 = vmatpush1.bf16.msra.mxu0 %v2144
    %2914 = vmatprep.mubr.bf16.mxu0 %v138
    %2915 = vmatmul.mubr.bf16.gmra.mrb[0].mxu0 %v137
    %v2916 = vpop.f32.mrb[0].mxu0
    %v2917 = vadd.f32 %v2877, %v2916
    %v2918 = vpop.f32.mrb[0].mxu0
    %v2919 = vpop.f32.mrb[0].mxu0
    %v2920 = vpop.f32.mrb[0].mxu0
    %2921 = vdwg.mxu0
    %2922 = vmatprep.subr.bf16.mxu0 0
    %2923 = vmatpush1.bf16.msra.mxu0 %v2145
    %2924 = vmatprep.subr.bf16.mxu0 0
    %2925 = vmatpush1.bf16.msra.mxu0 %v2146
    %2926 = vmatprep.subr.bf16.mxu0 0
    %2927 = vmatpush1.bf16.msra.mxu0 %v2147
    %2928 = vmatprep.subr.bf16.mxu0 0
    %2929 = vmatpush1.bf16.msra.mxu0 %v2148
    %2930 = vmatprep.subr.bf16.mxu0 0
    %2931 = vmatpush1.bf16.msra.mxu0 %v2149
    %2932 = vmatprep.subr.bf16.mxu0 0
    %2933 = vmatpush1.bf16.msra.mxu0 %v2150
    %2934 = vmatprep.subr.bf16.mxu0 0
    %2935 = vmatpush1.bf16.msra.mxu0 %v2151
    %2936 = vmatprep.subr.bf16.mxu0 0
    %2937 = vmatpush1.bf16.msra.mxu0 %v2152
    %2938 = vmatprep.subr.bf16.mxu0 0
    %2939 = vmatpush1.bf16.msra.mxu0 %v2153
    %2940 = vmatprep.subr.bf16.mxu0 0
    %2941 = vmatpush1.bf16.msra.mxu0 %v2154
    %2942 = vmatprep.subr.bf16.mxu0 0
    %2943 = vmatpush1.bf16.msra.mxu0 %v2155
    %2944 = vmatprep.subr.bf16.mxu0 0
    %2945 = vmatpush1.bf16.msra.mxu0 %v2156
    %2946 = vmatprep.subr.bf16.mxu0 0
    %2947 = vmatpush1.bf16.msra.mxu0 %v2157
    %2948 = vmatprep.subr.bf16.mxu0 0
    %2949 = vmatpush1.bf16.msra.mxu0 %v2158
    %2950 = vmatprep.subr.bf16.mxu0 0
    %2951 = vmatpush1.bf16.msra.mxu0 %v2159
    %2952 = vmatprep.subr.bf16.mxu0 0
    %2953 = vmatpush1.bf16.msra.mxu0 %v2160
    %2954 = vmatprep.mubr.bf16.mxu0 %v140
    %2955 = vmatmul.mubr.bf16.gmra.mrb[0].mxu0 %v139
    %v2956 = vpop.f32.mrb[0].mxu0
    %v2957 = vadd.f32 %v2917, %v2956
    %v2958 = vpop.f32.mrb[0].mxu0
    %v2959 = vpop.f32.mrb[0].mxu0
    %v2960 = vpop.f32.mrb[0].mxu0
    %2961 = vdwg.mxu0
    %2962 = vmatprep.subr.bf16.mxu0 0
    %2963 = vmatpush1.bf16.msra.mxu0 %v2161
    %2964 = vmatprep.subr.bf16.mxu0 0
    %2965 = vmatpush1.bf16.msra.mxu0 %v2162
    %2966 = vmatprep.subr.bf16.mxu0 0
    %2967 = vmatpush1.bf16.msra.mxu0 %v2163
    %2968 = vmatprep.subr.bf16.mxu0 0
    %2969 = vmatpush1.bf16.msra.mxu0 %v2164
    %2970 = vmatprep.subr.bf16.mxu0 0
    %2971 = vmatpush1.bf16.msra.mxu0 %v2165
    %2972 = vmatprep.subr.bf16.mxu0 0
    %2973 = vmatpush1.bf16.msra.mxu0 %v2166
    %2974 = vmatprep.subr.bf16.mxu0 0
    %2975 = vmatpush1.bf16.msra.mxu0 %v2167
    %2976 = vmatprep.subr.bf16.mxu0 0
    %2977 = vmatpush1.bf16.msra.mxu0 %v2168
    %2978 = vmatprep.subr.bf16.mxu0 0
    %2979 = vmatpush1.bf16.msra.mxu0 %v2169
    %2980 = vmatprep.subr.bf16.mxu0 0
    %2981 = vmatpush1.bf16.msra.mxu0 %v2170
    %2982 = vmatprep.subr.bf16.mxu0 0
    %2983 = vmatpush1.bf16.msra.mxu0 %v2171
    %2984 = vmatprep.subr.bf16.mxu0 0
    %2985 = vmatpush1.bf16.msra.mxu0 %v2172
    %2986 = vmatprep.subr.bf16.mxu0 0
    %2987 = vmatpush1.bf16.msra.mxu0 %v2173
    %2988 = vmatprep.subr.bf16.mxu0 0
    %2989 = vmatpush1.bf16.msra.mxu0 %v2174
    %2990 = vmatprep.subr.bf16.mxu0 0
    %2991 = vmatpush1.bf16.msra.mxu0 %v2175
    %2992 = vmatprep.subr.bf16.mxu0 0
    %2993 = vmatpush1.bf16.msra.mxu0 %v2176
    %2994 = vmatprep.mubr.bf16.mxu0 %v142
    %2995 = vmatmul.mubr.bf16.gmra.mrb[0].mxu0 %v141
    %v2996 = vpop.f32.mrb[0].mxu0
    %v2997 = vadd.f32 %v2957, %v2996
    %v2998 = vpop.f32.mrb[0].mxu0
    %v2999 = vpop.f32.mrb[0].mxu0
    %v3000 = vpop.f32.mrb[0].mxu0
    %3001 = vdwg.mxu0
    %3002 = vmatprep.subr.bf16.mxu0 0
    %3003 = vmatpush1.bf16.msra.mxu0 %v2177
    %3004 = vmatprep.subr.bf16.mxu0 0
    %3005 = vmatpush1.bf16.msra.mxu0 %v2178
    %3006 = vmatprep.subr.bf16.mxu0 0
    %3007 = vmatpush1.bf16.msra.mxu0 %v2179
    %3008 = vmatprep.subr.bf16.mxu0 0
    %3009 = vmatpush1.bf16.msra.mxu0 %v2180
    %3010 = vmatprep.subr.bf16.mxu0 0
    %3011 = vmatpush1.bf16.msra.mxu0 %v2181
    %3012 = vmatprep.subr.bf16.mxu0 0
    %3013 = vmatpush1.bf16.msra.mxu0 %v2182
    %3014 = vmatprep.subr.bf16.mxu0 0
    %3015 = vmatpush1.bf16.msra.mxu0 %v2183
    %3016 = vmatprep.subr.bf16.mxu0 0
    %3017 = vmatpush1.bf16.msra.mxu0 %v2184
    %3018 = vmatprep.subr.bf16.mxu0 0
    %3019 = vmatpush1.bf16.msra.mxu0 %v2185
    %3020 = vmatprep.subr.bf16.mxu0 0
    %3021 = vmatpush1.bf16.msra.mxu0 %v2186
    %3022 = vmatprep.subr.bf16.mxu0 0
    %3023 = vmatpush1.bf16.msra.mxu0 %v2187
    %3024 = vmatprep.subr.bf16.mxu0 0
    %3025 = vmatpush1.bf16.msra.mxu0 %v2188
    %3026 = vmatprep.subr.bf16.mxu0 0
    %3027 = vmatpush1.bf16.msra.mxu0 %v2189
    %3028 = vmatprep.subr.bf16.mxu0 0
    %3029 = vmatpush1.bf16.msra.mxu0 %v2190
    %3030 = vmatprep.subr.bf16.mxu0 0
    %3031 = vmatpush1.bf16.msra.mxu0 %v2191
    %3032 = vmatprep.subr.bf16.mxu0 0
    %3033 = vmatpush1.bf16.msra.mxu0 %v2192
    %3034 = vmatprep.mubr.bf16.mxu0 %v144
    %3035 = vmatmul.mubr.bf16.gmra.mrb[0].mxu0 %v143
    %v3036 = vpop.f32.mrb[0].mxu0
    %v3037 = vadd.f32 %v2997, %v3036
    %v3038 = vpop.f32.mrb[0].mxu0
    %v3039 = vpop.f32.mrb[0].mxu0
    %v3040 = vpop.f32.mrb[0].mxu0
    %3041 = vdwg.mxu0
    %3042 = vmatprep.subr.bf16.mxu0 0
    %3043 = vmatpush1.bf16.msra.mxu0 %v2193
    %3044 = vmatprep.subr.bf16.mxu0 0
    %3045 = vmatpush1.bf16.msra.mxu0 %v2194
    %3046 = vmatprep.subr.bf16.mxu0 0
    %3047 = vmatpush1.bf16.msra.mxu0 %v2195
    %3048 = vmatprep.subr.bf16.mxu0 0
    %3049 = vmatpush1.bf16.msra.mxu0 %v2196
    %3050 = vmatprep.subr.bf16.mxu0 0
    %3051 = vmatpush1.bf16.msra.mxu0 %v2197
    %3052 = vmatprep.subr.bf16.mxu0 0
    %3053 = vmatpush1.bf16.msra.mxu0 %v2198
    %3054 = vmatprep.subr.bf16.mxu0 0
    %3055 = vmatpush1.bf16.msra.mxu0 %v2199
    %3056 = vmatprep.subr.bf16.mxu0 0
    %3057 = vmatpush1.bf16.msra.mxu0 %v2200
    %3058 = vmatprep.subr.bf16.mxu0 0
    %3059 = vmatpush1.bf16.msra.mxu0 %v2201
    %3060 = vmatprep.subr.bf16.mxu0 0
    %3061 = vmatpush1.bf16.msra.mxu0 %v2202
    %3062 = vmatprep.subr.bf16.mxu0 0
    %3063 = vmatpush1.bf16.msra.mxu0 %v2203
    %3064 = vmatprep.subr.bf16.mxu0 0
    %3065 = vmatpush1.bf16.msra.mxu0 %v2204
    %3066 = vmatprep.subr.bf16.mxu0 0
    %3067 = vmatpush1.bf16.msra.mxu0 %v2205
    %3068 = vmatprep.subr.bf16.mxu0 0
    %3069 = vmatpush1.bf16.msra.mxu0 %v2206
    %3070 = vmatprep.subr.bf16.mxu0 0
    %3071 = vmatpush1.bf16.msra.mxu0 %v2207
    %3072 = vmatprep.subr.bf16.mxu0 0
    %3073 = vmatpush1.bf16.msra.mxu0 %v2208
    %3074 = vmatprep.mubr.bf16.mxu0 %v146
    %3075 = vmatmul.mubr.bf16.gmra.mrb[0].mxu0 %v145
    %v3076 = vpop.f32.mrb[0].mxu0
    %v3077 = vadd.f32 %v3037, %v3076
    %v3078 = vpop.f32.mrb[0].mxu0
    %v3079 = vpop.f32.mrb[0].mxu0
    %v3080 = vpop.f32.mrb[0].mxu0
    %3081 = vdwg.mxu0
    %3082 = vmatprep.subr.bf16.mxu0 0
    %3083 = vmatpush1.bf16.msra.mxu0 %v2209
    %3084 = vmatprep.subr.bf16.mxu0 0
    %3085 = vmatpush1.bf16.msra.mxu0 %v2210
    %3086 = vmatprep.subr.bf16.mxu0 0
    %3087 = vmatpush1.bf16.msra.mxu0 %v2211
    %3088 = vmatprep.subr.bf16.mxu0 0
    %3089 = vmatpush1.bf16.msra.mxu0 %v2212
    %3090 = vmatprep.subr.bf16.mxu0 0
    %3091 = vmatpush1.bf16.msra.mxu0 %v2213
    %3092 = vmatprep.subr.bf16.mxu0 0
    %3093 = vmatpush1.bf16.msra.mxu0 %v2214
    %3094 = vmatprep.subr.bf16.mxu0 0
    %3095 = vmatpush1.bf16.msra.mxu0 %v2215
    %3096 = vmatprep.subr.bf16.mxu0 0
    %3097 = vmatpush1.bf16.msra.mxu0 %v2216
    %3098 = vmatprep.subr.bf16.mxu0 0
    %3099 = vmatpush1.bf16.msra.mxu0 %v2217
    %3100 = vmatprep.subr.bf16.mxu0 0
    %3101 = vmatpush1.bf16.msra.mxu0 %v2218
    %3102 = vmatprep.subr.bf16.mxu0 0
    %3103 = vmatpush1.bf16.msra.mxu0 %v2219
    %3104 = vmatprep.subr.bf16.mxu0 0
    %3105 = vmatpush1.bf16.msra.mxu0 %v2220
    %3106 = vmatprep.subr.bf16.mxu0 0
    %3107 = vmatpush1.bf16.msra.mxu0 %v2221
    %3108 = vmatprep.subr.bf16.mxu0 0
    %3109 = vmatpush1.bf16.msra.mxu0 %v2222
    %3110 = vmatprep.subr.bf16.mxu0 0
    %3111 = vmatpush1.bf16.msra.mxu0 %v2223
    %3112 = vmatprep.subr.bf16.mxu0 0
    %3113 = vmatpush1.bf16.msra.mxu0 %v2224
    %3114 = vmatprep.mubr.bf16.mxu0 %v148
    %3115 = vmatmul.mubr.bf16.gmra.mrb[0].mxu0 %v147
    %v3116 = vpop.f32.mrb[0].mxu0
    %v3117 = vadd.f32 %v3077, %v3116
    %v3118 = vpop.f32.mrb[0].mxu0
    %v3119 = vpop.f32.mrb[0].mxu0
    %v3120 = vpop.f32.mrb[0].mxu0
    %3121 = vdwg.mxu0
    %3122 = vmatprep.subr.bf16.mxu0 0
    %3123 = vmatpush1.bf16.msra.mxu0 %v2225
    %3124 = vmatprep.subr.bf16.mxu0 0
    %3125 = vmatpush1.bf16.msra.mxu0 %v2226
    %3126 = vmatprep.subr.bf16.mxu0 0
    %3127 = vmatpush1.bf16.msra.mxu0 %v2227
    %3128 = vmatprep.subr.bf16.mxu0 0
    %3129 = vmatpush1.bf16.msra.mxu0 %v2228
    %3130 = vmatprep.subr.bf16.mxu0 0
    %3131 = vmatpush1.bf16.msra.mxu0 %v2229
    %3132 = vmatprep.subr.bf16.mxu0 0
    %3133 = vmatpush1.bf16.msra.mxu0 %v2230
    %3134 = vmatprep.subr.bf16.mxu0 0
    %3135 = vmatpush1.bf16.msra.mxu0 %v2231
    %3136 = vmatprep.subr.bf16.mxu0 0
    %3137 = vmatpush1.bf16.msra.mxu0 %v2232
    %3138 = vmatprep.subr.bf16.mxu0 0
    %3139 = vmatpush1.bf16.msra.mxu0 %v2233
    %3140 = vmatprep.subr.bf16.mxu0 0
    %3141 = vmatpush1.bf16.msra.mxu0 %v2234
    %3142 = vmatprep.subr.bf16.mxu0 0
    %3143 = vmatpush1.bf16.msra.mxu0 %v2235
    %3144 = vmatprep.subr.bf16.mxu0 0
    %3145 = vmatpush1.bf16.msra.mxu0 %v2236
    %3146 = vmatprep.subr.bf16.mxu0 0
    %3147 = vmatpush1.bf16.msra.mxu0 %v2237
    %3148 = vmatprep.subr.bf16.mxu0 0
    %3149 = vmatpush1.bf16.msra.mxu0 %v2238
    %3150 = vmatprep.subr.bf16.mxu0 0
    %3151 = vmatpush1.bf16.msra.mxu0 %v2239
    %3152 = vmatprep.subr.bf16.mxu0 0
    %3153 = vmatpush1.bf16.msra.mxu0 %v2240
    %3154 = vmatprep.mubr.bf16.mxu0 %v150
    %3155 = vmatmul.mubr.bf16.gmra.mrb[0].mxu0 %v149
    %v3156 = vpop.f32.mrb[0].mxu0
    %v3157 = vadd.f32 %v3117, %v3156
    %v3158 = vpop.f32.mrb[0].mxu0
    %v3159 = vpop.f32.mrb[0].mxu0
    %v3160 = vpop.f32.mrb[0].mxu0
    %3161 = vdwg.mxu0
    %3162 = vmatprep.subr.bf16.mxu0 0
    %3163 = vmatpush1.bf16.msra.mxu0 %v2241
    %3164 = vmatprep.subr.bf16.mxu0 0
    %3165 = vmatpush1.bf16.msra.mxu0 %v2242
    %3166 = vmatprep.subr.bf16.mxu0 0
    %3167 = vmatpush1.bf16.msra.mxu0 %v2243
    %3168 = vmatprep.subr.bf16.mxu0 0
    %3169 = vmatpush1.bf16.msra.mxu0 %v2244
    %3170 = vmatprep.subr.bf16.mxu0 0
    %3171 = vmatpush1.bf16.msra.mxu0 %v2245
    %3172 = vmatprep.subr.bf16.mxu0 0
    %3173 = vmatpush1.bf16.msra.mxu0 %v2246
    %3174 = vmatprep.subr.bf16.mxu0 0
    %3175 = vmatpush1.bf16.msra.mxu0 %v2247
    %3176 = vmatprep.subr.bf16.mxu0 0
    %3177 = vmatpush1.bf16.msra.mxu0 %v2248
    %3178 = vmatprep.subr.bf16.mxu0 0
    %3179 = vmatpush1.bf16.msra.mxu0 %v2249
    %3180 = vmatprep.subr.bf16.mxu0 0
    %3181 = vmatpush1.bf16.msra.mxu0 %v2250
    %3182 = vmatprep.subr.bf16.mxu0 0
    %3183 = vmatpush1.bf16.msra.mxu0 %v2251
    %3184 = vmatprep.subr.bf16.mxu0 0
    %3185 = vmatpush1.bf16.msra.mxu0 %v2252
    %3186 = vmatprep.subr.bf16.mxu0 0
    %3187 = vmatpush1.bf16.msra.mxu0 %v2253
    %3188 = vmatprep.subr.bf16.mxu0 0
    %3189 = vmatpush1.bf16.msra.mxu0 %v2254
    %3190 = vmatprep.subr.bf16.mxu0 0
    %3191 = vmatpush1.bf16.msra.mxu0 %v2255
    %3192 = vmatprep.subr.bf16.mxu0 0
    %3193 = vmatpush1.bf16.msra.mxu0 %v2256
    %3194 = vmatprep.mubr.bf16.mxu0 %v152
    %3195 = vmatmul.mubr.bf16.gmra.mrb[0].mxu0 %v151
    %v3196 = vpop.f32.mrb[0].mxu0
    %v3197 = vadd.f32 %v3157, %v3196
    %v3198 = vpop.f32.mrb[0].mxu0
    %v3199 = vpop.f32.mrb[0].mxu0
    %v3200 = vpop.f32.mrb[0].mxu0
    %3201 = vdwg.mxu0
    %3202 = vmatprep.subr.bf16.mxu0 0
    %3203 = vmatpush1.bf16.msra.mxu0 %v2257
    %3204 = vmatprep.subr.bf16.mxu0 0
    %3205 = vmatpush1.bf16.msra.mxu0 %v2258
    %3206 = vmatprep.subr.bf16.mxu0 0
    %3207 = vmatpush1.bf16.msra.mxu0 %v2259
    %3208 = vmatprep.subr.bf16.mxu0 0
    %3209 = vmatpush1.bf16.msra.mxu0 %v2260
    %3210 = vmatprep.subr.bf16.mxu0 0
    %3211 = vmatpush1.bf16.msra.mxu0 %v2261
    %3212 = vmatprep.subr.bf16.mxu0 0
    %3213 = vmatpush1.bf16.msra.mxu0 %v2262
    %3214 = vmatprep.subr.bf16.mxu0 0
    %3215 = vmatpush1.bf16.msra.mxu0 %v2263
    %3216 = vmatprep.subr.bf16.mxu0 0
    %3217 = vmatpush1.bf16.msra.mxu0 %v2264
    %3218 = vmatprep.subr.bf16.mxu0 0
    %3219 = vmatpush1.bf16.msra.mxu0 %v2265
    %3220 = vmatprep.subr.bf16.mxu0 0
    %3221 = vmatpush1.bf16.msra.mxu0 %v2266
    %3222 = vmatprep.subr.bf16.mxu0 0
    %3223 = vmatpush1.bf16.msra.mxu0 %v2267
    %3224 = vmatprep.subr.bf16.mxu0 0
    %3225 = vmatpush1.bf16.msra.mxu0 %v2268
    %3226 = vmatprep.subr.bf16.mxu0 0
    %3227 = vmatpush1.bf16.msra.mxu0 %v2269
    %3228 = vmatprep.subr.bf16.mxu0 0
    %3229 = vmatpush1.bf16.msra.mxu0 %v2270
    %3230 = vmatprep.subr.bf16.mxu0 0
    %3231 = vmatpush1.bf16.msra.mxu0 %v2271
    %3232 = vmatprep.subr.bf16.mxu0 0
    %3233 = vmatpush1.bf16.msra.mxu0 %v2272
    %3234 = vmatprep.mubr.bf16.mxu0 %v154
    %3235 = vmatmul.mubr.bf16.gmra.mrb[0].mxu0 %v153
    %v3236 = vpop.f32.mrb[0].mxu0
    %v3237 = vadd.f32 %v3197, %v3236
    %v3238 = vpop.f32.mrb[0].mxu0
    %v3239 = vpop.f32.mrb[0].mxu0
    %v3240 = vpop.f32.mrb[0].mxu0
    %3241 = vdwg.mxu0
    %3242 = vmatprep.subr.bf16.mxu0 0
    %3243 = vmatpush1.bf16.msra.mxu0 %v2273
    %3244 = vmatprep.subr.bf16.mxu0 0
    %3245 = vmatpush1.bf16.msra.mxu0 %v2274
    %3246 = vmatprep.subr.bf16.mxu0 0
    %3247 = vmatpush1.bf16.msra.mxu0 %v2275
    %3248 = vmatprep.subr.bf16.mxu0 0
    %3249 = vmatpush1.bf16.msra.mxu0 %v2276
    %3250 = vmatprep.subr.bf16.mxu0 0
    %3251 = vmatpush1.bf16.msra.mxu0 %v2277
    %3252 = vmatprep.subr.bf16.mxu0 0
    %3253 = vmatpush1.bf16.msra.mxu0 %v2278
    %3254 = vmatprep.subr.bf16.mxu0 0
    %3255 = vmatpush1.bf16.msra.mxu0 %v2279
    %3256 = vmatprep.subr.bf16.mxu0 0
    %3257 = vmatpush1.bf16.msra.mxu0 %v2280
    %3258 = vmatprep.subr.bf16.mxu0 0
    %3259 = vmatpush1.bf16.msra.mxu0 %v2281
    %3260 = vmatprep.subr.bf16.mxu0 0
    %3261 = vmatpush1.bf16.msra.mxu0 %v2282
    %3262 = vmatprep.subr.bf16.mxu0 0
    %3263 = vmatpush1.bf16.msra.mxu0 %v2283
    %3264 = vmatprep.subr.bf16.mxu0 0
    %3265 = vmatpush1.bf16.msra.mxu0 %v2284
    %3266 = vmatprep.subr.bf16.mxu0 0
    %3267 = vmatpush1.bf16.msra.mxu0 %v2285
    %3268 = vmatprep.subr.bf16.mxu0 0
    %3269 = vmatpush1.bf16.msra.mxu0 %v2286
    %3270 = vmatprep.subr.bf16.mxu0 0
    %3271 = vmatpush1.bf16.msra.mxu0 %v2287
    %3272 = vmatprep.subr.bf16.mxu0 0
    %3273 = vmatpush1.bf16.msra.mxu0 %v2288
    %3274 = vmatprep.mubr.bf16.mxu0 %v156
    %3275 = vmatmul.mubr.bf16.gmra.mrb[0].mxu0 %v155
    %v3276 = vpop.f32.mrb[0].mxu0
    %v3277 = vadd.f32 %v3237, %v3276
    %v3278 = vpop.f32.mrb[0].mxu0
    %v3279 = vpop.f32.mrb[0].mxu0
    %v3280 = vpop.f32.mrb[0].mxu0
    %3281 = vdwg.mxu0
    %3282 = vmatprep.subr.bf16.mxu0 0
    %3283 = vmatpush1.bf16.msra.mxu0 %v2289
    %3284 = vmatprep.subr.bf16.mxu0 0
    %3285 = vmatpush1.bf16.msra.mxu0 %v2290
    %3286 = vmatprep.subr.bf16.mxu0 0
    %3287 = vmatpush1.bf16.msra.mxu0 %v2291
    %3288 = vmatprep.subr.bf16.mxu0 0
    %3289 = vmatpush1.bf16.msra.mxu0 %v2292
    %3290 = vmatprep.subr.bf16.mxu0 0
    %3291 = vmatpush1.bf16.msra.mxu0 %v2293
    %3292 = vmatprep.subr.bf16.mxu0 0
    %3293 = vmatpush1.bf16.msra.mxu0 %v2294
    %3294 = vmatprep.subr.bf16.mxu0 0
    %3295 = vmatpush1.bf16.msra.mxu0 %v2295
    %3296 = vmatprep.subr.bf16.mxu0 0
    %3297 = vmatpush1.bf16.msra.mxu0 %v2296
    %3298 = vmatprep.subr.bf16.mxu0 0
    %3299 = vmatpush1.bf16.msra.mxu0 %v2297
    %3300 = vmatprep.subr.bf16.mxu0 0
    %3301 = vmatpush1.bf16.msra.mxu0 %v2298
    %3302 = vmatprep.subr.bf16.mxu0 0
    %3303 = vmatpush1.bf16.msra.mxu0 %v2299
    %3304 = vmatprep.subr.bf16.mxu0 0
    %3305 = vmatpush1.bf16.msra.mxu0 %v2300
    %3306 = vmatprep.subr.bf16.mxu0 0
    %3307 = vmatpush1.bf16.msra.mxu0 %v2301
    %3308 = vmatprep.subr.bf16.mxu0 0
    %3309 = vmatpush1.bf16.msra.mxu0 %v2302
    %3310 = vmatprep.subr.bf16.mxu0 0
    %3311 = vmatpush1.bf16.msra.mxu0 %v2303
    %3312 = vmatprep.subr.bf16.mxu0 0
    %3313 = vmatpush1.bf16.msra.mxu0 %v2304
    %3314 = vmatprep.mubr.bf16.mxu0 %v158
    %3315 = vmatmul.mubr.bf16.gmra.mrb[0].mxu0 %v157
    %v3316 = vpop.f32.mrb[0].mxu0
    %v3317 = vadd.f32 %v3277, %v3316
    %v3318 = vpop.f32.mrb[0].mxu0
    %v3319 = vpop.f32.mrb[0].mxu0
    %v3320 = vpop.f32.mrb[0].mxu0
    %3321 = vdwg.mxu0
    %3322 = vmatprep.subr.bf16.mxu0 0
    %3323 = vmatpush1.bf16.msra.mxu0 %v2305
    %3324 = vmatprep.subr.bf16.mxu0 0
    %3325 = vmatpush1.bf16.msra.mxu0 %v2306
    %3326 = vmatprep.subr.bf16.mxu0 0
    %3327 = vmatpush1.bf16.msra.mxu0 %v2307
    %3328 = vmatprep.subr.bf16.mxu0 0
    %3329 = vmatpush1.bf16.msra.mxu0 %v2308
    %3330 = vmatprep.subr.bf16.mxu0 0
    %3331 = vmatpush1.bf16.msra.mxu0 %v2309
    %3332 = vmatprep.subr.bf16.mxu0 0
    %3333 = vmatpush1.bf16.msra.mxu0 %v2310
    %3334 = vmatprep.subr.bf16.mxu0 0
    %3335 = vmatpush1.bf16.msra.mxu0 %v2311
    %3336 = vmatprep.subr.bf16.mxu0 0
    %3337 = vmatpush1.bf16.msra.mxu0 %v2312
    %3338 = vmatprep.subr.bf16.mxu0 0
    %3339 = vmatpush1.bf16.msra.mxu0 %v2313
    %3340 = vmatprep.subr.bf16.mxu0 0
    %3341 = vmatpush1.bf16.msra.mxu0 %v2314
    %3342 = vmatprep.subr.bf16.mxu0 0
    %3343 = vmatpush1.bf16.msra.mxu0 %v2315
    %3344 = vmatprep.subr.bf16.mxu0 0
    %3345 = vmatpush1.bf16.msra.mxu0 %v2316
    %3346 = vmatprep.subr.bf16.mxu0 0
    %3347 = vmatpush1.bf16.msra.mxu0 %v2317
    %3348 = vmatprep.subr.bf16.mxu0 0
    %3349 = vmatpush1.bf16.msra.mxu0 %v2318
    %3350 = vmatprep.subr.bf16.mxu0 0
    %3351 = vmatpush1.bf16.msra.mxu0 %v2319
    %3352 = vmatprep.subr.bf16.mxu0 0
    %3353 = vmatpush1.bf16.msra.mxu0 %v2320
    %3354 = vmatprep.mubr.bf16.mxu0 %v160
    %3355 = vmatmul.mubr.bf16.gmra.mrb[0].mxu0 %v159
    %v3356 = vpop.f32.mrb[0].mxu0
    %v3357 = vadd.f32 %v3317, %v3356
    %v3358 = vpop.f32.mrb[0].mxu0
    %v3359 = vpop.f32.mrb[0].mxu0
    %v3360 = vpop.f32.mrb[0].mxu0
    %3361 = vdwg.mxu0
    %3362 = vmatprep.subr.bf16.mxu0 0
    %3363 = vmatpush1.bf16.msra.mxu0 %v2321
    %3364 = vmatprep.subr.bf16.mxu0 0
    %3365 = vmatpush1.bf16.msra.mxu0 %v2322
    %3366 = vmatprep.subr.bf16.mxu0 0
    %3367 = vmatpush1.bf16.msra.mxu0 %v2323
    %3368 = vmatprep.subr.bf16.mxu0 0
    %3369 = vmatpush1.bf16.msra.mxu0 %v2324
    %3370 = vmatprep.subr.bf16.mxu0 0
    %3371 = vmatpush1.bf16.msra.mxu0 %v2325
    %3372 = vmatprep.subr.bf16.mxu0 0
    %3373 = vmatpush1.bf16.msra.mxu0 %v2326
    %3374 = vmatprep.subr.bf16.mxu0 0
    %3375 = vmatpush1.bf16.msra.mxu0 %v2327
    %3376 = vmatprep.subr.bf16.mxu0 0
    %3377 = vmatpush1.bf16.msra.mxu0 %v2328
    %3378 = vmatprep.subr.bf16.mxu0 0
    %3379 = vmatpush1.bf16.msra.mxu0 %v2329
    %3380 = vmatprep.subr.bf16.mxu0 0
    %3381 = vmatpush1.bf16.msra.mxu0 %v2330
    %3382 = vmatprep.subr.bf16.mxu0 0
    %3383 = vmatpush1.bf16.msra.mxu0 %v2331
    %3384 = vmatprep.subr.bf16.mxu0 0
    %3385 = vmatpush1.bf16.msra.mxu0 %v2332
    %3386 = vmatprep.subr.bf16.mxu0 0
    %3387 = vmatpush1.bf16.msra.mxu0 %v2333
    %3388 = vmatprep.subr.bf16.mxu0 0
    %3389 = vmatpush1.bf16.msra.mxu0 %v2334
    %3390 = vmatprep.subr.bf16.mxu0 0
    %3391 = vmatpush1.bf16.msra.mxu0 %v2335
    %3392 = vmatprep.subr.bf16.mxu0 0
    %3393 = vmatpush1.bf16.msra.mxu0 %v2336
    %3394 = vmatprep.mubr.bf16.mxu0 %v162
    %3395 = vmatmul.mubr.bf16.gmra.mrb[0].mxu0 %v161
    %v3396 = vpop.f32.mrb[0].mxu0
    %v3397 = vadd.f32 %v3357, %v3396
    %v3398 = vpop.f32.mrb[0].mxu0
    %v3399 = vpop.f32.mrb[0].mxu0
    %v3400 = vpop.f32.mrb[0].mxu0
    %3401 = vdwg.mxu0
    %3402 = vmatprep.subr.bf16.mxu0 0
    %3403 = vmatpush1.bf16.msra.mxu0 %v2337
    %3404 = vmatprep.subr.bf16.mxu0 0
    %3405 = vmatpush1.bf16.msra.mxu0 %v2338
    %3406 = vmatprep.subr.bf16.mxu0 0
    %3407 = vmatpush1.bf16.msra.mxu0 %v2339
    %3408 = vmatprep.subr.bf16.mxu0 0
    %3409 = vmatpush1.bf16.msra.mxu0 %v2340
    %3410 = vmatprep.subr.bf16.mxu0 0
    %3411 = vmatpush1.bf16.msra.mxu0 %v2341
    %3412 = vmatprep.subr.bf16.mxu0 0
    %3413 = vmatpush1.bf16.msra.mxu0 %v2342
    %3414 = vmatprep.subr.bf16.mxu0 0
    %3415 = vmatpush1.bf16.msra.mxu0 %v2343
    %3416 = vmatprep.subr.bf16.mxu0 0
    %3417 = vmatpush1.bf16.msra.mxu0 %v2344
    %3418 = vmatprep.subr.bf16.mxu0 0
    %3419 = vmatpush1.bf16.msra.mxu0 %v2345
    %3420 = vmatprep.subr.bf16.mxu0 0
    %3421 = vmatpush1.bf16.msra.mxu0 %v2346
    %3422 = vmatprep.subr.bf16.mxu0 0
    %3423 = vmatpush1.bf16.msra.mxu0 %v2347
    %3424 = vmatprep.subr.bf16.mxu0 0
    %3425 = vmatpush1.bf16.msra.mxu0 %v2348
    %3426 = vmatprep.subr.bf16.mxu0 0
    %3427 = vmatpush1.bf16.msra.mxu0 %v2349
    %3428 = vmatprep.subr.bf16.mxu0 0
    %3429 = vmatpush1.bf16.msra.mxu0 %v2350
    %3430 = vmatprep.subr.bf16.mxu0 0
    %3431 = vmatpush1.bf16.msra.mxu0 %v2351
    %3432 = vmatprep.subr.bf16.mxu0 0
    %3433 = vmatpush1.bf16.msra.mxu0 %v2352
    %3434 = vmatprep.mubr.bf16.mxu0 %v164
    %3435 = vmatmul.mubr.bf16.gmra.mrb[0].mxu0 %v163
    %v3436 = vpop.f32.mrb[0].mxu0
    %v3437 = vadd.f32 %v3397, %v3436
    %v3438 = vpop.f32.mrb[0].mxu0
    %v3439 = vpop.f32.mrb[0].mxu0
    %v3440 = vpop.f32.mrb[0].mxu0
    %3441 = vdwg.mxu0
    %3442 = vmatprep.subr.bf16.mxu0 0
    %3443 = vmatpush1.bf16.msra.mxu0 %v2353
    %3444 = vmatprep.subr.bf16.mxu0 0
    %3445 = vmatpush1.bf16.msra.mxu0 %v2354
    %3446 = vmatprep.subr.bf16.mxu0 0
    %3447 = vmatpush1.bf16.msra.mxu0 %v2355
    %3448 = vmatprep.subr.bf16.mxu0 0
    %3449 = vmatpush1.bf16.msra.mxu0 %v2356
    %3450 = vmatprep.subr.bf16.mxu0 0
    %3451 = vmatpush1.bf16.msra.mxu0 %v2357
    %3452 = vmatprep.subr.bf16.mxu0 0
    %3453 = vmatpush1.bf16.msra.mxu0 %v2358
    %3454 = vmatprep.subr.bf16.mxu0 0
    %3455 = vmatpush1.bf16.msra.mxu0 %v2359
    %3456 = vmatprep.subr.bf16.mxu0 0
    %3457 = vmatpush1.bf16.msra.mxu0 %v2360
    %3458 = vmatprep.subr.bf16.mxu0 0
    %3459 = vmatpush1.bf16.msra.mxu0 %v2680
    %3460 = vmatprep.subr.bf16.mxu0 0
    %3461 = vmatpush1.bf16.msra.mxu0 0
    %3462 = vmatprep.subr.bf16.mxu0 0
    %3463 = vmatpush1.bf16.msra.mxu0 0
    %3464 = vmatprep.subr.bf16.mxu0 0
    %3465 = vmatpush1.bf16.msra.mxu0 0
    %3466 = vmatprep.subr.bf16.mxu0 0
    %3467 = vmatpush1.bf16.msra.mxu0 0
    %3468 = vmatprep.subr.bf16.mxu0 0
    %3469 = vmatpush1.bf16.msra.mxu0 0
    %3470 = vmatprep.subr.bf16.mxu0 0
    %3471 = vmatpush1.bf16.msra.mxu0 0
    %3472 = vmatprep.subr.bf16.mxu0 0
    %3473 = vmatpush1.bf16.msra.mxu0 0
    %3474 = vmatprep.mubr.bf16.mxu0 %v2676
    %3475 = vmatmul.mubr.bf16.gmra.mrb[0].mxu0 %v165
    %v3476 = vpop.f32.mrb[0].mxu0
    %v3477 = vadd.f32 %v3437, %v3476
    %v3478 = vpop.f32.mrb[0].mxu0
    %v3479 = vpop.f32.mrb[0].mxu0
    %v3480 = vpop.f32.mrb[0].mxu0
    %3481 = vdwg.mxu0
    %v3482 = vmax.f32 %v3477, 0.0
    %v3483 = vpack.c.bf16 %v3482, %v3482
    %v3484 = vld [vmem:[%s3] sm:$0xf]
    %v3485 = vld [vmem:[%s3 + $0x4] sm:$0xf]
    %v3486 = vld [vmem:[%s3 + $0x8] sm:$0xf]
    %v3487 = vld [vmem:[%s3 + $0xc] sm:$0xf]
    %v3488 = vld [vmem:[%s3 + $0x10] sm:$0xf]
    %v3489 = vld [vmem:[%s3 + $0x14] sm:$0xf]
    %v3490 = vld [vmem:[%s3 + $0x18] sm:$0xf]
    %v3491 = vld [vmem:[%s3 + $0x1c] sm:$0xf]
    %v3492 = vld [vmem:[%s3 + $0x20] sm:$0xf]
    %v3493 = vld [vmem:[%s3 + $0x24] sm:$0xf]
    %v3494 = vld [vmem:[%s3 + $0x28] sm:$0xf]
    %v3495 = vld [vmem:[%s3 + $0x2c] sm:$0xf]
    %v3496 = vld [vmem:[%s3 + $0x30] sm:$0xf]
    %v3497 = vld [vmem:[%s3 + $0x34] sm:$0xf]
    %v3498 = vld [vmem:[%s3 + $0x38] sm:$0xf]
    %v3499 = vld [vmem:[%s3 + $0x3c] sm:$0xf]
    %v3500 = vld [vmem:[#allocation7] sm:$0x1]
    %v3502 = vlaneseq
    %v3503 = vshrl.u32 %v3502, 7
    %v3504 = vsub.s32 0, %v3503
    %v3505 = vrot.slane %v3500, %v3504
    %v3523 = vunpack.c.l.b16 %v3484
    %v3524 = vunpack.c.l.b16 %v3485
    %v3525 = vunpack.c.l.b16 %v3486
    %v3526 = vunpack.c.l.b16 %v3487
    %v3527 = vunpack.c.l.b16 %v3488
    %v3528 = vunpack.c.l.b16 %v3489
    %v3529 = vunpack.c.l.b16 %v3490
    %v3530 = vunpack.c.l.b16 %v3491
    %v3531 = vunpack.c.l.b16 %v3492
    %v3532 = vunpack.c.l.b16 %v3493
    %v3533 = vunpack.c.l.b16 %v3494
    %v3534 = vunpack.c.l.b16 %v3495
    %v3535 = vunpack.c.l.b16 %v3496
    %v3536 = vunpack.c.l.b16 %v3497
    %v3537 = vunpack.c.l.b16 %v3498
    %v3538 = vunpack.c.l.b16 %v3499
    %v3539 = vpack.c.b16 %v3524, %v3523
    %v3540 = vpack.c.b16 %v3526, %v3525
    %v3541 = vpack.c.b16 %v3528, %v3527
    %v3542 = vpack.c.b16 %v3530, %v3529
    %v3543 = vpack.c.b16 %v3532, %v3531
    %v3544 = vpack.c.b16 %v3534, %v3533
    %v3545 = vpack.c.b16 %v3536, %v3535
    %v3546 = vpack.c.b16 %v3538, %v3537
    %3555 = vmatprep.subr.bf16.mxu0 0
    %3556 = vmatpush1.bf16.msra.mxu0 %v3539
    %3557 = vmatprep.subr.bf16.mxu0 0
    %3558 = vmatpush1.bf16.msra.mxu0 %v3540
    %3559 = vmatprep.subr.bf16.mxu0 0
    %3560 = vmatpush1.bf16.msra.mxu0 %v3541
    %3561 = vmatprep.subr.bf16.mxu0 0
    %3562 = vmatpush1.bf16.msra.mxu0 %v3542
    %3563 = vmatprep.subr.bf16.mxu0 0
    %3564 = vmatpush1.bf16.msra.mxu0 %v3543
    %3565 = vmatprep.subr.bf16.mxu0 0
    %3566 = vmatpush1.bf16.msra.mxu0 %v3544
    %3567 = vmatprep.subr.bf16.mxu0 0
    %3568 = vmatpush1.bf16.msra.mxu0 %v3545
    %3569 = vmatprep.subr.bf16.mxu0 0
    %3570 = vmatpush1.bf16.msra.mxu0 %v3546
    %3571 = vmatprep.subr.bf16.mxu0 0
    %3572 = vmatpush1.bf16.msra.mxu0 0
    %3573 = vmatprep.subr.bf16.mxu0 0
    %3574 = vmatpush1.bf16.msra.mxu0 0
    %3575 = vmatprep.subr.bf16.mxu0 0
    %3576 = vmatpush1.bf16.msra.mxu0 0
    %3577 = vmatprep.subr.bf16.mxu0 0
    %3578 = vmatpush1.bf16.msra.mxu0 0
    %3579 = vmatprep.subr.bf16.mxu0 0
    %3580 = vmatpush1.bf16.msra.mxu0 0
    %3581 = vmatprep.subr.bf16.mxu0 0
    %3582 = vmatpush1.bf16.msra.mxu0 0
    %3583 = vmatprep.subr.bf16.mxu0 0
    %3584 = vmatpush1.bf16.msra.mxu0 0
    %3585 = vmatprep.subr.bf16.mxu0 0
    %3586 = vmatpush1.bf16.msra.mxu0 0
    %3587 = vmatprep.mubr.bf16.mxu0 0
    %3588 = vmatmul.mubr.bf16.gmra.mrb[0].mxu0 %v3483
    %v3589 = vpop.f32.mrb[0].mxu0
    %v3590 = vadd.f32 %v3505, %v3589
    %v3591 = vpop.f32.mrb[0].mxu0
    %v3592 = vpop.f32.mrb[0].mxu0
    %v3593 = vpop.f32.mrb[0].mxu0
    %3594 = vdwg.mxu0
    %v3595 = vmax.f32 %v3590, 0.0
    %v3596 = vpack.c.bf16 %v3595, %v3595
    %v3597 = vld [vmem:[%s5] sm:$0xf]
    %v3598 = vld [vmem:[%s5 + $0x4] sm:$0x1]
    %v3599 = vld [vmem:[#allocation9] sm:$0x1]
    %v3601 = vlaneseq
    %v3602 = vshrl.u32 %v3601, 7
    %v3603 = vsub.s32 0, %v3602
    %v3604 = vrot.slane %v3599, %v3603
    %v3608 = vunpack.c.l.b16 %v3597
    %v3609 = vunpack.c.l.b16 %v3598
    %v3610 = vpack.c.b16 %v3609, %v3608
    %vm3611 = vcmask 80896
    %v3613 = vsel %vm3611, %v3596, 0
    %vm3615 = vcmask 1044480
    %v3617 = vsel %vm3615, %v3610, 0
    %3619 = vmatprep.subr.bf16.mxu0 0
    %3620 = vmatpush1.bf16.msra.mxu0 %v3617
    %3621 = vmatprep.subr.bf16.mxu0 0
    %3622 = vmatpush1.bf16.msra.mxu0 0
    %3623 = vmatprep.subr.bf16.mxu0 0
    %3624 = vmatpush1.bf16.msra.mxu0 0
    %3625 = vmatprep.subr.bf16.mxu0 0
    %3626 = vmatpush1.bf16.msra.mxu0 0
    %3627 = vmatprep.subr.bf16.mxu0 0
    %3628 = vmatpush1.bf16.msra.mxu0 0
    %3629 = vmatprep.subr.bf16.mxu0 0
    %3630 = vmatpush1.bf16.msra.mxu0 0
    %3631 = vmatprep.subr.bf16.mxu0 0
    %3632 = vmatpush1.bf16.msra.mxu0 0
    %3633 = vmatprep.subr.bf16.mxu0 0
    %3634 = vmatpush1.bf16.msra.mxu0 0
    %3635 = vmatprep.subr.bf16.mxu0 0
    %3636 = vmatpush1.bf16.msra.mxu0 0
    %3637 = vmatprep.subr.bf16.mxu0 0
    %3638 = vmatpush1.bf16.msra.mxu0 0
    %3639 = vmatprep.subr.bf16.mxu0 0
    %3640 = vmatpush1.bf16.msra.mxu0 0
    %3641 = vmatprep.subr.bf16.mxu0 0
    %3642 = vmatpush1.bf16.msra.mxu0 0
    %3643 = vmatprep.subr.bf16.mxu0 0
    %3644 = vmatpush1.bf16.msra.mxu0 0
    %3645 = vmatprep.subr.bf16.mxu0 0
    %3646 = vmatpush1.bf16.msra.mxu0 0
    %3647 = vmatprep.subr.bf16.mxu0 0
    %3648 = vmatpush1.bf16.msra.mxu0 0
    %3649 = vmatprep.subr.bf16.mxu0 0
    %3650 = vmatpush1.bf16.msra.mxu0 0
    %3651 = vmatprep.mubr.bf16.mxu0 0
    %3652 = vmatmul.mubr.bf16.gmra.mrb[0].mxu0 %v3613
    %v3653 = vpop.f32.mrb[0].mxu0
    %v3654 = vadd.f32 %v3604, %v3653
    %v3655 = vpop.f32.mrb[0].mxu0
    %v3656 = vpop.f32.mrb[0].mxu0
    %v3657 = vpop.f32.mrb[0].mxu0
    %3658 = vdwg.mxu0
    %vm3659 = vcmask 15360
    %3660 = vst.msk [vmem:[%s7] sm:$0xff] %vm3659, %v3654
    // Predicated region
    $region50: #{tpu_custom_call.1} parent=1 // pred_check
      _
    $region51: #{tpu_custom_call.1} parent=1 // pred_check_branch
      %3662 = sbr.rel (0) target = $region53
    $region52: #{tpu_custom_call.1} parent=1 // pred_region
      _
    $region53: #{tpu_custom_call.1} parent=1 // pred_fallthru
      _
    // Predicated region
    $region54: #{tpu_custom_call.1} parent=1 // pred_check
      _
    $region55: #{tpu_custom_call.1} parent=1 // pred_check_branch
      %3664 = sbr.rel (0) target = $region57
    $region56: #{tpu_custom_call.1} parent=1 // pred_region
      _
    $region57: #{tpu_custom_call.1} parent=1 // pred_fallthru
      _
    %3665 = vsyncpa [#allocation3], 1
    %3666 = vsyncpa [#allocation5], 1
    %3667 = vsyncpa [#allocation8], 1

// kernel: tpu_custom_call.1
$region0: #{tpu_custom_call.1}
  #allocation0 [shape = 'u32[]', space=smem, size = 0x4, offset = 0x4, fixed_abs, tag = 'smem constant byte address 0x4 - core index']
  #allocation1 [shape = 'u32[144,128]{1,0:T(1,128)}', space=vmem, size = 0x12000, scoped, tag = 'internal scratch']
  %s0 = inlined_call_operand.hbm [shape: f32[8,5000], index: 0, kind: input, shape index: {}]
  %s1 = inlined_call_operand.hbm [shape: bf16[5000,128], index: 1, kind: input, shape index: {}]
  %s2 = inlined_call_operand.hbm [shape: f32[1,128], index: 2, kind: input, shape index: {}]
  %s3 = inlined_call_operand.vmem [shape: bf16[128,10], index: 3, kind: input, shape index: {}]
  %s4 = inlined_call_operand.hbm [shape: f32[1,10], index: 4, kind: input, shape index: {}]
  %s5 = inlined_call_operand.vmem [shape: bf16[10,2], index: 5, kind: input, shape index: {}]
  %s6 = inlined_call_operand.hbm [shape: f32[1,2], index: 6, kind: input, shape index: {}]
  %s7 = inlined_call_operand.vmem [shape: f32[8,2], index: 7, kind: output, shape index: {}]
  %s8 = sld [smem:[#allocation0]]
  $region58: #{tpu_custom_call.1} parent=0
    _
  %s10 = ssub.s32 1, %s8
  %s11 = scalar_select 0, %s10, %s8
  $region1: #{tpu_custom_call.1} parent=0
    #allocation2 [shape = 'u8[163840]{0}', space=vmem, size = 0x28000, scoped, tag = 'input window, operand 0, single buffered']
    #allocation3 [shape = 's32[1]{0}', space=sflag, size = 0x4, scoped, tag = 'scoped memory for tpu_custom_call.1']
    #allocation4 [shape = 'u8[1280000]{0}', space=vmem, size = 0x138800, scoped, tag = 'input window, operand 1, single buffered']
    #allocation5 [shape = 's32[1]{0}', space=sflag, size = 0x4, scoped, tag = 'scoped memory for tpu_custom_call.1']
    #allocation6 [shape = 'u8[512]{0}', space=vmem, size = 0x400, scoped, tag = 'input window, operand 2, single buffered']
    #allocation7 [shape = 'u8[512]{0}', space=vmem, size = 0x400, scoped, tag = 'input window, operand 4, single buffered']
    #allocation8 [shape = 's32[1]{0}', space=sflag, size = 0x4, scoped, tag = 'scoped memory for tpu_custom_call.1']
    #allocation9 [shape = 'u8[512]{0}', space=vmem, size = 0x400, scoped, tag = 'input window, operand 6, single buffered']
    %12 = vsyncpa [#allocation3], 0
    %13 = vsyncpa [#allocation5], 0
    %14 = vsyncpa [#allocation8], 0
    // Predicated region
    $region2: #{tpu_custom_call.1} parent=1 // pred_check
      _
    $region3: #{tpu_custom_call.1} parent=1 // pred_check_branch
      %16 = sbr.rel (0) target = $region5
    $region4: #{tpu_custom_call.1} parent=1 // pred_region
      %s18 = ssub.s32 5120, 5120
      %19 = vsyncadd [#allocation3], %s18
      %s21 = sshll.u32 [#allocation2], 4
      %s22 = int_to_ptr.vmem [resolvable:$true] %s21
      %24 = dma.hbm_to_vmem [thread:$0]  %s0, 5120, %s22, [#allocation3]
    $region5: #{tpu_custom_call.1} parent=1 // pred_fallthru
      _
    // Predicated region
    $region6: #{tpu_custom_call.1} parent=1 // pred_check
      _
    $region7: #{tpu_custom_call.1} parent=1 // pred_check_branch
      %26 = sbr.rel (0) target = $region9
    $region8: #{tpu_custom_call.1} parent=1 // pred_region
      %s28 = ssub.s32 40000, 40000
      %29 = vsyncadd [#allocation5], %s28
      %s30 = sshll.u32 [#allocation4], 4
      %s31 = int_to_ptr.vmem [resolvable:$true] %s30
      %36 = dma.hbm_to_vmem [thread:$0]  %s1, 40000, %s31, [#allocation5], 64, 64, 4
    $region9: #{tpu_custom_call.1} parent=1 // pred_fallthru
      _
    // Predicated region
    $region10: #{tpu_custom_call.1} parent=1 // pred_check
      _
    $region11: #{tpu_custom_call.1} parent=1 // pred_check_branch
      %38 = sbr.rel (0) target = $region13
    $region12: #{tpu_custom_call.1} parent=1 // pred_region
      %s40 = ssub.s32 16, 16
      %41 = vsyncadd [#allocation5], %s40
      %s43 = sshll.u32 [#allocation6], 4
      %s44 = int_to_ptr.vmem [resolvable:$true] %s43
      %46 = dma.hbm_to_vmem [thread:$0]  %s2, 16, %s44, [#allocation5]
    $region13: #{tpu_custom_call.1} parent=1 // pred_fallthru
      _
    // Predicated region
    $region14: #{tpu_custom_call.1} parent=1 // pred_check
      _
    $region15: #{tpu_custom_call.1} parent=1 // pred_check_branch
      %48 = sbr.rel (0) target = $region17
    $region16: #{tpu_custom_call.1} parent=1 // pred_region
      _
    $region17: #{tpu_custom_call.1} parent=1 // pred_fallthru
      _
    // Predicated region
    $region18: #{tpu_custom_call.1} parent=1 // pred_check
      _
    $region19: #{tpu_custom_call.1} parent=1 // pred_check_branch
      %50 = sbr.rel (0) target = $region21
    $region20: #{tpu_custom_call.1} parent=1 // pred_region
      %s52 = ssub.s32 16, 16
      %53 = vsyncadd [#allocation8], %s52
      %s55 = sshll.u32 [#allocation7], 4
      %s56 = int_to_ptr.vmem [resolvable:$true] %s55
      %58 = dma.hbm_to_vmem [thread:$0]  %s4, 16, %s56, [#allocation8]
    $region21: #{tpu_custom_call.1} parent=1 // pred_fallthru
      _
    // Predicated region
    $region22: #{tpu_custom_call.1} parent=1 // pred_check
      _
    $region23: #{tpu_custom_call.1} parent=1 // pred_check_branch
      %60 = sbr.rel (0) target = $region25
    $region24: #{tpu_custom_call.1} parent=1 // pred_region
      _
    $region25: #{tpu_custom_call.1} parent=1 // pred_fallthru
      _
    // Predicated region
    $region26: #{tpu_custom_call.1} parent=1 // pred_check
      _
    $region27: #{tpu_custom_call.1} parent=1 // pred_check_branch
      %62 = sbr.rel (0) target = $region29
    $region28: #{tpu_custom_call.1} parent=1 // pred_region
      %s64 = ssub.s32 16, 16
      %65 = vsyncadd [#allocation8], %s64
      %s67 = sshll.u32 [#allocation9], 4
      %s68 = int_to_ptr.vmem [resolvable:$true] %s67
      %70 = dma.hbm_to_vmem [thread:$0]  %s6, 16, %s68, [#allocation8]
    $region29: #{tpu_custom_call.1} parent=1 // pred_fallthru
      _
    // Predicated region
    $region30: #{tpu_custom_call.1} parent=1 // pred_check
      _
    $region31: #{tpu_custom_call.1} parent=1 // pred_check_branch
      %72 = sbr.rel (0) target = $region33
    $region32: #{tpu_custom_call.1} parent=1 // pred_region
      %73 = dma.done [#allocation3], 5120
    $region33: #{tpu_custom_call.1} parent=1 // pred_fallthru
      _
    // Predicated region
    $region34: #{tpu_custom_call.1} parent=1 // pred_check
      _
    $region35: #{tpu_custom_call.1} parent=1 // pred_check_branch
      %75 = sbr.rel (0) target = $region37
    $region36: #{tpu_custom_call.1} parent=1 // pred_region
      %76 = dma.done [#allocation5], 40000
    $region37: #{tpu_custom_call.1} parent=1 // pred_fallthru
      _
    // Predicated region
    $region38: #{tpu_custom_call.1} parent=1 // pred_check
      _
    $region39: #{tpu_custom_call.1} parent=1 // pred_check_branch
      %78 = sbr.rel (0) target = $region41
    $region40: #{tpu_custom_call.1} parent=1 // pred_region
      %79 = dma.done [#allocation5], 16
    $region41: #{tpu_custom_call.1} parent=1 // pred_fallthru
      _
    // Predicated region
    $region42: #{tpu_custom_call.1} parent=1 // pred_check
      _
    $region43: #{tpu_custom_call.1} parent=1 // pred_check_branch
      %81 = sbr.rel (0) target = $region45
    $region44: #{tpu_custom_call.1} parent=1 // pred_region
      %82 = dma.done [#allocation8], 16
    $region45: #{tpu_custom_call.1} parent=1 // pred_fallthru
      _
    // Predicated region
    $region46: #{tpu_custom_call.1} parent=1 // pred_check
      _
    $region47: #{tpu_custom_call.1} parent=1 // pred_check_branch
      %84 = sbr.rel (0) target = $region49
    $region48: #{tpu_custom_call.1} parent=1 // pred_region
      %85 = dma.done [#allocation8], 16
    $region49: #{tpu_custom_call.1} parent=1 // pred_fallthru
      _
    %v87 = vld [vmem:[#allocation2] sm:$0xff]
    %v88 = vld [vmem:[#allocation2 + $0x8] sm:$0xff]
    %v89 = vld [vmem:[#allocation2 + $0x10] sm:$0xff]
    %v90 = vld [vmem:[#allocation2 + $0x18] sm:$0xff]
    %v91 = vld [vmem:[#allocation2 + $0x20] sm:$0xff]
    %v92 = vld [vmem:[#allocation2 + $0x28] sm:$0xff]
    %v93 = vld [vmem:[#allocation2 + $0x30] sm:$0xff]
    %v94 = vld [vmem:[#allocation2 + $0x38] sm:$0xff]
    %v95 = vld [vmem:[#allocation2 + $0x40] sm:$0xff]
    %v96 = vld [vmem:[#allocation2 + $0x48] sm:$0xff]
    %v97 = vld [vmem:[#allocation2 + $0x50] sm:$0xff]
    %v98 = vld [vmem:[#allocation2 + $0x58] sm:$0xff]
    %v99 = vld [vmem:[#allocation2 + $0x60] sm:$0xff]
    %v100 = vld [vmem:[#allocation2 + $0x68] sm:$0xff]
    %v101 = vld [vmem:[#allocation2 + $0x70] sm:$0xff]
    %v102 = vld [vmem:[#allocation2 + $0x78] sm:$0xff]
    %v103 = vld [vmem:[#allocation2 + $0x80] sm:$0xff]
    %v104 = vld [vmem:[#allocation2 + $0x88] sm:$0xff]
    %v105 = vld [vmem:[#allocation2 + $0x90] sm:$0xff]
    %v106 = vld [vmem:[#allocation2 + $0x98] sm:$0xff]
    %v107 = vld [vmem:[#allocation2 + $0xa0] sm:$0xff]
    %v108 = vld [vmem:[#allocation2 + $0xa8] sm:$0xff]
    %v109 = vld [vmem:[#allocation2 + $0xb0] sm:$0xff]
    %v110 = vld [vmem:[#allocation2 + $0xb8] sm:$0xff]
    %v111 = vld [vmem:[#allocation2 + $0xc0] sm:$0xff]
    %v112 = vld [vmem:[#allocation2 + $0xc8] sm:$0xff]
    %v113 = vld [vmem:[#allocation2 + $0xd0] sm:$0xff]
    %v114 = vld [vmem:[#allocation2 + $0xd8] sm:$0xff]
    %v115 = vld [vmem:[#allocation2 + $0xe0] sm:$0xff]
    %v116 = vld [vmem:[#allocation2 + $0xe8] sm:$0xff]
    %v117 = vld [vmem:[#allocation2 + $0xf0] sm:$0xff]
    %v118 = vld [vmem:[#allocation2 + $0xf8] sm:$0xff]
    %v119 = vld [vmem:[#allocation2 + $0x100] sm:$0xff]
    %v120 = vld [vmem:[#allocation2 + $0x108] sm:$0xff]
    %v121 = vld [vmem:[#allocation2 + $0x110] sm:$0xff]
    %v122 = vld [vmem:[#allocation2 + $0x118] sm:$0xff]
    %v123 = vld [vmem:[#allocation2 + $0x120] sm:$0xff]
    %v124 = vld [vmem:[#allocation2 + $0x128] sm:$0xff]
    %v125 = vld [vmem:[#allocation2 + $0x130] sm:$0xff]
    %v126 = vld [vmem:[#allocation2 + $0x138] sm:$0xff]
    %v127 = vpack.c.bf16 %v87, %v87
    %v128 = vpack.c.bf16 %v88, %v88
    %v129 = vpack.c.bf16 %v89, %v89
    %v130 = vpack.c.bf16 %v90, %v90
    %v131 = vpack.c.bf16 %v91, %v91
    %v132 = vpack.c.bf16 %v92, %v92
    %v133 = vpack.c.bf16 %v93, %v93
    %v134 = vpack.c.bf16 %v94, %v94
    %v135 = vpack.c.bf16 %v95, %v95
    %v136 = vpack.c.bf16 %v96, %v96
    %v137 = vpack.c.bf16 %v97, %v97
    %v138 = vpack.c.bf16 %v98, %v98
    %v139 = vpack.c.bf16 %v99, %v99
    %v140 = vpack.c.bf16 %v100, %v100
    %v141 = vpack.c.bf16 %v101, %v101
    %v142 = vpack.c.bf16 %v102, %v102
    %v143 = vpack.c.bf16 %v103, %v103
    %v144 = vpack.c.bf16 %v104, %v104
    %v145 = vpack.c.bf16 %v105, %v105
    %v146 = vpack.c.bf16 %v106, %v106
    %v147 = vpack.c.bf16 %v107, %v107
    %v148 = vpack.c.bf16 %v108, %v108
    %v149 = vpack.c.bf16 %v109, %v109
    %v150 = vpack.c.bf16 %v110, %v110
    %v151 = vpack.c.bf16 %v111, %v111
    %v152 = vpack.c.bf16 %v112, %v112
    %v153 = vpack.c.bf16 %v113, %v113
    %v154 = vpack.c.bf16 %v114, %v114
    %v155 = vpack.c.bf16 %v115, %v115
    %v156 = vpack.c.bf16 %v116, %v116
    %v157 = vpack.c.bf16 %v117, %v117
    %v158 = vpack.c.bf16 %v118, %v118
    %v159 = vpack.c.bf16 %v119, %v119
    %v160 = vpack.c.bf16 %v120, %v120
    %v161 = vpack.c.bf16 %v121, %v121
    %v162 = vpack.c.bf16 %v122, %v122
    %v163 = vpack.c.bf16 %v123, %v123
    %v164 = vpack.c.bf16 %v124, %v124
    %v165 = vpack.c.bf16 %v125, %v125
    %v166 = vpack.c.bf16 %v126, %v126
    %v167 = vld [vmem:[#allocation4] sm:$0xf]
    %v168 = vld [vmem:[#allocation4 + $0x4] sm:$0xf]
    %v169 = vld [vmem:[#allocation4 + $0x8] sm:$0xf]
    %v170 = vld [vmem:[#allocation4 + $0xc] sm:$0xf]
    %v171 = vld [vmem:[#allocation4 + $0x10] sm:$0xf]
    %v172 = vld [vmem:[#allocation4 + $0x14] sm:$0xf]
    %v173 = vld [vmem:[#allocation4 + $0x18] sm:$0xf]
    %v174 = vld [vmem:[#allocation4 + $0x1c] sm:$0xf]
    %v175 = vld [vmem:[#allocation4 + $0x20] sm:$0xf]
    %v176 = vld [vmem:[#allocation4 + $0x24] sm:$0xf]
    %v177 = vld [vmem:[#allocation4 + $0x28] sm:$0xf]
    %v178 = vld [vmem:[#allocation4 + $0x2c] sm:$0xf]
    %v179 = vld [vmem:[#allocation4 + $0x30] sm:$0xf]
    %v180 = vld [vmem:[#allocation4 + $0x34] sm:$0xf]
    %v181 = vld [vmem:[#allocation4 + $0x38] sm:$0xf]
    %v182 = vld [vmem:[#allocation4 + $0x3c] sm:$0xf]
    %v183 = vld [vmem:[#allocation4 + $0x40] sm:$0xf]
    %v184 = vld [vmem:[#allocation4 + $0x44] sm:$0xf]
    %v185 = vld [vmem:[#allocation4 + $0x48] sm:$0xf]
    %v186 = vld [vmem:[#allocation4 + $0x4c] sm:$0xf]
    %v187 = vld [vmem:[#allocation4 + $0x50] sm:$0xf]
    %v188 = vld [vmem:[#allocation4 + $0x54] sm:$0xf]
    %v189 = vld [vmem:[#allocation4 + $0x58] sm:$0xf]
    %v190 = vld [vmem:[#allocation4 + $0x5c] sm:$0xf]
    %v191 = vld [vmem:[#allocation4 + $0x60] sm:$0xf]
    %v192 = vld [vmem:[#allocation4 + $0x64] sm:$0xf]
    %v193 = vld [vmem:[#allocation4 + $0x68] sm:$0xf]
    %v194 = vld [vmem:[#allocation4 + $0x6c] sm:$0xf]
    %v195 = vld [vmem:[#allocation4 + $0x70] sm:$0xf]
    %v196 = vld [vmem:[#allocation4 + $0x74] sm:$0xf]
    %v197 = vld [vmem:[#allocation4 + $0x78] sm:$0xf]
    %v198 = vld [vmem:[#allocation4 + $0x7c] sm:$0xf]
    %v199 = vld [vmem:[#allocation4 + $0x80] sm:$0xf]
    %v200 = vld [vmem:[#allocation4 + $0x84] sm:$0xf]
    %v201 = vld [vmem:[#allocation4 + $0x88] sm:$0xf]
    %v202 = vld [vmem:[#allocation4 + $0x8c] sm:$0xf]
    %v203 = vld [vmem:[#allocation4 + $0x90] sm:$0xf]
    %v204 = vld [vmem:[#allocation4 + $0x94] sm:$0xf]
    %v205 = vld [vmem:[#allocation4 + $0x98] sm:$0xf]
    %v206 = vld [vmem:[#allocation4 + $0x9c] sm:$0xf]
    %v207 = vld [vmem:[#allocation4 + $0xa0] sm:$0xf]
    %v208 = vld [vmem:[#allocation4 + $0xa4] sm:$0xf]
    %v209 = vld [vmem:[#allocation4 + $0xa8] sm:$0xf]
    %v210 = vld [vmem:[#allocation4 + $0xac] sm:$0xf]
    %v211 = vld [vmem:[#allocation4 + $0xb0] sm:$0xf]
    %v212 = vld [vmem:[#allocation4 + $0xb4] sm:$0xf]
    %v213 = vld [vmem:[#allocation4 + $0xb8] sm:$0xf]
    %v214 = vld [vmem:[#allocation4 + $0xbc] sm:$0xf]
    %v215 = vld [vmem:[#allocation4 + $0xc0] sm:$0xf]
    %v216 = vld [vmem:[#allocation4 + $0xc4] sm:$0xf]
    %v217 = vld [vmem:[#allocation4 + $0xc8] sm:$0xf]
    %v218 = vld [vmem:[#allocation4 + $0xcc] sm:$0xf]
    %v219 = vld [vmem:[#allocation4 + $0xd0] sm:$0xf]
    %v220 = vld [vmem:[#allocation4 + $0xd4] sm:$0xf]
    %v221 = vld [vmem:[#allocation4 + $0xd8] sm:$0xf]
    %v222 = vld [vmem:[#allocation4 + $0xdc] sm:$0xf]
    %v223 = vld [vmem:[#allocation4 + $0xe0] sm:$0xf]
    %v224 = vld [vmem:[#allocation4 + $0xe4] sm:$0xf]
    %v225 = vld [vmem:[#allocation4 + $0xe8] sm:$0xf]
    %v226 = vld [vmem:[#allocation4 + $0xec] sm:$0xf]
    %v227 = vld [vmem:[#allocation4 + $0xf0] sm:$0xf]
    %v228 = vld [vmem:[#allocation4 + $0xf4] sm:$0xf]
    %v229 = vld [vmem:[#allocation4 + $0xf8] sm:$0xf]
    %v230 = vld [vmem:[#allocation4 + $0xfc] sm:$0xf]
    %v231 = vld [vmem:[#allocation4 + $0x100] sm:$0xf]
    %v232 = vld [vmem:[#allocation4 + $0x104] sm:$0xf]
    %v233 = vld [vmem:[#allocation4 + $0x108] sm:$0xf]
    %v234 = vld [vmem:[#allocation4 + $0x10c] sm:$0xf]
    %v235 = vld [vmem:[#allocation4 + $0x110] sm:$0xf]
    %v236 = vld [vmem:[#allocation4 + $0x114] sm:$0xf]
    %v237 = vld [vmem:[#allocation4 + $0x118] sm:$0xf]
    %v238 = vld [vmem:[#allocation4 + $0x11c] sm:$0xf]
    %v239 = vld [vmem:[#allocation4 + $0x120] sm:$0xf]
    %v240 = vld [vmem:[#allocation4 + $0x124] sm:$0xf]
    %v241 = vld [vmem:[#allocation4 + $0x128] sm:$0xf]
    %v242 = vld [vmem:[#allocation4 + $0x12c] sm:$0xf]
    %v243 = vld [vmem:[#allocation4 + $0x130] sm:$0xf]
    %v244 = vld [vmem:[#allocation4 + $0x134] sm:$0xf]
    %v245 = vld [vmem:[#allocation4 + $0x138] sm:$0xf]
    %v246 = vld [vmem:[#allocation4 + $0x13c] sm:$0xf]
    %v247 = vld [vmem:[#allocation4 + $0x140] sm:$0xf]
    %v248 = vld [vmem:[#allocation4 + $0x144] sm:$0xf]
    %v249 = vld [vmem:[#allocation4 + $0x148] sm:$0xf]
    %v250 = vld [vmem:[#allocation4 + $0x14c] sm:$0xf]
    %v251 = vld [vmem:[#allocation4 + $0x150] sm:$0xf]
    %v252 = vld [vmem:[#allocation4 + $0x154] sm:$0xf]
    %v253 = vld [vmem:[#allocation4 + $0x158] sm:$0xf]
    %v254 = vld [vmem:[#allocation4 + $0x15c] sm:$0xf]
    %v255 = vld [vmem:[#allocation4 + $0x160] sm:$0xf]
    %v256 = vld [vmem:[#allocation4 + $0x164] sm:$0xf]
    %v257 = vld [vmem:[#allocation4 + $0x168] sm:$0xf]
    %v258 = vld [vmem:[#allocation4 + $0x16c] sm:$0xf]
    %v259 = vld [vmem:[#allocation4 + $0x170] sm:$0xf]
    %v260 = vld [vmem:[#allocation4 + $0x174] sm:$0xf]
    %v261 = vld [vmem:[#allocation4 + $0x178] sm:$0xf]
    %v262 = vld [vmem:[#allocation4 + $0x17c] sm:$0xf]
    %v263 = vld [vmem:[#allocation4 + $0x180] sm:$0xf]
    %v264 = vld [vmem:[#allocation4 + $0x184] sm:$0xf]
    %v265 = vld [vmem:[#allocation4 + $0x188] sm:$0xf]
    %v266 = vld [vmem:[#allocation4 + $0x18c] sm:$0xf]
    %v267 = vld [vmem:[#allocation4 + $0x190] sm:$0xf]
    %v268 = vld [vmem:[#allocation4 + $0x194] sm:$0xf]
    %v269 = vld [vmem:[#allocation4 + $0x198] sm:$0xf]
    %v270 = vld [vmem:[#allocation4 + $0x19c] sm:$0xf]
    %v271 = vld [vmem:[#allocation4 + $0x1a0] sm:$0xf]
    %v272 = vld [vmem:[#allocation4 + $0x1a4] sm:$0xf]
    %v273 = vld [vmem:[#allocation4 + $0x1a8] sm:$0xf]
    %v274 = vld [vmem:[#allocation4 + $0x1ac] sm:$0xf]
    %v275 = vld [vmem:[#allocation4 + $0x1b0] sm:$0xf]
    %v276 = vld [vmem:[#allocation4 + $0x1b4] sm:$0xf]
    %v277 = vld [vmem:[#allocation4 + $0x1b8] sm:$0xf]
    %v278 = vld [vmem:[#allocation4 + $0x1bc] sm:$0xf]
    %v279 = vld [vmem:[#allocation4 + $0x1c0] sm:$0xf]
    %v280 = vld [vmem:[#allocation4 + $0x1c4] sm:$0xf]
    %v281 = vld [vmem:[#allocation4 + $0x1c8] sm:$0xf]
    %v282 = vld [vmem:[#allocation4 + $0x1cc] sm:$0xf]
    %v283 = vld [vmem:[#allocation4 + $0x1d0] sm:$0xf]
    %v284 = vld [vmem:[#allocation4 + $0x1d4] sm:$0xf]
    %v285 = vld [vmem:[#allocation4 + $0x1d8] sm:$0xf]
    %v286 = vld [vmem:[#allocation4 + $0x1dc] sm:$0xf]
    %v287 = vld [vmem:[#allocation4 + $0x1e0] sm:$0xf]
    %v288 = vld [vmem:[#allocation4 + $0x1e4] sm:$0xf]
    %v289 = vld [vmem:[#allocation4 + $0x1e8] sm:$0xf]
    %v290 = vld [vmem:[#allocation4 + $0x1ec] sm:$0xf]
    %v291 = vld [vmem:[#allocation4 + $0x1f0] sm:$0xf]
    %v292 = vld [vmem:[#allocation4 + $0x1f4] sm:$0xf]
    %v293 = vld [vmem:[#allocation4 + $0x1f8] sm:$0xf]
    %v294 = vld [vmem:[#allocation4 + $0x1fc] sm:$0xf]
    %v295 = vld [vmem:[#allocation4 + $0x200] sm:$0xf]
    %v296 = vld [vmem:[#allocation4 + $0x204] sm:$0xf]
    %v297 = vld [vmem:[#allocation4 + $0x208] sm:$0xf]
    %v298 = vld [vmem:[#allocation4 + $0x20c] sm:$0xf]
    %v299 = vld [vmem:[#allocation4 + $0x210] sm:$0xf]
    %v300 = vld [vmem:[#allocation4 + $0x214] sm:$0xf]
    %v301 = vld [vmem:[#allocation4 + $0x218] sm:$0xf]
    %v302 = vld [vmem:[#allocation4 + $0x21c] sm:$0xf]
    %v303 = vld [vmem:[#allocation4 + $0x220] sm:$0xf]
    %v304 = vld [vmem:[#allocation4 + $0x224] sm:$0xf]
    %v305 = vld [vmem:[#allocation4 + $0x228] sm:$0xf]
    %v306 = vld [vmem:[#allocation4 + $0x22c] sm:$0xf]
    %v307 = vld [vmem:[#allocation4 + $0x230] sm:$0xf]
    %v308 = vld [vmem:[#allocation4 + $0x234] sm:$0xf]
    %v309 = vld [vmem:[#allocation4 + $0x238] sm:$0xf]
    %v310 = vld [vmem:[#allocation4 + $0x23c] sm:$0xf]
    %v311 = vld [vmem:[#allocation4 + $0x240] sm:$0xf]
    %v312 = vld [vmem:[#allocation4 + $0x244] sm:$0xf]
    %v313 = vld [vmem:[#allocation4 + $0x248] sm:$0xf]
    %v314 = vld [vmem:[#allocation4 + $0x24c] sm:$0xf]
    %v315 = vld [vmem:[#allocation4 + $0x250] sm:$0xf]
    %v316 = vld [vmem:[#allocation4 + $0x254] sm:$0xf]
    %v317 = vld [vmem:[#allocation4 + $0x258] sm:$0xf]
    %v318 = vld [vmem:[#allocation4 + $0x25c] sm:$0xf]
    %v319 = vld [vmem:[#allocation4 + $0x260] sm:$0xf]
    %v320 = vld [vmem:[#allocation4 + $0x264] sm:$0xf]
    %v321 = vld [vmem:[#allocation4 + $0x268] sm:$0xf]
    %v322 = vld [vmem:[#allocation4 + $0x26c] sm:$0xf]
    %v323 = vld [vmem:[#allocation4 + $0x270] sm:$0xf]
    %v324 = vld [vmem:[#allocation4 + $0x274] sm:$0xf]
    %v325 = vld [vmem:[#allocation4 + $0x278] sm:$0xf]
    %v326 = vld [vmem:[#allocation4 + $0x27c] sm:$0xf]
    %v327 = vld [vmem:[#allocation4 + $0x280] sm:$0xf]
    %v328 = vld [vmem:[#allocation4 + $0x284] sm:$0xf]
    %v329 = vld [vmem:[#allocation4 + $0x288] sm:$0xf]
    %v330 = vld [vmem:[#allocation4 + $0x28c] sm:$0xf]
    %v331 = vld [vmem:[#allocation4 + $0x290] sm:$0xf]
    %v332 = vld [vmem:[#allocation4 + $0x294] sm:$0xf]
    %v333 = vld [vmem:[#allocation4 + $0x298] sm:$0xf]
    %v334 = vld [vmem:[#allocation4 + $0x29c] sm:$0xf]
    %v335 = vld [vmem:[#allocation4 + $0x2a0] sm:$0xf]
    %v336 = vld [vmem:[#allocation4 + $0x2a4] sm:$0xf]
    %v337 = vld [vmem:[#allocation4 + $0x2a8] sm:$0xf]
    %v338 = vld [vmem:[#allocation4 + $0x2ac] sm:$0xf]
    %v339 = vld [vmem:[#allocation4 + $0x2b0] sm:$0xf]
    %v340 = vld [vmem:[#allocation4 + $0x2b4] sm:$0xf]
    %v341 = vld [vmem:[#allocation4 + $0x2b8] sm:$0xf]
    %v342 = vld [vmem:[#allocation4 + $0x2bc] sm:$0xf]
    %v343 = vld [vmem:[#allocation4 + $0x2c0] sm:$0xf]
    %v344 = vld [vmem:[#allocation4 + $0x2c4] sm:$0xf]
    %v345 = vld [vmem:[#allocation4 + $0x2c8] sm:$0xf]
    %v346 = vld [vmem:[#allocation4 + $0x2cc] sm:$0xf]
    %v347 = vld [vmem:[#allocation4 + $0x2d0] sm:$0xf]
    %v348 = vld [vmem:[#allocation4 + $0x2d4] sm:$0xf]
    %v349 = vld [vmem:[#allocation4 + $0x2d8] sm:$0xf]
    %v350 = vld [vmem:[#allocation4 + $0x2dc] sm:$0xf]
    %v351 = vld [vmem:[#allocation4 + $0x2e0] sm:$0xf]
    %v352 = vld [vmem:[#allocation4 + $0x2e4] sm:$0xf]
    %v353 = vld [vmem:[#allocation4 + $0x2e8] sm:$0xf]
    %v354 = vld [vmem:[#allocation4 + $0x2ec] sm:$0xf]
    %v355 = vld [vmem:[#allocation4 + $0x2f0] sm:$0xf]
    %v356 = vld [vmem:[#allocation4 + $0x2f4] sm:$0xf]
    %v357 = vld [vmem:[#allocation4 + $0x2f8] sm:$0xf]
    %v358 = vld [vmem:[#allocation4 + $0x2fc] sm:$0xf]
    %v359 = vld [vmem:[#allocation4 + $0x300] sm:$0xf]
    %v360 = vld [vmem:[#allocation4 + $0x304] sm:$0xf]
    %v361 = vld [vmem:[#allocation4 + $0x308] sm:$0xf]
    %v362 = vld [vmem:[#allocation4 + $0x30c] sm:$0xf]
    %v363 = vld [vmem:[#allocation4 + $0x310] sm:$0xf]
    %v364 = vld [vmem:[#allocation4 + $0x314] sm:$0xf]
    %v365 = vld [vmem:[#allocation4 + $0x318] sm:$0xf]
    %v366 = vld [vmem:[#allocation4 + $0x31c] sm:$0xf]
    %v367 = vld [vmem:[#allocation4 + $0x320] sm:$0xf]
    %v368 = vld [vmem:[#allocation4 + $0x324] sm:$0xf]
    %v369 = vld [vmem:[#allocation4 + $0x328] sm:$0xf]
    %v370 = vld [vmem:[#allocation4 + $0x32c] sm:$0xf]
    %v371 = vld [vmem:[#allocation4 + $0x330] sm:$0xf]
    %v372 = vld [vmem:[#allocation4 + $0x334] sm:$0xf]
    %v373 = vld [vmem:[#allocation4 + $0x338] sm:$0xf]
    %v374 = vld [vmem:[#allocation4 + $0x33c] sm:$0xf]
    %v375 = vld [vmem:[#allocation4 + $0x340] sm:$0xf]
    %v376 = vld [vmem:[#allocation4 + $0x344] sm:$0xf]
    %v377 = vld [vmem:[#allocation4 + $0x348] sm:$0xf]
    %v378 = vld [vmem:[#allocation4 + $0x34c] sm:$0xf]
    %v379 = vld [vmem:[#allocation4 + $0x350] sm:$0xf]
    %v380 = vld [vmem:[#allocation4 + $0x354] sm:$0xf]
    %v381 = vld [vmem:[#allocation4 + $0x358] sm:$0xf]
    %v382 = vld [vmem:[#allocation4 + $0x35c] sm:$0xf]
    %v383 = vld [vmem:[#allocation4 + $0x360] sm:$0xf]
    %v384 = vld [vmem:[#allocation4 + $0x364] sm:$0xf]
    %v385 = vld [vmem:[#allocation4 + $0x368] sm:$0xf]
    %v386 = vld [vmem:[#allocation4 + $0x36c] sm:$0xf]
    %v387 = vld [vmem:[#allocation4 + $0x370] sm:$0xf]
    %v388 = vld [vmem:[#allocation4 + $0x374] sm:$0xf]
    %v389 = vld [vmem:[#allocation4 + $0x378] sm:$0xf]
    %v390 = vld [vmem:[#allocation4 + $0x37c] sm:$0xf]
    %v391 = vld [vmem:[#allocation4 + $0x380] sm:$0xf]
    %v392 = vld [vmem:[#allocation4 + $0x384] sm:$0xf]
    %v393 = vld [vmem:[#allocation4 + $0x388] sm:$0xf]
    %v394 = vld [vmem:[#allocation4 + $0x38c] sm:$0xf]
    %v395 = vld [vmem:[#allocation4 + $0x390] sm:$0xf]
    %v396 = vld [vmem:[#allocation4 + $0x394] sm:$0xf]
    %v397 = vld [vmem:[#allocation4 + $0x398] sm:$0xf]
    %v398 = vld [vmem:[#allocation4 + $0x39c] sm:$0xf]
    %v399 = vld [vmem:[#allocation4 + $0x3a0] sm:$0xf]
    %v400 = vld [vmem:[#allocation4 + $0x3a4] sm:$0xf]
    %v401 = vld [vmem:[#allocation4 + $0x3a8] sm:$0xf]
    %v402 = vld [vmem:[#allocation4 + $0x3ac] sm:$0xf]
    %v403 = vld [vmem:[#allocation4 + $0x3b0] sm:$0xf]
    %v404 = vld [vmem:[#allocation4 + $0x3b4] sm:$0xf]
    %v405 = vld [vmem:[#allocation4 + $0x3b8] sm:$0xf]
    %v406 = vld [vmem:[#allocation4 + $0x3bc] sm:$0xf]
    %v407 = vld [vmem:[#allocation4 + $0x3c0] sm:$0xf]
    %v408 = vld [vmem:[#allocation4 + $0x3c4] sm:$0xf]
    %v409 = vld [vmem:[#allocation4 + $0x3c8] sm:$0xf]
    %v410 = vld [vmem:[#allocation4 + $0x3cc] sm:$0xf]
    %v411 = vld [vmem:[#allocation4 + $0x3d0] sm:$0xf]
    %v412 = vld [vmem:[#allocation4 + $0x3d4] sm:$0xf]
    %v413 = vld [vmem:[#allocation4 + $0x3d8] sm:$0xf]
    %v414 = vld [vmem:[#allocation4 + $0x3dc] sm:$0xf]
    %v415 = vld [vmem:[#allocation4 + $0x3e0] sm:$0xf]
    %v416 = vld [vmem:[#allocation4 + $0x3e4] sm:$0xf]
    %v417 = vld [vmem:[#allocation4 + $0x3e8] sm:$0xf]
    %v418 = vld [vmem:[#allocation4 + $0x3ec] sm:$0xf]
    %v419 = vld [vmem:[#allocation4 + $0x3f0] sm:$0xf]
    %v420 = vld [vmem:[#allocation4 + $0x3f4] sm:$0xf]
    %v421 = vld [vmem:[#allocation4 + $0x3f8] sm:$0xf]
    %v422 = vld [vmem:[#allocation4 + $0x3fc] sm:$0xf]
    %v423 = vld [vmem:[#allocation4 + $0x400] sm:$0xf]
    %v424 = vld [vmem:[#allocation4 + $0x404] sm:$0xf]
    %v425 = vld [vmem:[#allocation4 + $0x408] sm:$0xf]
    %v426 = vld [vmem:[#allocation4 + $0x40c] sm:$0xf]
    %v427 = vld [vmem:[#allocation4 + $0x410] sm:$0xf]
    %v428 = vld [vmem:[#allocation4 + $0x414] sm:$0xf]
    %v429 = vld [vmem:[#allocation4 + $0x418] sm:$0xf]
    %v430 = vld [vmem:[#allocation4 + $0x41c] sm:$0xf]
    %v431 = vld [vmem:[#allocation4 + $0x420] sm:$0xf]
    %v432 = vld [vmem:[#allocation4 + $0x424] sm:$0xf]
    %v433 = vld [vmem:[#allocation4 + $0x428] sm:$0xf]
    %v434 = vld [vmem:[#allocation4 + $0x42c] sm:$0xf]
    %v435 = vld [vmem:[#allocation4 + $0x430] sm:$0xf]
    %v436 = vld [vmem:[#allocation4 + $0x434] sm:$0xf]
    %v437 = vld [vmem:[#allocation4 + $0x438] sm:$0xf]
    %v438 = vld [vmem:[#allocation4 + $0x43c] sm:$0xf]
    %v439 = vld [vmem:[#allocation4 + $0x440] sm:$0xf]
    %v440 = vld [vmem:[#allocation4 + $0x444] sm:$0xf]
    %v441 = vld [vmem:[#allocation4 + $0x448] sm:$0xf]
    %v442 = vld [vmem:[#allocation4 + $0x44c] sm:$0xf]
    %v443 = vld [vmem:[#allocation4 + $0x450] sm:$0xf]
    %v444 = vld [vmem:[#allocation4 + $0x454] sm:$0xf]
    %v445 = vld [vmem:[#allocation4 + $0x458] sm:$0xf]
    %v446 = vld [vmem:[#allocation4 + $0x45c] sm:$0xf]
    %v447 = vld [vmem:[#allocation4 + $0x460] sm:$0xf]
    %v448 = vld [vmem:[#allocation4 + $0x464] sm:$0xf]
    %v449 = vld [vmem:[#allocation4 + $0x468] sm:$0xf]
    %v450 = vld [vmem:[#allocation4 + $0x46c] sm:$0xf]
    %v451 = vld [vmem:[#allocation4 + $0x470] sm:$0xf]
    %v452 = vld [vmem:[#allocation4 + $0x474] sm:$0xf]
    %v453 = vld [vmem:[#allocation4 + $0x478] sm:$0xf]
    %v454 = vld [vmem:[#allocation4 + $0x47c] sm:$0xf]
    %v455 = vld [vmem:[#allocation4 + $0x480] sm:$0xf]
    %v456 = vld [vmem:[#allocation4 + $0x484] sm:$0xf]
    %v457 = vld [vmem:[#allocation4 + $0x488] sm:$0xf]
    %v458 = vld [vmem:[#allocation4 + $0x48c] sm:$0xf]
    %v459 = vld [vmem:[#allocation4 + $0x490] sm:$0xf]
    %v460 = vld [vmem:[#allocation4 + $0x494] sm:$0xf]
    %v461 = vld [vmem:[#allocation4 + $0x498] sm:$0xf]
    %v462 = vld [vmem:[#allocation4 + $0x49c] sm:$0xf]
    %v463 = vld [vmem:[#allocation4 + $0x4a0] sm:$0xf]
    %v464 = vld [vmem:[#allocation4 + $0x4a4] sm:$0xf]
    %v465 = vld [vmem:[#allocation4 + $0x4a8] sm:$0xf]
    %v466 = vld [vmem:[#allocation4 + $0x4ac] sm:$0xf]
    %v467 = vld [vmem:[#allocation4 + $0x4b0] sm:$0xf]
    %v468 = vld [vmem:[#allocation4 + $0x4b4] sm:$0xf]
    %v469 = vld [vmem:[#allocation4 + $0x4b8] sm:$0xf]
    %v470 = vld [vmem:[#allocation4 + $0x4bc] sm:$0xf]
    %v471 = vld [vmem:[#allocation4 + $0x4c0] sm:$0xf]
    %v472 = vld [vmem:[#allocation4 + $0x4c4] sm:$0xf]
    %v473 = vld [vmem:[#allocation4 + $0x4c8] sm:$0xf]
    %v474 = vld [vmem:[#allocation4 + $0x4cc] sm:$0xf]
    %v475 = vld [vmem:[#allocation4 + $0x4d0] sm:$0xf]
    %v476 = vld [vmem:[#allocation4 + $0x4d4] sm:$0xf]
    %v477 = vld [vmem:[#allocation4 + $0x4d8] sm:$0xf]
    %v478 = vld [vmem:[#allocation4 + $0x4dc] sm:$0xf]
    %v479 = vld [vmem:[#allocation4 + $0x4e0] sm:$0xf]
    %v480 = vld [vmem:[#allocation4 + $0x4e4] sm:$0xf]
    %v481 = vld [vmem:[#allocation4 + $0x4e8] sm:$0xf]
    %v482 = vld [vmem:[#allocation4 + $0x4ec] sm:$0xf]
    %v483 = vld [vmem:[#allocation4 + $0x4f0] sm:$0xf]
    %v484 = vld [vmem:[#allocation4 + $0x4f4] sm:$0xf]
    %v485 = vld [vmem:[#allocation4 + $0x4f8] sm:$0xf]
    %v486 = vld [vmem:[#allocation4 + $0x4fc] sm:$0xf]
    %v487 = vld [vmem:[#allocation4 + $0x500] sm:$0xf]
    %v488 = vld [vmem:[#allocation4 + $0x504] sm:$0xf]
    %v489 = vld [vmem:[#allocation4 + $0x508] sm:$0xf]
    %v490 = vld [vmem:[#allocation4 + $0x50c] sm:$0xf]
    %v491 = vld [vmem:[#allocation4 + $0x510] sm:$0xf]
    %v492 = vld [vmem:[#allocation4 + $0x514] sm:$0xf]
    %v493 = vld [vmem:[#allocation4 + $0x518] sm:$0xf]
    %v494 = vld [vmem:[#allocation4 + $0x51c] sm:$0xf]
    %v495 = vld [vmem:[#allocation4 + $0x520] sm:$0xf]
    %v496 = vld [vmem:[#allocation4 + $0x524] sm:$0xf]
    %v497 = vld [vmem:[#allocation4 + $0x528] sm:$0xf]
    %v498 = vld [vmem:[#allocation4 + $0x52c] sm:$0xf]
    %v499 = vld [vmem:[#allocation4 + $0x530] sm:$0xf]
    %v500 = vld [vmem:[#allocation4 + $0x534] sm:$0xf]
    %v501 = vld [vmem:[#allocation4 + $0x538] sm:$0xf]
    %v502 = vld [vmem:[#allocation4 + $0x53c] sm:$0xf]
    %v503 = vld [vmem:[#allocation4 + $0x540] sm:$0xf]
    %v504 = vld [vmem:[#allocation4 + $0x544] sm:$0xf]
    %v505 = vld [vmem:[#allocation4 + $0x548] sm:$0xf]
    %v506 = vld [vmem:[#allocation4 + $0x54c] sm:$0xf]
    %v507 = vld [vmem:[#allocation4 + $0x550] sm:$0xf]
    %v508 = vld [vmem:[#allocation4 + $0x554] sm:$0xf]
    %v509 = vld [vmem:[#allocation4 + $0x558] sm:$0xf]
    %v510 = vld [vmem:[#allocation4 + $0x55c] sm:$0xf]
    %v511 = vld [vmem:[#allocation4 + $0x560] sm:$0xf]
    %v512 = vld [vmem:[#allocation4 + $0x564] sm:$0xf]
    %v513 = vld [vmem:[#allocation4 + $0x568] sm:$0xf]
    %v514 = vld [vmem:[#allocation4 + $0x56c] sm:$0xf]
    %v515 = vld [vmem:[#allocation4 + $0x570] sm:$0xf]
    %v516 = vld [vmem:[#allocation4 + $0x574] sm:$0xf]
    %v517 = vld [vmem:[#allocation4 + $0x578] sm:$0xf]
    %v518 = vld [vmem:[#allocation4 + $0x57c] sm:$0xf]
    %v519 = vld [vmem:[#allocation4 + $0x580] sm:$0xf]
    %v520 = vld [vmem:[#allocation4 + $0x584] sm:$0xf]
    %v521 = vld [vmem:[#allocation4 + $0x588] sm:$0xf]
    %v522 = vld [vmem:[#allocation4 + $0x58c] sm:$0xf]
    %v523 = vld [vmem:[#allocation4 + $0x590] sm:$0xf]
    %v524 = vld [vmem:[#allocation4 + $0x594] sm:$0xf]
    %v525 = vld [vmem:[#allocation4 + $0x598] sm:$0xf]
    %v526 = vld [vmem:[#allocation4 + $0x59c] sm:$0xf]
    %v527 = vld [vmem:[#allocation4 + $0x5a0] sm:$0xf]
    %v528 = vld [vmem:[#allocation4 + $0x5a4] sm:$0xf]
    %v529 = vld [vmem:[#allocation4 + $0x5a8] sm:$0xf]
    %v530 = vld [vmem:[#allocation4 + $0x5ac] sm:$0xf]
    %v531 = vld [vmem:[#allocation4 + $0x5b0] sm:$0xf]
    %v532 = vld [vmem:[#allocation4 + $0x5b4] sm:$0xf]
    %v533 = vld [vmem:[#allocation4 + $0x5b8] sm:$0xf]
    %v534 = vld [vmem:[#allocation4 + $0x5bc] sm:$0xf]
    %v535 = vld [vmem:[#allocation4 + $0x5c0] sm:$0xf]
    %v536 = vld [vmem:[#allocation4 + $0x5c4] sm:$0xf]
    %v537 = vld [vmem:[#allocation4 + $0x5c8] sm:$0xf]
    %v538 = vld [vmem:[#allocation4 + $0x5cc] sm:$0xf]
    %v539 = vld [vmem:[#allocation4 + $0x5d0] sm:$0xf]
    %v540 = vld [vmem:[#allocation4 + $0x5d4] sm:$0xf]
    %v541 = vld [vmem:[#allocation4 + $0x5d8] sm:$0xf]
    %v542 = vld [vmem:[#allocation4 + $0x5dc] sm:$0xf]
    %v543 = vld [vmem:[#allocation4 + $0x5e0] sm:$0xf]
    %v544 = vld [vmem:[#allocation4 + $0x5e4] sm:$0xf]
    %v545 = vld [vmem:[#allocation4 + $0x5e8] sm:$0xf]
    %v546 = vld [vmem:[#allocation4 + $0x5ec] sm:$0xf]
    %v547 = vld [vmem:[#allocation4 + $0x5f0] sm:$0xf]
    %v548 = vld [vmem:[#allocation4 + $0x5f4] sm:$0xf]
    %v549 = vld [vmem:[#allocation4 + $0x5f8] sm:$0xf]
    %v550 = vld [vmem:[#allocation4 + $0x5fc] sm:$0xf]
    %v551 = vld [vmem:[#allocation4 + $0x600] sm:$0xf]
    %v552 = vld [vmem:[#allocation4 + $0x604] sm:$0xf]
    %v553 = vld [vmem:[#allocation4 + $0x608] sm:$0xf]
    %v554 = vld [vmem:[#allocation4 + $0x60c] sm:$0xf]
    %v555 = vld [vmem:[#allocation4 + $0x610] sm:$0xf]
    %v556 = vld [vmem:[#allocation4 + $0x614] sm:$0xf]
    %v557 = vld [vmem:[#allocation4 + $0x618] sm:$0xf]
    %v558 = vld [vmem:[#allocation4 + $0x61c] sm:$0xf]
    %v559 = vld [vmem:[#allocation4 + $0x620] sm:$0xf]
    %v560 = vld [vmem:[#allocation4 + $0x624] sm:$0xf]
    %v561 = vld [vmem:[#allocation4 + $0x628] sm:$0xf]
    %v562 = vld [vmem:[#allocation4 + $0x62c] sm:$0xf]
    %v563 = vld [vmem:[#allocation4 + $0x630] sm:$0xf]
    %v564 = vld [vmem:[#allocation4 + $0x634] sm:$0xf]
    %v565 = vld [vmem:[#allocation4 + $0x638] sm:$0xf]
    %v566 = vld [vmem:[#allocation4 + $0x63c] sm:$0xf]
    %v567 = vld [vmem:[#allocation4 + $0x640] sm:$0xf]
    %v568 = vld [vmem:[#allocation4 + $0x644] sm:$0xf]
    %v569 = vld [vmem:[#allocation4 + $0x648] sm:$0xf]
    %v570 = vld [vmem:[#allocation4 + $0x64c] sm:$0xf]
    %v571 = vld [vmem:[#allocation4 + $0x650] sm:$0xf]
    %v572 = vld [vmem:[#allocation4 + $0x654] sm:$0xf]
    %v573 = vld [vmem:[#allocation4 + $0x658] sm:$0xf]
    %v574 = vld [vmem:[#allocation4 + $0x65c] sm:$0xf]
    %v575 = vld [vmem:[#allocation4 + $0x660] sm:$0xf]
    %v576 = vld [vmem:[#allocation4 + $0x664] sm:$0xf]
    %v577 = vld [vmem:[#allocation4 + $0x668] sm:$0xf]
    %v578 = vld [vmem:[#allocation4 + $0x66c] sm:$0xf]
    %v579 = vld [vmem:[#allocation4 + $0x670] sm:$0xf]
    %v580 = vld [vmem:[#allocation4 + $0x674] sm:$0xf]
    %v581 = vld [vmem:[#allocation4 + $0x678] sm:$0xf]
    %v582 = vld [vmem:[#allocation4 + $0x67c] sm:$0xf]
    %v583 = vld [vmem:[#allocation4 + $0x680] sm:$0xf]
    %v584 = vld [vmem:[#allocation4 + $0x684] sm:$0xf]
    %v585 = vld [vmem:[#allocation4 + $0x688] sm:$0xf]
    %v586 = vld [vmem:[#allocation4 + $0x68c] sm:$0xf]
    %v587 = vld [vmem:[#allocation4 + $0x690] sm:$0xf]
    %v588 = vld [vmem:[#allocation4 + $0x694] sm:$0xf]
    %v589 = vld [vmem:[#allocation4 + $0x698] sm:$0xf]
    %v590 = vld [vmem:[#allocation4 + $0x69c] sm:$0xf]
    %v591 = vld [vmem:[#allocation4 + $0x6a0] sm:$0xf]
    %v592 = vld [vmem:[#allocation4 + $0x6a4] sm:$0xf]
    %v593 = vld [vmem:[#allocation4 + $0x6a8] sm:$0xf]
    %v594 = vld [vmem:[#allocation4 + $0x6ac] sm:$0xf]
    %v595 = vld [vmem:[#allocation4 + $0x6b0] sm:$0xf]
    %v596 = vld [vmem:[#allocation4 + $0x6b4] sm:$0xf]
    %v597 = vld [vmem:[#allocation4 + $0x6b8] sm:$0xf]
    %v598 = vld [vmem:[#allocation4 + $0x6bc] sm:$0xf]
    %v599 = vld [vmem:[#allocation4 + $0x6c0] sm:$0xf]
    %v600 = vld [vmem:[#allocation4 + $0x6c4] sm:$0xf]
    %v601 = vld [vmem:[#allocation4 + $0x6c8] sm:$0xf]
    %v602 = vld [vmem:[#allocation4 + $0x6cc] sm:$0xf]
    %v603 = vld [vmem:[#allocation4 + $0x6d0] sm:$0xf]
    %v604 = vld [vmem:[#allocation4 + $0x6d4] sm:$0xf]
    %v605 = vld [vmem:[#allocation4 + $0x6d8] sm:$0xf]
    %v606 = vld [vmem:[#allocation4 + $0x6dc] sm:$0xf]
    %v607 = vld [vmem:[#allocation4 + $0x6e0] sm:$0xf]
    %v608 = vld [vmem:[#allocation4 + $0x6e4] sm:$0xf]
    %v609 = vld [vmem:[#allocation4 + $0x6e8] sm:$0xf]
    %v610 = vld [vmem:[#allocation4 + $0x6ec] sm:$0xf]
    %v611 = vld [vmem:[#allocation4 + $0x6f0] sm:$0xf]
    %v612 = vld [vmem:[#allocation4 + $0x6f4] sm:$0xf]
    %v613 = vld [vmem:[#allocation4 + $0x6f8] sm:$0xf]
    %v614 = vld [vmem:[#allocation4 + $0x6fc] sm:$0xf]
    %v615 = vld [vmem:[#allocation4 + $0x700] sm:$0xf]
    %v616 = vld [vmem:[#allocation4 + $0x704] sm:$0xf]
    %v617 = vld [vmem:[#allocation4 + $0x708] sm:$0xf]
    %v618 = vld [vmem:[#allocation4 + $0x70c] sm:$0xf]
    %v619 = vld [vmem:[#allocation4 + $0x710] sm:$0xf]
    %v620 = vld [vmem:[#allocation4 + $0x714] sm:$0xf]
    %v621 = vld [vmem:[#allocation4 + $0x718] sm:$0xf]
    %v622 = vld [vmem:[#allocation4 + $0x71c] sm:$0xf]
    %v623 = vld [vmem:[#allocation4 + $0x720] sm:$0xf]
    %v624 = vld [vmem:[#allocation4 + $0x724] sm:$0xf]
    %v625 = vld [vmem:[#allocation4 + $0x728] sm:$0xf]
    %v626 = vld [vmem:[#allocation4 + $0x72c] sm:$0xf]
    %v627 = vld [vmem:[#allocation4 + $0x730] sm:$0xf]
    %v628 = vld [vmem:[#allocation4 + $0x734] sm:$0xf]
    %v629 = vld [vmem:[#allocation4 + $0x738] sm:$0xf]
    %v630 = vld [vmem:[#allocation4 + $0x73c] sm:$0xf]
    %v631 = vld [vmem:[#allocation4 + $0x740] sm:$0xf]
    %v632 = vld [vmem:[#allocation4 + $0x744] sm:$0xf]
    %v633 = vld [vmem:[#allocation4 + $0x748] sm:$0xf]
    %v634 = vld [vmem:[#allocation4 + $0x74c] sm:$0xf]
    %v635 = vld [vmem:[#allocation4 + $0x750] sm:$0xf]
    %v636 = vld [vmem:[#allocation4 + $0x754] sm:$0xf]
    %v637 = vld [vmem:[#allocation4 + $0x758] sm:$0xf]
    %v638 = vld [vmem:[#allocation4 + $0x75c] sm:$0xf]
    %v639 = vld [vmem:[#allocation4 + $0x760] sm:$0xf]
    %v640 = vld [vmem:[#allocation4 + $0x764] sm:$0xf]
    %v641 = vld [vmem:[#allocation4 + $0x768] sm:$0xf]
    %v642 = vld [vmem:[#allocation4 + $0x76c] sm:$0xf]
    %v643 = vld [vmem:[#allocation4 + $0x770] sm:$0xf]
    %v644 = vld [vmem:[#allocation4 + $0x774] sm:$0xf]
    %v645 = vld [vmem:[#allocation4 + $0x778] sm:$0xf]
    %v646 = vld [vmem:[#allocation4 + $0x77c] sm:$0xf]
    %v647 = vld [vmem:[#allocation4 + $0x780] sm:$0xf]
    %v648 = vld [vmem:[#allocation4 + $0x784] sm:$0xf]
    %v649 = vld [vmem:[#allocation4 + $0x788] sm:$0xf]
    %v650 = vld [vmem:[#allocation4 + $0x78c] sm:$0xf]
    %v651 = vld [vmem:[#allocation4 + $0x790] sm:$0xf]
    %v652 = vld [vmem:[#allocation4 + $0x794] sm:$0xf]
    %v653 = vld [vmem:[#allocation4 + $0x798] sm:$0xf]
    %v654 = vld [vmem:[#allocation4 + $0x79c] sm:$0xf]
    %v655 = vld [vmem:[#allocation4 + $0x7a0] sm:$0xf]
    %v656 = vld [vmem:[#allocation4 + $0x7a4] sm:$0xf]
    %v657 = vld [vmem:[#allocation4 + $0x7a8] sm:$0xf]
    %v658 = vld [vmem:[#allocation4 + $0x7ac] sm:$0xf]
    %v659 = vld [vmem:[#allocation4 + $0x7b0] sm:$0xf]
    %v660 = vld [vmem:[#allocation4 + $0x7b4] sm:$0xf]
    %v661 = vld [vmem:[#allocation4 + $0x7b8] sm:$0xf]
    %v662 = vld [vmem:[#allocation4 + $0x7bc] sm:$0xf]
    %v663 = vld [vmem:[#allocation4 + $0x7c0] sm:$0xf]
    %v664 = vld [vmem:[#allocation4 + $0x7c4] sm:$0xf]
    %v665 = vld [vmem:[#allocation4 + $0x7c8] sm:$0xf]
    %v666 = vld [vmem:[#allocation4 + $0x7cc] sm:$0xf]
    %v667 = vld [vmem:[#allocation4 + $0x7d0] sm:$0xf]
    %v668 = vld [vmem:[#allocation4 + $0x7d4] sm:$0xf]
    %v669 = vld [vmem:[#allocation4 + $0x7d8] sm:$0xf]
    %v670 = vld [vmem:[#allocation4 + $0x7dc] sm:$0xf]
    %v671 = vld [vmem:[#allocation4 + $0x7e0] sm:$0xf]
    %v672 = vld [vmem:[#allocation4 + $0x7e4] sm:$0xf]
    %v673 = vld [vmem:[#allocation4 + $0x7e8] sm:$0xf]
    %v674 = vld [vmem:[#allocation4 + $0x7ec] sm:$0xf]
    %v675 = vld [vmem:[#allocation4 + $0x7f0] sm:$0xf]
    %v676 = vld [vmem:[#allocation4 + $0x7f4] sm:$0xf]
    %v677 = vld [vmem:[#allocation4 + $0x7f8] sm:$0xf]
    %v678 = vld [vmem:[#allocation4 + $0x7fc] sm:$0xf]
    %v679 = vld [vmem:[#allocation4 + $0x800] sm:$0xf]
    %v680 = vld [vmem:[#allocation4 + $0x804] sm:$0xf]
    %v681 = vld [vmem:[#allocation4 + $0x808] sm:$0xf]
    %v682 = vld [vmem:[#allocation4 + $0x80c] sm:$0xf]
    %v683 = vld [vmem:[#allocation4 + $0x810] sm:$0xf]
    %v684 = vld [vmem:[#allocation4 + $0x814] sm:$0xf]
    %v685 = vld [vmem:[#allocation4 + $0x818] sm:$0xf]
    %v686 = vld [vmem:[#allocation4 + $0x81c] sm:$0xf]
    %v687 = vld [vmem:[#allocation4 + $0x820] sm:$0xf]
    %v688 = vld [vmem:[#allocation4 + $0x824] sm:$0xf]
    %v689 = vld [vmem:[#allocation4 + $0x828] sm:$0xf]
    %v690 = vld [vmem:[#allocation4 + $0x82c] sm:$0xf]
    %v691 = vld [vmem:[#allocation4 + $0x830] sm:$0xf]
    %v692 = vld [vmem:[#allocation4 + $0x834] sm:$0xf]
    %v693 = vld [vmem:[#allocation4 + $0x838] sm:$0xf]
    %v694 = vld [vmem:[#allocation4 + $0x83c] sm:$0xf]
    %v695 = vld [vmem:[#allocation4 + $0x840] sm:$0xf]
    %v696 = vld [vmem:[#allocation4 + $0x844] sm:$0xf]
    %v697 = vld [vmem:[#allocation4 + $0x848] sm:$0xf]
    %v698 = vld [vmem:[#allocation4 + $0x84c] sm:$0xf]
    %v699 = vld [vmem:[#allocation4 + $0x850] sm:$0xf]
    %v700 = vld [vmem:[#allocation4 + $0x854] sm:$0xf]
    %v701 = vld [vmem:[#allocation4 + $0x858] sm:$0xf]
    %v702 = vld [vmem:[#allocation4 + $0x85c] sm:$0xf]
    %v703 = vld [vmem:[#allocation4 + $0x860] sm:$0xf]
    %v704 = vld [vmem:[#allocation4 + $0x864] sm:$0xf]
    %v705 = vld [vmem:[#allocation4 + $0x868] sm:$0xf]
    %v706 = vld [vmem:[#allocation4 + $0x86c] sm:$0xf]
    %v707 = vld [vmem:[#allocation4 + $0x870] sm:$0xf]
    %v708 = vld [vmem:[#allocation4 + $0x874] sm:$0xf]
    %v709 = vld [vmem:[#allocation4 + $0x878] sm:$0xf]
    %v710 = vld [vmem:[#allocation4 + $0x87c] sm:$0xf]
    %v711 = vld [vmem:[#allocation4 + $0x880] sm:$0xf]
    %v712 = vld [vmem:[#allocation4 + $0x884] sm:$0xf]
    %v713 = vld [vmem:[#allocation4 + $0x888] sm:$0xf]
    %v714 = vld [vmem:[#allocation4 + $0x88c] sm:$0xf]
    %v715 = vld [vmem:[#allocation4 + $0x890] sm:$0xf]
    %v716 = vld [vmem:[#allocation4 + $0x894] sm:$0xf]
    %v717 = vld [vmem:[#allocation4 + $0x898] sm:$0xf]
    %v718 = vld [vmem:[#allocation4 + $0x89c] sm:$0xf]
    %v719 = vld [vmem:[#allocation4 + $0x8a0] sm:$0xf]
    %v720 = vld [vmem:[#allocation4 + $0x8a4] sm:$0xf]
    %v721 = vld [vmem:[#allocation4 + $0x8a8] sm:$0xf]
    %v722 = vld [vmem:[#allocation4 + $0x8ac] sm:$0xf]
    %v723 = vld [vmem:[#allocation4 + $0x8b0] sm:$0xf]
    %v724 = vld [vmem:[#allocation4 + $0x8b4] sm:$0xf]
    %v725 = vld [vmem:[#allocation4 + $0x8b8] sm:$0xf]
    %v726 = vld [vmem:[#allocation4 + $0x8bc] sm:$0xf]
    %v727 = vld [vmem:[#allocation4 + $0x8c0] sm:$0xf]
    %v728 = vld [vmem:[#allocation4 + $0x8c4] sm:$0xf]
    %v729 = vld [vmem:[#allocation4 + $0x8c8] sm:$0xf]
    %v730 = vld [vmem:[#allocation4 + $0x8cc] sm:$0xf]
    %v731 = vld [vmem:[#allocation4 + $0x8d0] sm:$0xf]
    %v732 = vld [vmem:[#allocation4 + $0x8d4] sm:$0xf]
    %v733 = vld [vmem:[#allocation4 + $0x8d8] sm:$0xf]
    %v734 = vld [vmem:[#allocation4 + $0x8dc] sm:$0xf]
    %v735 = vld [vmem:[#allocation4 + $0x8e0] sm:$0xf]
    %v736 = vld [vmem:[#allocation4 + $0x8e4] sm:$0xf]
    %v737 = vld [vmem:[#allocation4 + $0x8e8] sm:$0xf]
    %v738 = vld [vmem:[#allocation4 + $0x8ec] sm:$0xf]
    %v739 = vld [vmem:[#allocation4 + $0x8f0] sm:$0xf]
    %v740 = vld [vmem:[#allocation4 + $0x8f4] sm:$0xf]
    %v741 = vld [vmem:[#allocation4 + $0x8f8] sm:$0xf]
    %v742 = vld [vmem:[#allocation4 + $0x8fc] sm:$0xf]
    %v743 = vld [vmem:[#allocation4 + $0x900] sm:$0xf]
    %v744 = vld [vmem:[#allocation4 + $0x904] sm:$0xf]
    %v745 = vld [vmem:[#allocation4 + $0x908] sm:$0xf]
    %v746 = vld [vmem:[#allocation4 + $0x90c] sm:$0xf]
    %v747 = vld [vmem:[#allocation4 + $0x910] sm:$0xf]
    %v748 = vld [vmem:[#allocation4 + $0x914] sm:$0xf]
    %v749 = vld [vmem:[#allocation4 + $0x918] sm:$0xf]
    %v750 = vld [vmem:[#allocation4 + $0x91c] sm:$0xf]
    %v751 = vld [vmem:[#allocation4 + $0x920] sm:$0xf]
    %v752 = vld [vmem:[#allocation4 + $0x924] sm:$0xf]
    %v753 = vld [vmem:[#allocation4 + $0x928] sm:$0xf]
    %v754 = vld [vmem:[#allocation4 + $0x92c] sm:$0xf]
    %v755 = vld [vmem:[#allocation4 + $0x930] sm:$0xf]
    %v756 = vld [vmem:[#allocation4 + $0x934] sm:$0xf]
    %v757 = vld [vmem:[#allocation4 + $0x938] sm:$0xf]
    %v758 = vld [vmem:[#allocation4 + $0x93c] sm:$0xf]
    %v759 = vld [vmem:[#allocation4 + $0x940] sm:$0xf]
    %v760 = vld [vmem:[#allocation4 + $0x944] sm:$0xf]
    %v761 = vld [vmem:[#allocation4 + $0x948] sm:$0xf]
    %v762 = vld [vmem:[#allocation4 + $0x94c] sm:$0xf]
    %v763 = vld [vmem:[#allocation4 + $0x950] sm:$0xf]
    %v764 = vld [vmem:[#allocation4 + $0x954] sm:$0xf]
    %v765 = vld [vmem:[#allocation4 + $0x958] sm:$0xf]
    %v766 = vld [vmem:[#allocation4 + $0x95c] sm:$0xf]
    %v767 = vld [vmem:[#allocation4 + $0x960] sm:$0xf]
    %v768 = vld [vmem:[#allocation4 + $0x964] sm:$0xf]
    %v769 = vld [vmem:[#allocation4 + $0x968] sm:$0xf]
    %v770 = vld [vmem:[#allocation4 + $0x96c] sm:$0xf]
    %v771 = vld [vmem:[#allocation4 + $0x970] sm:$0xf]
    %v772 = vld [vmem:[#allocation4 + $0x974] sm:$0xf]
    %v773 = vld [vmem:[#allocation4 + $0x978] sm:$0xf]
    %v774 = vld [vmem:[#allocation4 + $0x97c] sm:$0xf]
    %v775 = vld [vmem:[#allocation4 + $0x980] sm:$0xf]
    %v776 = vld [vmem:[#allocation4 + $0x984] sm:$0xf]
    %v777 = vld [vmem:[#allocation4 + $0x988] sm:$0xf]
    %v778 = vld [vmem:[#allocation4 + $0x98c] sm:$0xf]
    %v779 = vld [vmem:[#allocation4 + $0x990] sm:$0xf]
    %v780 = vld [vmem:[#allocation4 + $0x994] sm:$0xf]
    %v781 = vld [vmem:[#allocation4 + $0x998] sm:$0xf]
    %v782 = vld [vmem:[#allocation4 + $0x99c] sm:$0xf]
    %v783 = vld [vmem:[#allocation4 + $0x9a0] sm:$0xf]
    %v784 = vld [vmem:[#allocation4 + $0x9a4] sm:$0xf]
    %v785 = vld [vmem:[#allocation4 + $0x9a8] sm:$0xf]
    %v786 = vld [vmem:[#allocation4 + $0x9ac] sm:$0xf]
    %v787 = vld [vmem:[#allocation4 + $0x9b0] sm:$0xf]
    %v788 = vld [vmem:[#allocation4 + $0x9b4] sm:$0xf]
    %v789 = vld [vmem:[#allocation4 + $0x9b8] sm:$0xf]
    %v790 = vld [vmem:[#allocation4 + $0x9bc] sm:$0xf]
    %v791 = vld [vmem:[#allocation4 + $0x9c0] sm:$0xf]
    %v792 = vld [vmem:[#allocation6] sm:$0x1]
    %v794 = vlaneseq
    %v795 = vshrl.u32 %v794, 7
    %v796 = vsub.s32 0, %v795
    %v797 = vrot.slane %v792, %v796
    %v1424 = vunpack.c.l.b16 %v167
    %v1425 = vunpack.c.l.b16 %v168
    %v1426 = vunpack.c.l.b16 %v169
    %v1427 = vunpack.c.l.b16 %v170
    %v1428 = vunpack.c.l.b16 %v171
    %v1429 = vunpack.c.l.b16 %v172
    %v1430 = vunpack.c.l.b16 %v173
    %v1431 = vunpack.c.l.b16 %v174
    %v1432 = vunpack.c.l.b16 %v175
    %v1433 = vunpack.c.l.b16 %v176
    %v1434 = vunpack.c.l.b16 %v177
    %v1435 = vunpack.c.l.b16 %v178
    %v1436 = vunpack.c.l.b16 %v179
    %v1437 = vunpack.c.l.b16 %v180
    %v1438 = vunpack.c.l.b16 %v181
    %v1439 = vunpack.c.l.b16 %v182
    %v1440 = vunpack.c.l.b16 %v183
    %v1441 = vunpack.c.l.b16 %v184
    %v1442 = vunpack.c.l.b16 %v185
    %v1443 = vunpack.c.l.b16 %v186
    %v1444 = vunpack.c.l.b16 %v187
    %v1445 = vunpack.c.l.b16 %v188
    %v1446 = vunpack.c.l.b16 %v189
    %v1447 = vunpack.c.l.b16 %v190
    %v1448 = vunpack.c.l.b16 %v191
    %v1449 = vunpack.c.l.b16 %v192
    %v1450 = vunpack.c.l.b16 %v193
    %v1451 = vunpack.c.l.b16 %v194
    %v1452 = vunpack.c.l.b16 %v195
    %v1453 = vunpack.c.l.b16 %v196
    %v1454 = vunpack.c.l.b16 %v197
    %v1455 = vunpack.c.l.b16 %v198
    %v1456 = vunpack.c.l.b16 %v199
    %v1457 = vunpack.c.l.b16 %v200
    %v1458 = vunpack.c.l.b16 %v201
    %v1459 = vunpack.c.l.b16 %v202
    %v1460 = vunpack.c.l.b16 %v203
    %v1461 = vunpack.c.l.b16 %v204
    %v1462 = vunpack.c.l.b16 %v205
    %v1463 = vunpack.c.l.b16 %v206
    %v1464 = vunpack.c.l.b16 %v207
    %v1465 = vunpack.c.l.b16 %v208
    %v1466 = vunpack.c.l.b16 %v209
    %v1467 = vunpack.c.l.b16 %v210
    %v1468 = vunpack.c.l.b16 %v211
    %v1469 = vunpack.c.l.b16 %v212
    %v1470 = vunpack.c.l.b16 %v213
    %v1471 = vunpack.c.l.b16 %v214
    %v1472 = vunpack.c.l.b16 %v215
    %v1473 = vunpack.c.l.b16 %v216
    %v1474 = vunpack.c.l.b16 %v217
    %v1475 = vunpack.c.l.b16 %v218
    %v1476 = vunpack.c.l.b16 %v219
    %v1477 = vunpack.c.l.b16 %v220
    %v1478 = vunpack.c.l.b16 %v221
    %v1479 = vunpack.c.l.b16 %v222
    %v1480 = vunpack.c.l.b16 %v223
    %v1481 = vunpack.c.l.b16 %v224
    %v1482 = vunpack.c.l.b16 %v225
    %v1483 = vunpack.c.l.b16 %v226
    %v1484 = vunpack.c.l.b16 %v227
    %v1485 = vunpack.c.l.b16 %v228
    %v1486 = vunpack.c.l.b16 %v229
    %v1487 = vunpack.c.l.b16 %v230
    %v1488 = vunpack.c.l.b16 %v231
    %v1489 = vunpack.c.l.b16 %v232
    %v1490 = vunpack.c.l.b16 %v233
    %v1491 = vunpack.c.l.b16 %v234
    %v1492 = vunpack.c.l.b16 %v235
    %v1493 = vunpack.c.l.b16 %v236
    %v1494 = vunpack.c.l.b16 %v237
    %v1495 = vunpack.c.l.b16 %v238
    %v1496 = vunpack.c.l.b16 %v239
    %v1497 = vunpack.c.l.b16 %v240
    %v1498 = vunpack.c.l.b16 %v241
    %v1499 = vunpack.c.l.b16 %v242
    %v1500 = vunpack.c.l.b16 %v243
    %v1501 = vunpack.c.l.b16 %v244
    %v1502 = vunpack.c.l.b16 %v245
    %v1503 = vunpack.c.l.b16 %v246
    %v1504 = vunpack.c.l.b16 %v247
    %v1505 = vunpack.c.l.b16 %v248
    %v1506 = vunpack.c.l.b16 %v249
    %v1507 = vunpack.c.l.b16 %v250
    %v1508 = vunpack.c.l.b16 %v251
    %v1509 = vunpack.c.l.b16 %v252
    %v1510 = vunpack.c.l.b16 %v253
    %v1511 = vunpack.c.l.b16 %v254
    %v1512 = vunpack.c.l.b16 %v255
    %v1513 = vunpack.c.l.b16 %v256
    %v1514 = vunpack.c.l.b16 %v257
    %v1515 = vunpack.c.l.b16 %v258
    %v1516 = vunpack.c.l.b16 %v259
    %v1517 = vunpack.c.l.b16 %v260
    %v1518 = vunpack.c.l.b16 %v261
    %v1519 = vunpack.c.l.b16 %v262
    %v1520 = vunpack.c.l.b16 %v263
    %v1521 = vunpack.c.l.b16 %v264
    %v1522 = vunpack.c.l.b16 %v265
    %v1523 = vunpack.c.l.b16 %v266
    %v1524 = vunpack.c.l.b16 %v267
    %v1525 = vunpack.c.l.b16 %v268
    %v1526 = vunpack.c.l.b16 %v269
    %v1527 = vunpack.c.l.b16 %v270
    %v1528 = vunpack.c.l.b16 %v271
    %v1529 = vunpack.c.l.b16 %v272
    %v1530 = vunpack.c.l.b16 %v273
    %v1531 = vunpack.c.l.b16 %v274
    %v1532 = vunpack.c.l.b16 %v275
    %v1533 = vunpack.c.l.b16 %v276
    %v1534 = vunpack.c.l.b16 %v277
    %v1535 = vunpack.c.l.b16 %v278
    %v1536 = vunpack.c.l.b16 %v279
    %v1537 = vunpack.c.l.b16 %v280
    %v1538 = vunpack.c.l.b16 %v281
    %v1539 = vunpack.c.l.b16 %v282
    %v1540 = vunpack.c.l.b16 %v283
    %v1541 = vunpack.c.l.b16 %v284
    %v1542 = vunpack.c.l.b16 %v285
    %v1543 = vunpack.c.l.b16 %v286
    %v1544 = vunpack.c.l.b16 %v287
    %v1545 = vunpack.c.l.b16 %v288
    %v1546 = vunpack.c.l.b16 %v289
    %v1547 = vunpack.c.l.b16 %v290
    %v1548 = vunpack.c.l.b16 %v291
    %v1549 = vunpack.c.l.b16 %v292
    %v1550 = vunpack.c.l.b16 %v293
    %v1551 = vunpack.c.l.b16 %v294
    %v1552 = vunpack.c.l.b16 %v295
    %v1553 = vunpack.c.l.b16 %v296
    %v1554 = vunpack.c.l.b16 %v297
    %v1555 = vunpack.c.l.b16 %v298
    %v1556 = vunpack.c.l.b16 %v299
    %v1557 = vunpack.c.l.b16 %v300
    %v1558 = vunpack.c.l.b16 %v301
    %v1559 = vunpack.c.l.b16 %v302
    %v1560 = vunpack.c.l.b16 %v303
    %v1561 = vunpack.c.l.b16 %v304
    %v1562 = vunpack.c.l.b16 %v305
    %v1563 = vunpack.c.l.b16 %v306
    %v1564 = vunpack.c.l.b16 %v307
    %v1565 = vunpack.c.l.b16 %v308
    %v1566 = vunpack.c.l.b16 %v309
    %v1567 = vunpack.c.l.b16 %v310
    %v1568 = vunpack.c.l.b16 %v311
    %v1569 = vunpack.c.l.b16 %v312
    %v1570 = vunpack.c.l.b16 %v313
    %v1571 = vunpack.c.l.b16 %v314
    %v1572 = vunpack.c.l.b16 %v315
    %v1573 = vunpack.c.l.b16 %v316
    %v1574 = vunpack.c.l.b16 %v317
    %v1575 = vunpack.c.l.b16 %v318
    %v1576 = vunpack.c.l.b16 %v319
    %v1577 = vunpack.c.l.b16 %v320
    %v1578 = vunpack.c.l.b16 %v321
    %v1579 = vunpack.c.l.b16 %v322
    %v1580 = vunpack.c.l.b16 %v323
    %v1581 = vunpack.c.l.b16 %v324
    %v1582 = vunpack.c.l.b16 %v325
    %v1583 = vunpack.c.l.b16 %v326
    %v1584 = vunpack.c.l.b16 %v327
    %v1585 = vunpack.c.l.b16 %v328
    %v1586 = vunpack.c.l.b16 %v329
    %v1587 = vunpack.c.l.b16 %v330
    %v1588 = vunpack.c.l.b16 %v331
    %v1589 = vunpack.c.l.b16 %v332
    %v1590 = vunpack.c.l.b16 %v333
    %v1591 = vunpack.c.l.b16 %v334
    %v1592 = vunpack.c.l.b16 %v335
    %v1593 = vunpack.c.l.b16 %v336
    %v1594 = vunpack.c.l.b16 %v337
    %v1595 = vunpack.c.l.b16 %v338
    %v1596 = vunpack.c.l.b16 %v339
    %v1597 = vunpack.c.l.b16 %v340
    %v1598 = vunpack.c.l.b16 %v341
    %v1599 = vunpack.c.l.b16 %v342
    %v1600 = vunpack.c.l.b16 %v343
    %v1601 = vunpack.c.l.b16 %v344
    %v1602 = vunpack.c.l.b16 %v345
    %v1603 = vunpack.c.l.b16 %v346
    %v1604 = vunpack.c.l.b16 %v347
    %v1605 = vunpack.c.l.b16 %v348
    %v1606 = vunpack.c.l.b16 %v349
    %v1607 = vunpack.c.l.b16 %v350
    %v1608 = vunpack.c.l.b16 %v351
    %v1609 = vunpack.c.l.b16 %v352
    %v1610 = vunpack.c.l.b16 %v353
    %v1611 = vunpack.c.l.b16 %v354
    %v1612 = vunpack.c.l.b16 %v355
    %v1613 = vunpack.c.l.b16 %v356
    %v1614 = vunpack.c.l.b16 %v357
    %v1615 = vunpack.c.l.b16 %v358
    %v1616 = vunpack.c.l.b16 %v359
    %v1617 = vunpack.c.l.b16 %v360
    %v1618 = vunpack.c.l.b16 %v361
    %v1619 = vunpack.c.l.b16 %v362
    %v1620 = vunpack.c.l.b16 %v363
    %v1621 = vunpack.c.l.b16 %v364
    %v1622 = vunpack.c.l.b16 %v365
    %v1623 = vunpack.c.l.b16 %v366
    %v1624 = vunpack.c.l.b16 %v367
    %v1625 = vunpack.c.l.b16 %v368
    %v1626 = vunpack.c.l.b16 %v369
    %v1627 = vunpack.c.l.b16 %v370
    %v1628 = vunpack.c.l.b16 %v371
    %v1629 = vunpack.c.l.b16 %v372
    %v1630 = vunpack.c.l.b16 %v373
    %v1631 = vunpack.c.l.b16 %v374
    %v1632 = vunpack.c.l.b16 %v375
    %v1633 = vunpack.c.l.b16 %v376
    %v1634 = vunpack.c.l.b16 %v377
    %v1635 = vunpack.c.l.b16 %v378
    %v1636 = vunpack.c.l.b16 %v379
    %v1637 = vunpack.c.l.b16 %v380
    %v1638 = vunpack.c.l.b16 %v381
    %v1639 = vunpack.c.l.b16 %v382
    %v1640 = vunpack.c.l.b16 %v383
    %v1641 = vunpack.c.l.b16 %v384
    %v1642 = vunpack.c.l.b16 %v385
    %v1643 = vunpack.c.l.b16 %v386
    %v1644 = vunpack.c.l.b16 %v387
    %v1645 = vunpack.c.l.b16 %v388
    %v1646 = vunpack.c.l.b16 %v389
    %v1647 = vunpack.c.l.b16 %v390
    %v1648 = vunpack.c.l.b16 %v391
    %v1649 = vunpack.c.l.b16 %v392
    %v1650 = vunpack.c.l.b16 %v393
    %v1651 = vunpack.c.l.b16 %v394
    %v1652 = vunpack.c.l.b16 %v395
    %v1653 = vunpack.c.l.b16 %v396
    %v1654 = vunpack.c.l.b16 %v397
    %v1655 = vunpack.c.l.b16 %v398
    %v1656 = vunpack.c.l.b16 %v399
    %v1657 = vunpack.c.l.b16 %v400
    %v1658 = vunpack.c.l.b16 %v401
    %v1659 = vunpack.c.l.b16 %v402
    %v1660 = vunpack.c.l.b16 %v403
    %v1661 = vunpack.c.l.b16 %v404
    %v1662 = vunpack.c.l.b16 %v405
    %v1663 = vunpack.c.l.b16 %v406
    %v1664 = vunpack.c.l.b16 %v407
    %v1665 = vunpack.c.l.b16 %v408
    %v1666 = vunpack.c.l.b16 %v409
    %v1667 = vunpack.c.l.b16 %v410
    %v1668 = vunpack.c.l.b16 %v411
    %v1669 = vunpack.c.l.b16 %v412
    %v1670 = vunpack.c.l.b16 %v413
    %v1671 = vunpack.c.l.b16 %v414
    %v1672 = vunpack.c.l.b16 %v415
    %v1673 = vunpack.c.l.b16 %v416
    %v1674 = vunpack.c.l.b16 %v417
    %v1675 = vunpack.c.l.b16 %v418
    %v1676 = vunpack.c.l.b16 %v419
    %v1677 = vunpack.c.l.b16 %v420
    %v1678 = vunpack.c.l.b16 %v421
    %v1679 = vunpack.c.l.b16 %v422
    %v1680 = vunpack.c.l.b16 %v423
    %v1681 = vunpack.c.l.b16 %v424
    %v1682 = vunpack.c.l.b16 %v425
    %v1683 = vunpack.c.l.b16 %v426
    %v1684 = vunpack.c.l.b16 %v427
    %v1685 = vunpack.c.l.b16 %v428
    %v1686 = vunpack.c.l.b16 %v429
    %v1687 = vunpack.c.l.b16 %v430
    %v1688 = vunpack.c.l.b16 %v431
    %v1689 = vunpack.c.l.b16 %v432
    %v1690 = vunpack.c.l.b16 %v433
    %v1691 = vunpack.c.l.b16 %v434
    %v1692 = vunpack.c.l.b16 %v435
    %v1693 = vunpack.c.l.b16 %v436
    %v1694 = vunpack.c.l.b16 %v437
    %v1695 = vunpack.c.l.b16 %v438
    %v1696 = vunpack.c.l.b16 %v439
    %v1697 = vunpack.c.l.b16 %v440
    %v1698 = vunpack.c.l.b16 %v441
    %v1699 = vunpack.c.l.b16 %v442
    %v1700 = vunpack.c.l.b16 %v443
    %v1701 = vunpack.c.l.b16 %v444
    %v1702 = vunpack.c.l.b16 %v445
    %v1703 = vunpack.c.l.b16 %v446
    %v1704 = vunpack.c.l.b16 %v447
    %v1705 = vunpack.c.l.b16 %v448
    %v1706 = vunpack.c.l.b16 %v449
    %v1707 = vunpack.c.l.b16 %v450
    %v1708 = vunpack.c.l.b16 %v451
    %v1709 = vunpack.c.l.b16 %v452
    %v1710 = vunpack.c.l.b16 %v453
    %v1711 = vunpack.c.l.b16 %v454
    %v1712 = vunpack.c.l.b16 %v455
    %v1713 = vunpack.c.l.b16 %v456
    %v1714 = vunpack.c.l.b16 %v457
    %v1715 = vunpack.c.l.b16 %v458
    %v1716 = vunpack.c.l.b16 %v459
    %v1717 = vunpack.c.l.b16 %v460
    %v1718 = vunpack.c.l.b16 %v461
    %v1719 = vunpack.c.l.b16 %v462
    %v1720 = vunpack.c.l.b16 %v463
    %v1721 = vunpack.c.l.b16 %v464
    %v1722 = vunpack.c.l.b16 %v465
    %v1723 = vunpack.c.l.b16 %v466
    %v1724 = vunpack.c.l.b16 %v467
    %v1725 = vunpack.c.l.b16 %v468
    %v1726 = vunpack.c.l.b16 %v469
    %v1727 = vunpack.c.l.b16 %v470
    %v1728 = vunpack.c.l.b16 %v471
    %v1729 = vunpack.c.l.b16 %v472
    %v1730 = vunpack.c.l.b16 %v473
    %v1731 = vunpack.c.l.b16 %v474
    %v1732 = vunpack.c.l.b16 %v475
    %v1733 = vunpack.c.l.b16 %v476
    %v1734 = vunpack.c.l.b16 %v477
    %v1735 = vunpack.c.l.b16 %v478
    %v1736 = vunpack.c.l.b16 %v479
    %v1737 = vunpack.c.l.b16 %v480
    %v1738 = vunpack.c.l.b16 %v481
    %v1739 = vunpack.c.l.b16 %v482
    %v1740 = vunpack.c.l.b16 %v483
    %v1741 = vunpack.c.l.b16 %v484
    %v1742 = vunpack.c.l.b16 %v485
    %v1743 = vunpack.c.l.b16 %v486
    %v1744 = vunpack.c.l.b16 %v487
    %v1745 = vunpack.c.l.b16 %v488
    %v1746 = vunpack.c.l.b16 %v489
    %v1747 = vunpack.c.l.b16 %v490
    %v1748 = vunpack.c.l.b16 %v491
    %v1749 = vunpack.c.l.b16 %v492
    %v1750 = vunpack.c.l.b16 %v493
    %v1751 = vunpack.c.l.b16 %v494
    %v1752 = vunpack.c.l.b16 %v495
    %v1753 = vunpack.c.l.b16 %v496
    %v1754 = vunpack.c.l.b16 %v497
    %v1755 = vunpack.c.l.b16 %v498
    %v1756 = vunpack.c.l.b16 %v499
    %v1757 = vunpack.c.l.b16 %v500
    %v1758 = vunpack.c.l.b16 %v501
    %v1759 = vunpack.c.l.b16 %v502
    %v1760 = vunpack.c.l.b16 %v503
    %v1761 = vunpack.c.l.b16 %v504
    %v1762 = vunpack.c.l.b16 %v505
    %v1763 = vunpack.c.l.b16 %v506
    %v1764 = vunpack.c.l.b16 %v507
    %v1765 = vunpack.c.l.b16 %v508
    %v1766 = vunpack.c.l.b16 %v509
    %v1767 = vunpack.c.l.b16 %v510
    %v1768 = vunpack.c.l.b16 %v511
    %v1769 = vunpack.c.l.b16 %v512
    %v1770 = vunpack.c.l.b16 %v513
    %v1771 = vunpack.c.l.b16 %v514
    %v1772 = vunpack.c.l.b16 %v515
    %v1773 = vunpack.c.l.b16 %v516
    %v1774 = vunpack.c.l.b16 %v517
    %v1775 = vunpack.c.l.b16 %v518
    %v1776 = vunpack.c.l.b16 %v519
    %v1777 = vunpack.c.l.b16 %v520
    %v1778 = vunpack.c.l.b16 %v521
    %v1779 = vunpack.c.l.b16 %v522
    %v1780 = vunpack.c.l.b16 %v523
    %v1781 = vunpack.c.l.b16 %v524
    %v1782 = vunpack.c.l.b16 %v525
    %v1783 = vunpack.c.l.b16 %v526
    %v1784 = vunpack.c.l.b16 %v527
    %v1785 = vunpack.c.l.b16 %v528
    %v1786 = vunpack.c.l.b16 %v529
    %v1787 = vunpack.c.l.b16 %v530
    %v1788 = vunpack.c.l.b16 %v531
    %v1789 = vunpack.c.l.b16 %v532
    %v1790 = vunpack.c.l.b16 %v533
    %v1791 = vunpack.c.l.b16 %v534
    %v1792 = vunpack.c.l.b16 %v535
    %v1793 = vunpack.c.l.b16 %v536
    %v1794 = vunpack.c.l.b16 %v537
    %v1795 = vunpack.c.l.b16 %v538
    %v1796 = vunpack.c.l.b16 %v539
    %v1797 = vunpack.c.l.b16 %v540
    %v1798 = vunpack.c.l.b16 %v541
    %v1799 = vunpack.c.l.b16 %v542
    %v1800 = vunpack.c.l.b16 %v543
    %v1801 = vunpack.c.l.b16 %v544
    %v1802 = vunpack.c.l.b16 %v545
    %v1803 = vunpack.c.l.b16 %v546
    %v1804 = vunpack.c.l.b16 %v547
    %v1805 = vunpack.c.l.b16 %v548
    %v1806 = vunpack.c.l.b16 %v549
    %v1807 = vunpack.c.l.b16 %v550
    %v1808 = vunpack.c.l.b16 %v551
    %v1809 = vunpack.c.l.b16 %v552
    %v1810 = vunpack.c.l.b16 %v553
    %v1811 = vunpack.c.l.b16 %v554
    %v1812 = vunpack.c.l.b16 %v555
    %v1813 = vunpack.c.l.b16 %v556
    %v1814 = vunpack.c.l.b16 %v557
    %v1815 = vunpack.c.l.b16 %v558
    %v1816 = vunpack.c.l.b16 %v559
    %v1817 = vunpack.c.l.b16 %v560
    %v1818 = vunpack.c.l.b16 %v561
    %v1819 = vunpack.c.l.b16 %v562
    %v1820 = vunpack.c.l.b16 %v563
    %v1821 = vunpack.c.l.b16 %v564
    %v1822 = vunpack.c.l.b16 %v565
    %v1823 = vunpack.c.l.b16 %v566
    %v1824 = vunpack.c.l.b16 %v567
    %v1825 = vunpack.c.l.b16 %v568
    %v1826 = vunpack.c.l.b16 %v569
    %v1827 = vunpack.c.l.b16 %v570
    %v1828 = vunpack.c.l.b16 %v571
    %v1829 = vunpack.c.l.b16 %v572
    %v1830 = vunpack.c.l.b16 %v573
    %v1831 = vunpack.c.l.b16 %v574
    %v1832 = vunpack.c.l.b16 %v575
    %v1833 = vunpack.c.l.b16 %v576
    %v1834 = vunpack.c.l.b16 %v577
    %v1835 = vunpack.c.l.b16 %v578
    %v1836 = vunpack.c.l.b16 %v579
    %v1837 = vunpack.c.l.b16 %v580
    %v1838 = vunpack.c.l.b16 %v581
    %v1839 = vunpack.c.l.b16 %v582
    %v1840 = vunpack.c.l.b16 %v583
    %v1841 = vunpack.c.l.b16 %v584
    %v1842 = vunpack.c.l.b16 %v585
    %v1843 = vunpack.c.l.b16 %v586
    %v1844 = vunpack.c.l.b16 %v587
    %v1845 = vunpack.c.l.b16 %v588
    %v1846 = vunpack.c.l.b16 %v589
    %v1847 = vunpack.c.l.b16 %v590
    %v1848 = vunpack.c.l.b16 %v591
    %v1849 = vunpack.c.l.b16 %v592
    %v1850 = vunpack.c.l.b16 %v593
    %v1851 = vunpack.c.l.b16 %v594
    %v1852 = vunpack.c.l.b16 %v595
    %v1853 = vunpack.c.l.b16 %v596
    %v1854 = vunpack.c.l.b16 %v597
    %v1855 = vunpack.c.l.b16 %v598
    %v1856 = vunpack.c.l.b16 %v599
    %v1857 = vunpack.c.l.b16 %v600
    %v1858 = vunpack.c.l.b16 %v601
    %v1859 = vunpack.c.l.b16 %v602
    %v1860 = vunpack.c.l.b16 %v603
    %v1861 = vunpack.c.l.b16 %v604
    %v1862 = vunpack.c.l.b16 %v605
    %v1863 = vunpack.c.l.b16 %v606
    %v1864 = vunpack.c.l.b16 %v607
    %v1865 = vunpack.c.l.b16 %v608
    %v1866 = vunpack.c.l.b16 %v609
    %v1867 = vunpack.c.l.b16 %v610
    %v1868 = vunpack.c.l.b16 %v611
    %v1869 = vunpack.c.l.b16 %v612
    %v1870 = vunpack.c.l.b16 %v613
    %v1871 = vunpack.c.l.b16 %v614
    %v1872 = vunpack.c.l.b16 %v615
    %v1873 = vunpack.c.l.b16 %v616
    %v1874 = vunpack.c.l.b16 %v617
    %v1875 = vunpack.c.l.b16 %v618
    %v1876 = vunpack.c.l.b16 %v619
    %v1877 = vunpack.c.l.b16 %v620
    %v1878 = vunpack.c.l.b16 %v621
    %v1879 = vunpack.c.l.b16 %v622
    %v1880 = vunpack.c.l.b16 %v623
    %v1881 = vunpack.c.l.b16 %v624
    %v1882 = vunpack.c.l.b16 %v625
    %v1883 = vunpack.c.l.b16 %v626
    %v1884 = vunpack.c.l.b16 %v627
    %v1885 = vunpack.c.l.b16 %v628
    %v1886 = vunpack.c.l.b16 %v629
    %v1887 = vunpack.c.l.b16 %v630
    %v1888 = vunpack.c.l.b16 %v631
    %v1889 = vunpack.c.l.b16 %v632
    %v1890 = vunpack.c.l.b16 %v633
    %v1891 = vunpack.c.l.b16 %v634
    %v1892 = vunpack.c.l.b16 %v635
    %v1893 = vunpack.c.l.b16 %v636
    %v1894 = vunpack.c.l.b16 %v637
    %v1895 = vunpack.c.l.b16 %v638
    %v1896 = vunpack.c.l.b16 %v639
    %v1897 = vunpack.c.l.b16 %v640
    %v1898 = vunpack.c.l.b16 %v641
    %v1899 = vunpack.c.l.b16 %v642
    %v1900 = vunpack.c.l.b16 %v643
    %v1901 = vunpack.c.l.b16 %v644
    %v1902 = vunpack.c.l.b16 %v645
    %v1903 = vunpack.c.l.b16 %v646
    %v1904 = vunpack.c.l.b16 %v647
    %v1905 = vunpack.c.l.b16 %v648
    %v1906 = vunpack.c.l.b16 %v649
    %v1907 = vunpack.c.l.b16 %v650
    %v1908 = vunpack.c.l.b16 %v651
    %v1909 = vunpack.c.l.b16 %v652
    %v1910 = vunpack.c.l.b16 %v653
    %v1911 = vunpack.c.l.b16 %v654
    %v1912 = vunpack.c.l.b16 %v655
    %v1913 = vunpack.c.l.b16 %v656
    %v1914 = vunpack.c.l.b16 %v657
    %v1915 = vunpack.c.l.b16 %v658
    %v1916 = vunpack.c.l.b16 %v659
    %v1917 = vunpack.c.l.b16 %v660
    %v1918 = vunpack.c.l.b16 %v661
    %v1919 = vunpack.c.l.b16 %v662
    %v1920 = vunpack.c.l.b16 %v663
    %v1921 = vunpack.c.l.b16 %v664
    %v1922 = vunpack.c.l.b16 %v665
    %v1923 = vunpack.c.l.b16 %v666
    %v1924 = vunpack.c.l.b16 %v667
    %v1925 = vunpack.c.l.b16 %v668
    %v1926 = vunpack.c.l.b16 %v669
    %v1927 = vunpack.c.l.b16 %v670
    %v1928 = vunpack.c.l.b16 %v671
    %v1929 = vunpack.c.l.b16 %v672
    %v1930 = vunpack.c.l.b16 %v673
    %v1931 = vunpack.c.l.b16 %v674
    %v1932 = vunpack.c.l.b16 %v675
    %v1933 = vunpack.c.l.b16 %v676
    %v1934 = vunpack.c.l.b16 %v677
    %v1935 = vunpack.c.l.b16 %v678
    %v1936 = vunpack.c.l.b16 %v679
    %v1937 = vunpack.c.l.b16 %v680
    %v1938 = vunpack.c.l.b16 %v681
    %v1939 = vunpack.c.l.b16 %v682
    %v1940 = vunpack.c.l.b16 %v683
    %v1941 = vunpack.c.l.b16 %v684
    %v1942 = vunpack.c.l.b16 %v685
    %v1943 = vunpack.c.l.b16 %v686
    %v1944 = vunpack.c.l.b16 %v687
    %v1945 = vunpack.c.l.b16 %v688
    %v1946 = vunpack.c.l.b16 %v689
    %v1947 = vunpack.c.l.b16 %v690
    %v1948 = vunpack.c.l.b16 %v691
    %v1949 = vunpack.c.l.b16 %v692
    %v1950 = vunpack.c.l.b16 %v693
    %v1951 = vunpack.c.l.b16 %v694
    %v1952 = vunpack.c.l.b16 %v695
    %v1953 = vunpack.c.l.b16 %v696
    %v1954 = vunpack.c.l.b16 %v697
    %v1955 = vunpack.c.l.b16 %v698
    %v1956 = vunpack.c.l.b16 %v699
    %v1957 = vunpack.c.l.b16 %v700
    %v1958 = vunpack.c.l.b16 %v701
    %v1959 = vunpack.c.l.b16 %v702
    %v1960 = vunpack.c.l.b16 %v703
    %v1961 = vunpack.c.l.b16 %v704
    %v1962 = vunpack.c.l.b16 %v705
    %v1963 = vunpack.c.l.b16 %v706
    %v1964 = vunpack.c.l.b16 %v707
    %v1965 = vunpack.c.l.b16 %v708
    %v1966 = vunpack.c.l.b16 %v709
    %v1967 = vunpack.c.l.b16 %v710
    %v1968 = vunpack.c.l.b16 %v711
    %v1969 = vunpack.c.l.b16 %v712
    %v1970 = vunpack.c.l.b16 %v713
    %v1971 = vunpack.c.l.b16 %v714
    %v1972 = vunpack.c.l.b16 %v715
    %v1973 = vunpack.c.l.b16 %v716
    %v1974 = vunpack.c.l.b16 %v717
    %v1975 = vunpack.c.l.b16 %v718
    %v1976 = vunpack.c.l.b16 %v719
    %v1977 = vunpack.c.l.b16 %v720
    %v1978 = vunpack.c.l.b16 %v721
    %v1979 = vunpack.c.l.b16 %v722
    %v1980 = vunpack.c.l.b16 %v723
    %v1981 = vunpack.c.l.b16 %v724
    %v1982 = vunpack.c.l.b16 %v725
    %v1983 = vunpack.c.l.b16 %v726
    %v1984 = vunpack.c.l.b16 %v727
    %v1985 = vunpack.c.l.b16 %v728
    %v1986 = vunpack.c.l.b16 %v729
    %v1987 = vunpack.c.l.b16 %v730
    %v1988 = vunpack.c.l.b16 %v731
    %v1989 = vunpack.c.l.b16 %v732
    %v1990 = vunpack.c.l.b16 %v733
    %v1991 = vunpack.c.l.b16 %v734
    %v1992 = vunpack.c.l.b16 %v735
    %v1993 = vunpack.c.l.b16 %v736
    %v1994 = vunpack.c.l.b16 %v737
    %v1995 = vunpack.c.l.b16 %v738
    %v1996 = vunpack.c.l.b16 %v739
    %v1997 = vunpack.c.l.b16 %v740
    %v1998 = vunpack.c.l.b16 %v741
    %v1999 = vunpack.c.l.b16 %v742
    %v2000 = vunpack.c.l.b16 %v743
    %v2001 = vunpack.c.l.b16 %v744
    %v2002 = vunpack.c.l.b16 %v745
    %v2003 = vunpack.c.l.b16 %v746
    %v2004 = vunpack.c.l.b16 %v747
    %v2005 = vunpack.c.l.b16 %v748
    %v2006 = vunpack.c.l.b16 %v749
    %v2007 = vunpack.c.l.b16 %v750
    %v2008 = vunpack.c.l.b16 %v751
    %v2009 = vunpack.c.l.b16 %v752
    %v2010 = vunpack.c.l.b16 %v753
    %v2011 = vunpack.c.l.b16 %v754
    %v2012 = vunpack.c.l.b16 %v755
    %v2013 = vunpack.c.l.b16 %v756
    %v2014 = vunpack.c.l.b16 %v757
    %v2015 = vunpack.c.l.b16 %v758
    %v2016 = vunpack.c.l.b16 %v759
    %v2017 = vunpack.c.l.b16 %v760
    %v2018 = vunpack.c.l.b16 %v761
    %v2019 = vunpack.c.l.b16 %v762
    %v2020 = vunpack.c.l.b16 %v763
    %v2021 = vunpack.c.l.b16 %v764
    %v2022 = vunpack.c.l.b16 %v765
    %v2023 = vunpack.c.l.b16 %v766
    %v2024 = vunpack.c.l.b16 %v767
    %v2025 = vunpack.c.l.b16 %v768
    %v2026 = vunpack.c.l.b16 %v769
    %v2027 = vunpack.c.l.b16 %v770
    %v2028 = vunpack.c.l.b16 %v771
    %v2029 = vunpack.c.l.b16 %v772
    %v2030 = vunpack.c.l.b16 %v773
    %v2031 = vunpack.c.l.b16 %v774
    %v2032 = vunpack.c.l.b16 %v775
    %v2033 = vunpack.c.l.b16 %v776
    %v2034 = vunpack.c.l.b16 %v777
    %v2035 = vunpack.c.l.b16 %v778
    %v2036 = vunpack.c.l.b16 %v779
    %v2037 = vunpack.c.l.b16 %v780
    %v2038 = vunpack.c.l.b16 %v781
    %v2039 = vunpack.c.l.b16 %v782
    %v2040 = vunpack.c.l.b16 %v783
    %v2041 = vunpack.c.l.b16 %v784
    %v2042 = vunpack.c.l.b16 %v785
    %v2043 = vunpack.c.l.b16 %v786
    %v2044 = vunpack.c.l.b16 %v787
    %v2045 = vunpack.c.l.b16 %v788
    %v2046 = vunpack.c.l.b16 %v789
    %v2047 = vunpack.c.l.b16 %v790
    %v2048 = vunpack.c.l.b16 %v791
    %v2049 = vpack.c.b16 %v1425, %v1424
    %v2050 = vpack.c.b16 %v1427, %v1426
    %v2051 = vpack.c.b16 %v1429, %v1428
    %v2052 = vpack.c.b16 %v1431, %v1430
    %v2053 = vpack.c.b16 %v1433, %v1432
    %v2054 = vpack.c.b16 %v1435, %v1434
    %v2055 = vpack.c.b16 %v1437, %v1436
    %v2056 = vpack.c.b16 %v1439, %v1438
    %v2057 = vpack.c.b16 %v1441, %v1440
    %v2058 = vpack.c.b16 %v1443, %v1442
    %v2059 = vpack.c.b16 %v1445, %v1444
    %v2060 = vpack.c.b16 %v1447, %v1446
    %v2061 = vpack.c.b16 %v1449, %v1448
    %v2062 = vpack.c.b16 %v1451, %v1450
    %v2063 = vpack.c.b16 %v1453, %v1452
    %v2064 = vpack.c.b16 %v1455, %v1454
    %v2065 = vpack.c.b16 %v1457, %v1456
    %v2066 = vpack.c.b16 %v1459, %v1458
    %v2067 = vpack.c.b16 %v1461, %v1460
    %v2068 = vpack.c.b16 %v1463, %v1462
    %v2069 = vpack.c.b16 %v1465, %v1464
    %v2070 = vpack.c.b16 %v1467, %v1466
    %v2071 = vpack.c.b16 %v1469, %v1468
    %v2072 = vpack.c.b16 %v1471, %v1470
    %v2073 = vpack.c.b16 %v1473, %v1472
    %v2074 = vpack.c.b16 %v1475, %v1474
    %v2075 = vpack.c.b16 %v1477, %v1476
    %v2076 = vpack.c.b16 %v1479, %v1478
    %v2077 = vpack.c.b16 %v1481, %v1480
    %v2078 = vpack.c.b16 %v1483, %v1482
    %v2079 = vpack.c.b16 %v1485, %v1484
    %v2080 = vpack.c.b16 %v1487, %v1486
    %v2081 = vpack.c.b16 %v1489, %v1488
    %v2082 = vpack.c.b16 %v1491, %v1490
    %v2083 = vpack.c.b16 %v1493, %v1492
    %v2084 = vpack.c.b16 %v1495, %v1494
    %v2085 = vpack.c.b16 %v1497, %v1496
    %v2086 = vpack.c.b16 %v1499, %v1498
    %v2087 = vpack.c.b16 %v1501, %v1500
    %v2088 = vpack.c.b16 %v1503, %v1502
    %v2089 = vpack.c.b16 %v1505, %v1504
    %v2090 = vpack.c.b16 %v1507, %v1506
    %v2091 = vpack.c.b16 %v1509, %v1508
    %v2092 = vpack.c.b16 %v1511, %v1510
    %v2093 = vpack.c.b16 %v1513, %v1512
    %v2094 = vpack.c.b16 %v1515, %v1514
    %v2095 = vpack.c.b16 %v1517, %v1516
    %v2096 = vpack.c.b16 %v1519, %v1518
    %v2097 = vpack.c.b16 %v1521, %v1520
    %v2098 = vpack.c.b16 %v1523, %v1522
    %v2099 = vpack.c.b16 %v1525, %v1524
    %v2100 = vpack.c.b16 %v1527, %v1526
    %v2101 = vpack.c.b16 %v1529, %v1528
    %v2102 = vpack.c.b16 %v1531, %v1530
    %v2103 = vpack.c.b16 %v1533, %v1532
    %v2104 = vpack.c.b16 %v1535, %v1534
    %v2105 = vpack.c.b16 %v1537, %v1536
    %v2106 = vpack.c.b16 %v1539, %v1538
    %v2107 = vpack.c.b16 %v1541, %v1540
    %v2108 = vpack.c.b16 %v1543, %v1542
    %v2109 = vpack.c.b16 %v1545, %v1544
    %v2110 = vpack.c.b16 %v1547, %v1546
    %v2111 = vpack.c.b16 %v1549, %v1548
    %v2112 = vpack.c.b16 %v1551, %v1550
    %v2113 = vpack.c.b16 %v1553, %v1552
    %v2114 = vpack.c.b16 %v1555, %v1554
    %v2115 = vpack.c.b16 %v1557, %v1556
    %v2116 = vpack.c.b16 %v1559, %v1558
    %v2117 = vpack.c.b16 %v1561, %v1560
    %v2118 = vpack.c.b16 %v1563, %v1562
    %v2119 = vpack.c.b16 %v1565, %v1564
    %v2120 = vpack.c.b16 %v1567, %v1566
    %v2121 = vpack.c.b16 %v1569, %v1568
    %v2122 = vpack.c.b16 %v1571, %v1570
    %v2123 = vpack.c.b16 %v1573, %v1572
    %v2124 = vpack.c.b16 %v1575, %v1574
    %v2125 = vpack.c.b16 %v1577, %v1576
    %v2126 = vpack.c.b16 %v1579, %v1578
    %v2127 = vpack.c.b16 %v1581, %v1580
    %v2128 = vpack.c.b16 %v1583, %v1582
    %v2129 = vpack.c.b16 %v1585, %v1584
    %v2130 = vpack.c.b16 %v1587, %v1586
    %v2131 = vpack.c.b16 %v1589, %v1588
    %v2132 = vpack.c.b16 %v1591, %v1590
    %v2133 = vpack.c.b16 %v1593, %v1592
    %v2134 = vpack.c.b16 %v1595, %v1594
    %v2135 = vpack.c.b16 %v1597, %v1596
    %v2136 = vpack.c.b16 %v1599, %v1598
    %v2137 = vpack.c.b16 %v1601, %v1600
    %v2138 = vpack.c.b16 %v1603, %v1602
    %v2139 = vpack.c.b16 %v1605, %v1604
    %v2140 = vpack.c.b16 %v1607, %v1606
    %v2141 = vpack.c.b16 %v1609, %v1608
    %v2142 = vpack.c.b16 %v1611, %v1610
    %v2143 = vpack.c.b16 %v1613, %v1612
    %v2144 = vpack.c.b16 %v1615, %v1614
    %v2145 = vpack.c.b16 %v1617, %v1616
    %v2146 = vpack.c.b16 %v1619, %v1618
    %v2147 = vpack.c.b16 %v1621, %v1620
    %v2148 = vpack.c.b16 %v1623, %v1622
    %v2149 = vpack.c.b16 %v1625, %v1624
    %v2150 = vpack.c.b16 %v1627, %v1626
    %v2151 = vpack.c.b16 %v1629, %v1628
    %v2152 = vpack.c.b16 %v1631, %v1630
    %v2153 = vpack.c.b16 %v1633, %v1632
    %v2154 = vpack.c.b16 %v1635, %v1634
    %v2155 = vpack.c.b16 %v1637, %v1636
    %v2156 = vpack.c.b16 %v1639, %v1638
    %v2157 = vpack.c.b16 %v1641, %v1640
    %v2158 = vpack.c.b16 %v1643, %v1642
    %v2159 = vpack.c.b16 %v1645, %v1644
    %v2160 = vpack.c.b16 %v1647, %v1646
    %v2161 = vpack.c.b16 %v1649, %v1648
    %v2162 = vpack.c.b16 %v1651, %v1650
    %v2163 = vpack.c.b16 %v1653, %v1652
    %v2164 = vpack.c.b16 %v1655, %v1654
    %v2165 = vpack.c.b16 %v1657, %v1656
    %v2166 = vpack.c.b16 %v1659, %v1658
    %v2167 = vpack.c.b16 %v1661, %v1660
    %v2168 = vpack.c.b16 %v1663, %v1662
    %v2169 = vpack.c.b16 %v1665, %v1664
    %v2170 = vpack.c.b16 %v1667, %v1666
    %v2171 = vpack.c.b16 %v1669, %v1668
    %v2172 = vpack.c.b16 %v1671, %v1670
    %v2173 = vpack.c.b16 %v1673, %v1672
    %v2174 = vpack.c.b16 %v1675, %v1674
    %v2175 = vpack.c.b16 %v1677, %v1676
    %v2176 = vpack.c.b16 %v1679, %v1678
    %v2177 = vpack.c.b16 %v1681, %v1680
    %v2178 = vpack.c.b16 %v1683, %v1682
    %v2179 = vpack.c.b16 %v1685, %v1684
    %v2180 = vpack.c.b16 %v1687, %v1686
    %v2181 = vpack.c.b16 %v1689, %v1688
    %v2182 = vpack.c.b16 %v1691, %v1690
    %v2183 = vpack.c.b16 %v1693, %v1692
    %v2184 = vpack.c.b16 %v1695, %v1694
    %v2185 = vpack.c.b16 %v1697, %v1696
    %v2186 = vpack.c.b16 %v1699, %v1698
    %v2187 = vpack.c.b16 %v1701, %v1700
    %v2188 = vpack.c.b16 %v1703, %v1702
    %v2189 = vpack.c.b16 %v1705, %v1704
    %v2190 = vpack.c.b16 %v1707, %v1706
    %v2191 = vpack.c.b16 %v1709, %v1708
    %v2192 = vpack.c.b16 %v1711, %v1710
    %v2193 = vpack.c.b16 %v1713, %v1712
    %v2194 = vpack.c.b16 %v1715, %v1714
    %v2195 = vpack.c.b16 %v1717, %v1716
    %v2196 = vpack.c.b16 %v1719, %v1718
    %v2197 = vpack.c.b16 %v1721, %v1720
    %v2198 = vpack.c.b16 %v1723, %v1722
    %v2199 = vpack.c.b16 %v1725, %v1724
    %v2200 = vpack.c.b16 %v1727, %v1726
    %v2201 = vpack.c.b16 %v1729, %v1728
    %v2202 = vpack.c.b16 %v1731, %v1730
    %v2203 = vpack.c.b16 %v1733, %v1732
    %v2204 = vpack.c.b16 %v1735, %v1734
    %v2205 = vpack.c.b16 %v1737, %v1736
    %v2206 = vpack.c.b16 %v1739, %v1738
    %v2207 = vpack.c.b16 %v1741, %v1740
    %v2208 = vpack.c.b16 %v1743, %v1742
    %v2209 = vpack.c.b16 %v1745, %v1744
    %v2210 = vpack.c.b16 %v1747, %v1746
    %v2211 = vpack.c.b16 %v1749, %v1748
    %v2212 = vpack.c.b16 %v1751, %v1750
    %v2213 = vpack.c.b16 %v1753, %v1752
    %v2214 = vpack.c.b16 %v1755, %v1754
    %v2215 = vpack.c.b16 %v1757, %v1756
    %v2216 = vpack.c.b16 %v1759, %v1758
    %v2217 = vpack.c.b16 %v1761, %v1760
    %v2218 = vpack.c.b16 %v1763, %v1762
    %v2219 = vpack.c.b16 %v1765, %v1764
    %v2220 = vpack.c.b16 %v1767, %v1766
    %v2221 = vpack.c.b16 %v1769, %v1768
    %v2222 = vpack.c.b16 %v1771, %v1770
    %v2223 = vpack.c.b16 %v1773, %v1772
    %v2224 = vpack.c.b16 %v1775, %v1774
    %v2225 = vpack.c.b16 %v1777, %v1776
    %v2226 = vpack.c.b16 %v1779, %v1778
    %v2227 = vpack.c.b16 %v1781, %v1780
    %v2228 = vpack.c.b16 %v1783, %v1782
    %v2229 = vpack.c.b16 %v1785, %v1784
    %v2230 = vpack.c.b16 %v1787, %v1786
    %v2231 = vpack.c.b16 %v1789, %v1788
    %v2232 = vpack.c.b16 %v1791, %v1790
    %v2233 = vpack.c.b16 %v1793, %v1792
    %v2234 = vpack.c.b16 %v1795, %v1794
    %v2235 = vpack.c.b16 %v1797, %v1796
    %v2236 = vpack.c.b16 %v1799, %v1798
    %v2237 = vpack.c.b16 %v1801, %v1800
    %v2238 = vpack.c.b16 %v1803, %v1802
    %v2239 = vpack.c.b16 %v1805, %v1804
    %v2240 = vpack.c.b16 %v1807, %v1806
    %v2241 = vpack.c.b16 %v1809, %v1808
    %v2242 = vpack.c.b16 %v1811, %v1810
    %v2243 = vpack.c.b16 %v1813, %v1812
    %v2244 = vpack.c.b16 %v1815, %v1814
    %v2245 = vpack.c.b16 %v1817, %v1816
    %v2246 = vpack.c.b16 %v1819, %v1818
    %v2247 = vpack.c.b16 %v1821, %v1820
    %v2248 = vpack.c.b16 %v1823, %v1822
    %v2249 = vpack.c.b16 %v1825, %v1824
    %v2250 = vpack.c.b16 %v1827, %v1826
    %v2251 = vpack.c.b16 %v1829, %v1828
    %v2252 = vpack.c.b16 %v1831, %v1830
    %v2253 = vpack.c.b16 %v1833, %v1832
    %v2254 = vpack.c.b16 %v1835, %v1834
    %v2255 = vpack.c.b16 %v1837, %v1836
    %v2256 = vpack.c.b16 %v1839, %v1838
    %v2257 = vpack.c.b16 %v1841, %v1840
    %v2258 = vpack.c.b16 %v1843, %v1842
    %v2259 = vpack.c.b16 %v1845, %v1844
    %v2260 = vpack.c.b16 %v1847, %v1846
    %v2261 = vpack.c.b16 %v1849, %v1848
    %v2262 = vpack.c.b16 %v1851, %v1850
    %v2263 = vpack.c.b16 %v1853, %v1852
    %v2264 = vpack.c.b16 %v1855, %v1854
    %v2265 = vpack.c.b16 %v1857, %v1856
    %v2266 = vpack.c.b16 %v1859, %v1858
    %v2267 = vpack.c.b16 %v1861, %v1860
    %v2268 = vpack.c.b16 %v1863, %v1862
    %v2269 = vpack.c.b16 %v1865, %v1864
    %v2270 = vpack.c.b16 %v1867, %v1866
    %v2271 = vpack.c.b16 %v1869, %v1868
    %v2272 = vpack.c.b16 %v1871, %v1870
    %v2273 = vpack.c.b16 %v1873, %v1872
    %v2274 = vpack.c.b16 %v1875, %v1874
    %v2275 = vpack.c.b16 %v1877, %v1876
    %v2276 = vpack.c.b16 %v1879, %v1878
    %v2277 = vpack.c.b16 %v1881, %v1880
    %v2278 = vpack.c.b16 %v1883, %v1882
    %v2279 = vpack.c.b16 %v1885, %v1884
    %v2280 = vpack.c.b16 %v1887, %v1886
    %v2281 = vpack.c.b16 %v1889, %v1888
    %v2282 = vpack.c.b16 %v1891, %v1890
    %v2283 = vpack.c.b16 %v1893, %v1892
    %v2284 = vpack.c.b16 %v1895, %v1894
    %v2285 = vpack.c.b16 %v1897, %v1896
    %v2286 = vpack.c.b16 %v1899, %v1898
    %v2287 = vpack.c.b16 %v1901, %v1900
    %v2288 = vpack.c.b16 %v1903, %v1902
    %v2289 = vpack.c.b16 %v1905, %v1904
    %v2290 = vpack.c.b16 %v1907, %v1906
    %v2291 = vpack.c.b16 %v1909, %v1908
    %v2292 = vpack.c.b16 %v1911, %v1910
    %v2293 = vpack.c.b16 %v1913, %v1912
    %v2294 = vpack.c.b16 %v1915, %v1914
    %v2295 = vpack.c.b16 %v1917, %v1916
    %v2296 = vpack.c.b16 %v1919, %v1918
    %v2297 = vpack.c.b16 %v1921, %v1920
    %v2298 = vpack.c.b16 %v1923, %v1922
    %v2299 = vpack.c.b16 %v1925, %v1924
    %v2300 = vpack.c.b16 %v1927, %v1926
    %v2301 = vpack.c.b16 %v1929, %v1928
    %v2302 = vpack.c.b16 %v1931, %v1930
    %v2303 = vpack.c.b16 %v1933, %v1932
    %v2304 = vpack.c.b16 %v1935, %v1934
    %v2305 = vpack.c.b16 %v1937, %v1936
    %v2306 = vpack.c.b16 %v1939, %v1938
    %v2307 = vpack.c.b16 %v1941, %v1940
    %v2308 = vpack.c.b16 %v1943, %v1942
    %v2309 = vpack.c.b16 %v1945, %v1944
    %v2310 = vpack.c.b16 %v1947, %v1946
    %v2311 = vpack.c.b16 %v1949, %v1948
    %v2312 = vpack.c.b16 %v1951, %v1950
    %v2313 = vpack.c.b16 %v1953, %v1952
    %v2314 = vpack.c.b16 %v1955, %v1954
    %v2315 = vpack.c.b16 %v1957, %v1956
    %v2316 = vpack.c.b16 %v1959, %v1958
    %v2317 = vpack.c.b16 %v1961, %v1960
    %v2318 = vpack.c.b16 %v1963, %v1962
    %v2319 = vpack.c.b16 %v1965, %v1964
    %v2320 = vpack.c.b16 %v1967, %v1966
    %v2321 = vpack.c.b16 %v1969, %v1968
    %v2322 = vpack.c.b16 %v1971, %v1970
    %v2323 = vpack.c.b16 %v1973, %v1972
    %v2324 = vpack.c.b16 %v1975, %v1974
    %v2325 = vpack.c.b16 %v1977, %v1976
    %v2326 = vpack.c.b16 %v1979, %v1978
    %v2327 = vpack.c.b16 %v1981, %v1980
    %v2328 = vpack.c.b16 %v1983, %v1982
    %v2329 = vpack.c.b16 %v1985, %v1984
    %v2330 = vpack.c.b16 %v1987, %v1986
    %v2331 = vpack.c.b16 %v1989, %v1988
    %v2332 = vpack.c.b16 %v1991, %v1990
    %v2333 = vpack.c.b16 %v1993, %v1992
    %v2334 = vpack.c.b16 %v1995, %v1994
    %v2335 = vpack.c.b16 %v1997, %v1996
    %v2336 = vpack.c.b16 %v1999, %v1998
    %v2337 = vpack.c.b16 %v2001, %v2000
    %v2338 = vpack.c.b16 %v2003, %v2002
    %v2339 = vpack.c.b16 %v2005, %v2004
    %v2340 = vpack.c.b16 %v2007, %v2006
    %v2341 = vpack.c.b16 %v2009, %v2008
    %v2342 = vpack.c.b16 %v2011, %v2010
    %v2343 = vpack.c.b16 %v2013, %v2012
    %v2344 = vpack.c.b16 %v2015, %v2014
    %v2345 = vpack.c.b16 %v2017, %v2016
    %v2346 = vpack.c.b16 %v2019, %v2018
    %v2347 = vpack.c.b16 %v2021, %v2020
    %v2348 = vpack.c.b16 %v2023, %v2022
    %v2349 = vpack.c.b16 %v2025, %v2024
    %v2350 = vpack.c.b16 %v2027, %v2026
    %v2351 = vpack.c.b16 %v2029, %v2028
    %v2352 = vpack.c.b16 %v2031, %v2030
    %v2353 = vpack.c.b16 %v2033, %v2032
    %v2354 = vpack.c.b16 %v2035, %v2034
    %v2355 = vpack.c.b16 %v2037, %v2036
    %v2356 = vpack.c.b16 %v2039, %v2038
    %v2357 = vpack.c.b16 %v2041, %v2040
    %v2358 = vpack.c.b16 %v2043, %v2042
    %v2359 = vpack.c.b16 %v2045, %v2044
    %v2360 = vpack.c.b16 %v2047, %v2046
    %v2361 = vpack.c.b16 %v2048, %v2048
    %vm2674 = vcmask 64512
    %v2676 = vsel %vm2674, %v166, 0
    %vm2678 = vcmask 1043456
    %v2680 = vsel %vm2678, %v2361, 0
    %2682 = vmatprep.subr.bf16.mxu0 0
    %2683 = vmatpush1.bf16.msra.mxu0 %v2049
    %2684 = vmatprep.subr.bf16.mxu0 0
    %2685 = vmatpush1.bf16.msra.mxu0 %v2050
    %2686 = vmatprep.subr.bf16.mxu0 0
    %2687 = vmatpush1.bf16.msra.mxu0 %v2051
    %2688 = vmatprep.subr.bf16.mxu0 0
    %2689 = vmatpush1.bf16.msra.mxu0 %v2052
    %2690 = vmatprep.subr.bf16.mxu0 0
    %2691 = vmatpush1.bf16.msra.mxu0 %v2053
    %2692 = vmatprep.subr.bf16.mxu0 0
    %2693 = vmatpush1.bf16.msra.mxu0 %v2054
    %2694 = vmatprep.subr.bf16.mxu0 0
    %2695 = vmatpush1.bf16.msra.mxu0 %v2055
    %2696 = vmatprep.subr.bf16.mxu0 0
    %2697 = vmatpush1.bf16.msra.mxu0 %v2056
    %2698 = vmatprep.subr.bf16.mxu0 0
    %2699 = vmatpush1.bf16.msra.mxu0 %v2057
    %2700 = vmatprep.subr.bf16.mxu0 0
    %2701 = vmatpush1.bf16.msra.mxu0 %v2058
    %2702 = vmatprep.subr.bf16.mxu0 0
    %2703 = vmatpush1.bf16.msra.mxu0 %v2059
    %2704 = vmatprep.subr.bf16.mxu0 0
    %2705 = vmatpush1.bf16.msra.mxu0 %v2060
    %2706 = vmatprep.subr.bf16.mxu0 0
    %2707 = vmatpush1.bf16.msra.mxu0 %v2061
    %2708 = vmatprep.subr.bf16.mxu0 0
    %2709 = vmatpush1.bf16.msra.mxu0 %v2062
    %2710 = vmatprep.subr.bf16.mxu0 0
    %2711 = vmatpush1.bf16.msra.mxu0 %v2063
    %2712 = vmatprep.subr.bf16.mxu0 0
    %2713 = vmatpush1.bf16.msra.mxu0 %v2064
    %2714 = vmatprep.mubr.bf16.mxu0 %v128
    %2715 = vmatmul.mubr.bf16.gmra.mrb[0].mxu0 %v127
    %v2716 = vpop.f32.mrb[0].mxu0
    %v2717 = vadd.f32 %v797, %v2716
    %v2718 = vpop.f32.mrb[0].mxu0
    %v2719 = vpop.f32.mrb[0].mxu0
    %v2720 = vpop.f32.mrb[0].mxu0
    %2721 = vdwg.mxu0
    %2722 = vmatprep.subr.bf16.mxu0 0
    %2723 = vmatpush1.bf16.msra.mxu0 %v2065
    %2724 = vmatprep.subr.bf16.mxu0 0
    %2725 = vmatpush1.bf16.msra.mxu0 %v2066
    %2726 = vmatprep.subr.bf16.mxu0 0
    %2727 = vmatpush1.bf16.msra.mxu0 %v2067
    %2728 = vmatprep.subr.bf16.mxu0 0
    %2729 = vmatpush1.bf16.msra.mxu0 %v2068
    %2730 = vmatprep.subr.bf16.mxu0 0
    %2731 = vmatpush1.bf16.msra.mxu0 %v2069
    %2732 = vmatprep.subr.bf16.mxu0 0
    %2733 = vmatpush1.bf16.msra.mxu0 %v2070
    %2734 = vmatprep.subr.bf16.mxu0 0
    %2735 = vmatpush1.bf16.msra.mxu0 %v2071
    %2736 = vmatprep.subr.bf16.mxu0 0
    %2737 = vmatpush1.bf16.msra.mxu0 %v2072
    %2738 = vmatprep.subr.bf16.mxu0 0
    %2739 = vmatpush1.bf16.msra.mxu0 %v2073
    %2740 = vmatprep.subr.bf16.mxu0 0
    %2741 = vmatpush1.bf16.msra.mxu0 %v2074
    %2742 = vmatprep.subr.bf16.mxu0 0
    %2743 = vmatpush1.bf16.msra.mxu0 %v2075
    %2744 = vmatprep.subr.bf16.mxu0 0
    %2745 = vmatpush1.bf16.msra.mxu0 %v2076
    %2746 = vmatprep.subr.bf16.mxu0 0
    %2747 = vmatpush1.bf16.msra.mxu0 %v2077
    %2748 = vmatprep.subr.bf16.mxu0 0
    %2749 = vmatpush1.bf16.msra.mxu0 %v2078
    %2750 = vmatprep.subr.bf16.mxu0 0
    %2751 = vmatpush1.bf16.msra.mxu0 %v2079
    %2752 = vmatprep.subr.bf16.mxu0 0
    %2753 = vmatpush1.bf16.msra.mxu0 %v2080
    %2754 = vmatprep.mubr.bf16.mxu0 %v130
    %2755 = vmatmul.mubr.bf16.gmra.mrb[0].mxu0 %v129
    %v2756 = vpop.f32.mrb[0].mxu0
    %v2757 = vadd.f32 %v2717, %v2756
    %v2758 = vpop.f32.mrb[0].mxu0
    %v2759 = vpop.f32.mrb[0].mxu0
    %v2760 = vpop.f32.mrb[0].mxu0
    %2761 = vdwg.mxu0
    %2762 = vmatprep.subr.bf16.mxu0 0
    %2763 = vmatpush1.bf16.msra.mxu0 %v2081
    %2764 = vmatprep.subr.bf16.mxu0 0
    %2765 = vmatpush1.bf16.msra.mxu0 %v2082
    %2766 = vmatprep.subr.bf16.mxu0 0
    %2767 = vmatpush1.bf16.msra.mxu0 %v2083
    %2768 = vmatprep.subr.bf16.mxu0 0
    %2769 = vmatpush1.bf16.msra.mxu0 %v2084
    %2770 = vmatprep.subr.bf16.mxu0 0
    %2771 = vmatpush1.bf16.msra.mxu0 %v2085
    %2772 = vmatprep.subr.bf16.mxu0 0
    %2773 = vmatpush1.bf16.msra.mxu0 %v2086
    %2774 = vmatprep.subr.bf16.mxu0 0
    %2775 = vmatpush1.bf16.msra.mxu0 %v2087
    %2776 = vmatprep.subr.bf16.mxu0 0
    %2777 = vmatpush1.bf16.msra.mxu0 %v2088
    %2778 = vmatprep.subr.bf16.mxu0 0
    %2779 = vmatpush1.bf16.msra.mxu0 %v2089
    %2780 = vmatprep.subr.bf16.mxu0 0
    %2781 = vmatpush1.bf16.msra.mxu0 %v2090
    %2782 = vmatprep.subr.bf16.mxu0 0
    %2783 = vmatpush1.bf16.msra.mxu0 %v2091
    %2784 = vmatprep.subr.bf16.mxu0 0
    %2785 = vmatpush1.bf16.msra.mxu0 %v2092
    %2786 = vmatprep.subr.bf16.mxu0 0
    %2787 = vmatpush1.bf16.msra.mxu0 %v2093
    %2788 = vmatprep.subr.bf16.mxu0 0
    %2789 = vmatpush1.bf16.msra.mxu0 %v2094
    %2790 = vmatprep.subr.bf16.mxu0 0
    %2791 = vmatpush1.bf16.msra.mxu0 %v2095
    %2792 = vmatprep.subr.bf16.mxu0 0
    %2793 = vmatpush1.bf16.msra.mxu0 %v2096
    %2794 = vmatprep.mubr.bf16.mxu0 %v132
    %2795 = vmatmul.mubr.bf16.gmra.mrb[0].mxu0 %v131
    %v2796 = vpop.f32.mrb[0].mxu0
    %v2797 = vadd.f32 %v2757, %v2796
    %v2798 = vpop.f32.mrb[0].mxu0
    %v2799 = vpop.f32.mrb[0].mxu0
    %v2800 = vpop.f32.mrb[0].mxu0
    %2801 = vdwg.mxu0
    %2802 = vmatprep.subr.bf16.mxu0 0
    %2803 = vmatpush1.bf16.msra.mxu0 %v2097
    %2804 = vmatprep.subr.bf16.mxu0 0
    %2805 = vmatpush1.bf16.msra.mxu0 %v2098
    %2806 = vmatprep.subr.bf16.mxu0 0
    %2807 = vmatpush1.bf16.msra.mxu0 %v2099
    %2808 = vmatprep.subr.bf16.mxu0 0
    %2809 = vmatpush1.bf16.msra.mxu0 %v2100
    %2810 = vmatprep.subr.bf16.mxu0 0
    %2811 = vmatpush1.bf16.msra.mxu0 %v2101
    %2812 = vmatprep.subr.bf16.mxu0 0
    %2813 = vmatpush1.bf16.msra.mxu0 %v2102
    %2814 = vmatprep.subr.bf16.mxu0 0
    %2815 = vmatpush1.bf16.msra.mxu0 %v2103
    %2816 = vmatprep.subr.bf16.mxu0 0
    %2817 = vmatpush1.bf16.msra.mxu0 %v2104
    %2818 = vmatprep.subr.bf16.mxu0 0
    %2819 = vmatpush1.bf16.msra.mxu0 %v2105
    %2820 = vmatprep.subr.bf16.mxu0 0
    %2821 = vmatpush1.bf16.msra.mxu0 %v2106
    %2822 = vmatprep.subr.bf16.mxu0 0
    %2823 = vmatpush1.bf16.msra.mxu0 %v2107
    %2824 = vmatprep.subr.bf16.mxu0 0
    %2825 = vmatpush1.bf16.msra.mxu0 %v2108
    %2826 = vmatprep.subr.bf16.mxu0 0
    %2827 = vmatpush1.bf16.msra.mxu0 %v2109
    %2828 = vmatprep.subr.bf16.mxu0 0
    %2829 = vmatpush1.bf16.msra.mxu0 %v2110
    %2830 = vmatprep.subr.bf16.mxu0 0
    %2831 = vmatpush1.bf16.msra.mxu0 %v2111
    %2832 = vmatprep.subr.bf16.mxu0 0
    %2833 = vmatpush1.bf16.msra.mxu0 %v2112
    %2834 = vmatprep.mubr.bf16.mxu0 %v134
    %2835 = vmatmul.mubr.bf16.gmra.mrb[0].mxu0 %v133
    %v2836 = vpop.f32.mrb[0].mxu0
    %v2837 = vadd.f32 %v2797, %v2836
    %v2838 = vpop.f32.mrb[0].mxu0
    %v2839 = vpop.f32.mrb[0].mxu0
    %v2840 = vpop.f32.mrb[0].mxu0
    %2841 = vdwg.mxu0
    %2842 = vmatprep.subr.bf16.mxu0 0
    %2843 = vmatpush1.bf16.msra.mxu0 %v2113
    %2844 = vmatprep.subr.bf16.mxu0 0
    %2845 = vmatpush1.bf16.msra.mxu0 %v2114
    %2846 = vmatprep.subr.bf16.mxu0 0
    %2847 = vmatpush1.bf16.msra.mxu0 %v2115
    %2848 = vmatprep.subr.bf16.mxu0 0
    %2849 = vmatpush1.bf16.msra.mxu0 %v2116
    %2850 = vmatprep.subr.bf16.mxu0 0
    %2851 = vmatpush1.bf16.msra.mxu0 %v2117
    %2852 = vmatprep.subr.bf16.mxu0 0
    %2853 = vmatpush1.bf16.msra.mxu0 %v2118
    %2854 = vmatprep.subr.bf16.mxu0 0
    %2855 = vmatpush1.bf16.msra.mxu0 %v2119
    %2856 = vmatprep.subr.bf16.mxu0 0
    %2857 = vmatpush1.bf16.msra.mxu0 %v2120
    %2858 = vmatprep.subr.bf16.mxu0 0
    %2859 = vmatpush1.bf16.msra.mxu0 %v2121
    %2860 = vmatprep.subr.bf16.mxu0 0
    %2861 = vmatpush1.bf16.msra.mxu0 %v2122
    %2862 = vmatprep.subr.bf16.mxu0 0
    %2863 = vmatpush1.bf16.msra.mxu0 %v2123
    %2864 = vmatprep.subr.bf16.mxu0 0
    %2865 = vmatpush1.bf16.msra.mxu0 %v2124
    %2866 = vmatprep.subr.bf16.mxu0 0
    %2867 = vmatpush1.bf16.msra.mxu0 %v2125
    %2868 = vmatprep.subr.bf16.mxu0 0
    %2869 = vmatpush1.bf16.msra.mxu0 %v2126
    %2870 = vmatprep.subr.bf16.mxu0 0
    %2871 = vmatpush1.bf16.msra.mxu0 %v2127
    %2872 = vmatprep.subr.bf16.mxu0 0
    %2873 = vmatpush1.bf16.msra.mxu0 %v2128
    %2874 = vmatprep.mubr.bf16.mxu0 %v136
    %2875 = vmatmul.mubr.bf16.gmra.mrb[0].mxu0 %v135
    %v2876 = vpop.f32.mrb[0].mxu0
    %v2877 = vadd.f32 %v2837, %v2876
    %v2878 = vpop.f32.mrb[0].mxu0
    %v2879 = vpop.f32.mrb[0].mxu0
    %v2880 = vpop.f32.mrb[0].mxu0
    %2881 = vdwg.mxu0
    %2882 = vmatprep.subr.bf16.mxu0 0
    %2883 = vmatpush1.bf16.msra.mxu0 %v2129
    %2884 = vmatprep.subr.bf16.mxu0 0
    %2885 = vmatpush1.bf16.msra.mxu0 %v2130
    %2886 = vmatprep.subr.bf16.mxu0 0
    %2887 = vmatpush1.bf16.msra.mxu0 %v2131
    %2888 = vmatprep.subr.bf16.mxu0 0
    %2889 = vmatpush1.bf16.msra.mxu0 %v2132
    %2890 = vmatprep.subr.bf16.mxu0 0
    %2891 = vmatpush1.bf16.msra.mxu0 %v2133
    %2892 = vmatprep.subr.bf16.mxu0 0
    %2893 = vmatpush1.bf16.msra.mxu0 %v2134
    %2894 = vmatprep.subr.bf16.mxu0 0
    %2895 = vmatpush1.bf16.msra.mxu0 %v2135
    %2896 = vmatprep.subr.bf16.mxu0 0
    %2897 = vmatpush1.bf16.msra.mxu0 %v2136
    %2898 = vmatprep.subr.bf16.mxu0 0
    %2899 = vmatpush1.bf16.msra.mxu0 %v2137
    %2900 = vmatprep.subr.bf16.mxu0 0
    %2901 = vmatpush1.bf16.msra.mxu0 %v2138
    %2902 = vmatprep.subr.bf16.mxu0 0
    %2903 = vmatpush1.bf16.msra.mxu0 %v2139
    %2904 = vmatprep.subr.bf16.mxu0 0
    %2905 = vmatpush1.bf16.msra.mxu0 %v2140
    %2906 = vmatprep.subr.bf16.mxu0 0
    %2907 = vmatpush1.bf16.msra.mxu0 %v2141
    %2908 = vmatprep.subr.bf16.mxu0 0
    %2909 = vmatpush1.bf16.msra.mxu0 %v2142
    %2910 = vmatprep.subr.bf16.mxu0 0
    %2911 = vmatpush1.bf16.msra.mxu0 %v2143
    %2912 = vmatprep.subr.bf16.mxu0 0
    %2913 = vmatpush1.bf16.msra.mxu0 %v2144
    %2914 = vmatprep.mubr.bf16.mxu0 %v138
    %2915 = vmatmul.mubr.bf16.gmra.mrb[0].mxu0 %v137
    %v2916 = vpop.f32.mrb[0].mxu0
    %v2917 = vadd.f32 %v2877, %v2916
    %v2918 = vpop.f32.mrb[0].mxu0
    %v2919 = vpop.f32.mrb[0].mxu0
    %v2920 = vpop.f32.mrb[0].mxu0
    %2921 = vdwg.mxu0
    %2922 = vmatprep.subr.bf16.mxu0 0
    %2923 = vmatpush1.bf16.msra.mxu0 %v2145
    %2924 = vmatprep.subr.bf16.mxu0 0
    %2925 = vmatpush1.bf16.msra.mxu0 %v2146
    %2926 = vmatprep.subr.bf16.mxu0 0
    %2927 = vmatpush1.bf16.msra.mxu0 %v2147
    %2928 = vmatprep.subr.bf16.mxu0 0
    %2929 = vmatpush1.bf16.msra.mxu0 %v2148
    %2930 = vmatprep.subr.bf16.mxu0 0
    %2931 = vmatpush1.bf16.msra.mxu0 %v2149
    %2932 = vmatprep.subr.bf16.mxu0 0
    %2933 = vmatpush1.bf16.msra.mxu0 %v2150
    %2934 = vmatprep.subr.bf16.mxu0 0
    %2935 = vmatpush1.bf16.msra.mxu0 %v2151
    %2936 = vmatprep.subr.bf16.mxu0 0
    %2937 = vmatpush1.bf16.msra.mxu0 %v2152
    %2938 = vmatprep.subr.bf16.mxu0 0
    %2939 = vmatpush1.bf16.msra.mxu0 %v2153
    %2940 = vmatprep.subr.bf16.mxu0 0
    %2941 = vmatpush1.bf16.msra.mxu0 %v2154
    %2942 = vmatprep.subr.bf16.mxu0 0
    %2943 = vmatpush1.bf16.msra.mxu0 %v2155
    %2944 = vmatprep.subr.bf16.mxu0 0
    %2945 = vmatpush1.bf16.msra.mxu0 %v2156
    %2946 = vmatprep.subr.bf16.mxu0 0
    %2947 = vmatpush1.bf16.msra.mxu0 %v2157
    %2948 = vmatprep.subr.bf16.mxu0 0
    %2949 = vmatpush1.bf16.msra.mxu0 %v2158
    %2950 = vmatprep.subr.bf16.mxu0 0
    %2951 = vmatpush1.bf16.msra.mxu0 %v2159
    %2952 = vmatprep.subr.bf16.mxu0 0
    %2953 = vmatpush1.bf16.msra.mxu0 %v2160
    %2954 = vmatprep.mubr.bf16.mxu0 %v140
    %2955 = vmatmul.mubr.bf16.gmra.mrb[0].mxu0 %v139
    %v2956 = vpop.f32.mrb[0].mxu0
    %v2957 = vadd.f32 %v2917, %v2956
    %v2958 = vpop.f32.mrb[0].mxu0
    %v2959 = vpop.f32.mrb[0].mxu0
    %v2960 = vpop.f32.mrb[0].mxu0
    %2961 = vdwg.mxu0
    %2962 = vmatprep.subr.bf16.mxu0 0
    %2963 = vmatpush1.bf16.msra.mxu0 %v2161
    %2964 = vmatprep.subr.bf16.mxu0 0
    %2965 = vmatpush1.bf16.msra.mxu0 %v2162
    %2966 = vmatprep.subr.bf16.mxu0 0
    %2967 = vmatpush1.bf16.msra.mxu0 %v2163
    %2968 = vmatprep.subr.bf16.mxu0 0
    %2969 = vmatpush1.bf16.msra.mxu0 %v2164
    %2970 = vmatprep.subr.bf16.mxu0 0
    %2971 = vmatpush1.bf16.msra.mxu0 %v2165
    %2972 = vmatprep.subr.bf16.mxu0 0
    %2973 = vmatpush1.bf16.msra.mxu0 %v2166
    %2974 = vmatprep.subr.bf16.mxu0 0
    %2975 = vmatpush1.bf16.msra.mxu0 %v2167
    %2976 = vmatprep.subr.bf16.mxu0 0
    %2977 = vmatpush1.bf16.msra.mxu0 %v2168
    %2978 = vmatprep.subr.bf16.mxu0 0
    %2979 = vmatpush1.bf16.msra.mxu0 %v2169
    %2980 = vmatprep.subr.bf16.mxu0 0
    %2981 = vmatpush1.bf16.msra.mxu0 %v2170
    %2982 = vmatprep.subr.bf16.mxu0 0
    %2983 = vmatpush1.bf16.msra.mxu0 %v2171
    %2984 = vmatprep.subr.bf16.mxu0 0
    %2985 = vmatpush1.bf16.msra.mxu0 %v2172
    %2986 = vmatprep.subr.bf16.mxu0 0
    %2987 = vmatpush1.bf16.msra.mxu0 %v2173
    %2988 = vmatprep.subr.bf16.mxu0 0
    %2989 = vmatpush1.bf16.msra.mxu0 %v2174
    %2990 = vmatprep.subr.bf16.mxu0 0
    %2991 = vmatpush1.bf16.msra.mxu0 %v2175
    %2992 = vmatprep.subr.bf16.mxu0 0
    %2993 = vmatpush1.bf16.msra.mxu0 %v2176
    %2994 = vmatprep.mubr.bf16.mxu0 %v142
    %2995 = vmatmul.mubr.bf16.gmra.mrb[0].mxu0 %v141
    %v2996 = vpop.f32.mrb[0].mxu0
    %v2997 = vadd.f32 %v2957, %v2996
    %v2998 = vpop.f32.mrb[0].mxu0
    %v2999 = vpop.f32.mrb[0].mxu0
    %v3000 = vpop.f32.mrb[0].mxu0
    %3001 = vdwg.mxu0
    %3002 = vmatprep.subr.bf16.mxu0 0
    %3003 = vmatpush1.bf16.msra.mxu0 %v2177
    %3004 = vmatprep.subr.bf16.mxu0 0
    %3005 = vmatpush1.bf16.msra.mxu0 %v2178
    %3006 = vmatprep.subr.bf16.mxu0 0
    %3007 = vmatpush1.bf16.msra.mxu0 %v2179
    %3008 = vmatprep.subr.bf16.mxu0 0
    %3009 = vmatpush1.bf16.msra.mxu0 %v2180
    %3010 = vmatprep.subr.bf16.mxu0 0
    %3011 = vmatpush1.bf16.msra.mxu0 %v2181
    %3012 = vmatprep.subr.bf16.mxu0 0
    %3013 = vmatpush1.bf16.msra.mxu0 %v2182
    %3014 = vmatprep.subr.bf16.mxu0 0
    %3015 = vmatpush1.bf16.msra.mxu0 %v2183
    %3016 = vmatprep.subr.bf16.mxu0 0
    %3017 = vmatpush1.bf16.msra.mxu0 %v2184
    %3018 = vmatprep.subr.bf16.mxu0 0
    %3019 = vmatpush1.bf16.msra.mxu0 %v2185
    %3020 = vmatprep.subr.bf16.mxu0 0
    %3021 = vmatpush1.bf16.msra.mxu0 %v2186
    %3022 = vmatprep.subr.bf16.mxu0 0
    %3023 = vmatpush1.bf16.msra.mxu0 %v2187
    %3024 = vmatprep.subr.bf16.mxu0 0
    %3025 = vmatpush1.bf16.msra.mxu0 %v2188
    %3026 = vmatprep.subr.bf16.mxu0 0
    %3027 = vmatpush1.bf16.msra.mxu0 %v2189
    %3028 = vmatprep.subr.bf16.mxu0 0
    %3029 = vmatpush1.bf16.msra.mxu0 %v2190
    %3030 = vmatprep.subr.bf16.mxu0 0
    %3031 = vmatpush1.bf16.msra.mxu0 %v2191
    %3032 = vmatprep.subr.bf16.mxu0 0
    %3033 = vmatpush1.bf16.msra.mxu0 %v2192
    %3034 = vmatprep.mubr.bf16.mxu0 %v144
    %3035 = vmatmul.mubr.bf16.gmra.mrb[0].mxu0 %v143
    %v3036 = vpop.f32.mrb[0].mxu0
    %v3037 = vadd.f32 %v2997, %v3036
    %v3038 = vpop.f32.mrb[0].mxu0
    %v3039 = vpop.f32.mrb[0].mxu0
    %v3040 = vpop.f32.mrb[0].mxu0
    %3041 = vdwg.mxu0
    %3042 = vmatprep.subr.bf16.mxu0 0
    %3043 = vmatpush1.bf16.msra.mxu0 %v2193
    %3044 = vmatprep.subr.bf16.mxu0 0
    %3045 = vmatpush1.bf16.msra.mxu0 %v2194
    %3046 = vmatprep.subr.bf16.mxu0 0
    %3047 = vmatpush1.bf16.msra.mxu0 %v2195
    %3048 = vmatprep.subr.bf16.mxu0 0
    %3049 = vmatpush1.bf16.msra.mxu0 %v2196
    %3050 = vmatprep.subr.bf16.mxu0 0
    %3051 = vmatpush1.bf16.msra.mxu0 %v2197
    %3052 = vmatprep.subr.bf16.mxu0 0
    %3053 = vmatpush1.bf16.msra.mxu0 %v2198
    %3054 = vmatprep.subr.bf16.mxu0 0
    %3055 = vmatpush1.bf16.msra.mxu0 %v2199
    %3056 = vmatprep.subr.bf16.mxu0 0
    %3057 = vmatpush1.bf16.msra.mxu0 %v2200
    %3058 = vmatprep.subr.bf16.mxu0 0
    %3059 = vmatpush1.bf16.msra.mxu0 %v2201
    %3060 = vmatprep.subr.bf16.mxu0 0
    %3061 = vmatpush1.bf16.msra.mxu0 %v2202
    %3062 = vmatprep.subr.bf16.mxu0 0
    %3063 = vmatpush1.bf16.msra.mxu0 %v2203
    %3064 = vmatprep.subr.bf16.mxu0 0
    %3065 = vmatpush1.bf16.msra.mxu0 %v2204
    %3066 = vmatprep.subr.bf16.mxu0 0
    %3067 = vmatpush1.bf16.msra.mxu0 %v2205
    %3068 = vmatprep.subr.bf16.mxu0 0
    %3069 = vmatpush1.bf16.msra.mxu0 %v2206
    %3070 = vmatprep.subr.bf16.mxu0 0
    %3071 = vmatpush1.bf16.msra.mxu0 %v2207
    %3072 = vmatprep.subr.bf16.mxu0 0
    %3073 = vmatpush1.bf16.msra.mxu0 %v2208
    %3074 = vmatprep.mubr.bf16.mxu0 %v146
    %3075 = vmatmul.mubr.bf16.gmra.mrb[0].mxu0 %v145
    %v3076 = vpop.f32.mrb[0].mxu0
    %v3077 = vadd.f32 %v3037, %v3076
    %v3078 = vpop.f32.mrb[0].mxu0
    %v3079 = vpop.f32.mrb[0].mxu0
    %v3080 = vpop.f32.mrb[0].mxu0
    %3081 = vdwg.mxu0
    %3082 = vmatprep.subr.bf16.mxu0 0
    %3083 = vmatpush1.bf16.msra.mxu0 %v2209
    %3084 = vmatprep.subr.bf16.mxu0 0
    %3085 = vmatpush1.bf16.msra.mxu0 %v2210
    %3086 = vmatprep.subr.bf16.mxu0 0
    %3087 = vmatpush1.bf16.msra.mxu0 %v2211
    %3088 = vmatprep.subr.bf16.mxu0 0
    %3089 = vmatpush1.bf16.msra.mxu0 %v2212
    %3090 = vmatprep.subr.bf16.mxu0 0
    %3091 = vmatpush1.bf16.msra.mxu0 %v2213
    %3092 = vmatprep.subr.bf16.mxu0 0
    %3093 = vmatpush1.bf16.msra.mxu0 %v2214
    %3094 = vmatprep.subr.bf16.mxu0 0
    %3095 = vmatpush1.bf16.msra.mxu0 %v2215
    %3096 = vmatprep.subr.bf16.mxu0 0
    %3097 = vmatpush1.bf16.msra.mxu0 %v2216
    %3098 = vmatprep.subr.bf16.mxu0 0
    %3099 = vmatpush1.bf16.msra.mxu0 %v2217
    %3100 = vmatprep.subr.bf16.mxu0 0
    %3101 = vmatpush1.bf16.msra.mxu0 %v2218
    %3102 = vmatprep.subr.bf16.mxu0 0
    %3103 = vmatpush1.bf16.msra.mxu0 %v2219
    %3104 = vmatprep.subr.bf16.mxu0 0
    %3105 = vmatpush1.bf16.msra.mxu0 %v2220
    %3106 = vmatprep.subr.bf16.mxu0 0
    %3107 = vmatpush1.bf16.msra.mxu0 %v2221
    %3108 = vmatprep.subr.bf16.mxu0 0
    %3109 = vmatpush1.bf16.msra.mxu0 %v2222
    %3110 = vmatprep.subr.bf16.mxu0 0
    %3111 = vmatpush1.bf16.msra.mxu0 %v2223
    %3112 = vmatprep.subr.bf16.mxu0 0
    %3113 = vmatpush1.bf16.msra.mxu0 %v2224
    %3114 = vmatprep.mubr.bf16.mxu0 %v148
    %3115 = vmatmul.mubr.bf16.gmra.mrb[0].mxu0 %v147
    %v3116 = vpop.f32.mrb[0].mxu0
    %v3117 = vadd.f32 %v3077, %v3116
    %v3118 = vpop.f32.mrb[0].mxu0
    %v3119 = vpop.f32.mrb[0].mxu0
    %v3120 = vpop.f32.mrb[0].mxu0
    %3121 = vdwg.mxu0
    %3122 = vmatprep.subr.bf16.mxu0 0
    %3123 = vmatpush1.bf16.msra.mxu0 %v2225
    %3124 = vmatprep.subr.bf16.mxu0 0
    %3125 = vmatpush1.bf16.msra.mxu0 %v2226
    %3126 = vmatprep.subr.bf16.mxu0 0
    %3127 = vmatpush1.bf16.msra.mxu0 %v2227
    %3128 = vmatprep.subr.bf16.mxu0 0
    %3129 = vmatpush1.bf16.msra.mxu0 %v2228
    %3130 = vmatprep.subr.bf16.mxu0 0
    %3131 = vmatpush1.bf16.msra.mxu0 %v2229
    %3132 = vmatprep.subr.bf16.mxu0 0
    %3133 = vmatpush1.bf16.msra.mxu0 %v2230
    %3134 = vmatprep.subr.bf16.mxu0 0
    %3135 = vmatpush1.bf16.msra.mxu0 %v2231
    %3136 = vmatprep.subr.bf16.mxu0 0
    %3137 = vmatpush1.bf16.msra.mxu0 %v2232
    %3138 = vmatprep.subr.bf16.mxu0 0
    %3139 = vmatpush1.bf16.msra.mxu0 %v2233
    %3140 = vmatprep.subr.bf16.mxu0 0
    %3141 = vmatpush1.bf16.msra.mxu0 %v2234
    %3142 = vmatprep.subr.bf16.mxu0 0
    %3143 = vmatpush1.bf16.msra.mxu0 %v2235
    %3144 = vmatprep.subr.bf16.mxu0 0
    %3145 = vmatpush1.bf16.msra.mxu0 %v2236
    %3146 = vmatprep.subr.bf16.mxu0 0
    %3147 = vmatpush1.bf16.msra.mxu0 %v2237
    %3148 = vmatprep.subr.bf16.mxu0 0
    %3149 = vmatpush1.bf16.msra.mxu0 %v2238
    %3150 = vmatprep.subr.bf16.mxu0 0
    %3151 = vmatpush1.bf16.msra.mxu0 %v2239
    %3152 = vmatprep.subr.bf16.mxu0 0
    %3153 = vmatpush1.bf16.msra.mxu0 %v2240
    %3154 = vmatprep.mubr.bf16.mxu0 %v150
    %3155 = vmatmul.mubr.bf16.gmra.mrb[0].mxu0 %v149
    %v3156 = vpop.f32.mrb[0].mxu0
    %v3157 = vadd.f32 %v3117, %v3156
    %v3158 = vpop.f32.mrb[0].mxu0
    %v3159 = vpop.f32.mrb[0].mxu0
    %v3160 = vpop.f32.mrb[0].mxu0
    %3161 = vdwg.mxu0
    %3162 = vmatprep.subr.bf16.mxu0 0
    %3163 = vmatpush1.bf16.msra.mxu0 %v2241
    %3164 = vmatprep.subr.bf16.mxu0 0
    %3165 = vmatpush1.bf16.msra.mxu0 %v2242
    %3166 = vmatprep.subr.bf16.mxu0 0
    %3167 = vmatpush1.bf16.msra.mxu0 %v2243
    %3168 = vmatprep.subr.bf16.mxu0 0
    %3169 = vmatpush1.bf16.msra.mxu0 %v2244
    %3170 = vmatprep.subr.bf16.mxu0 0
    %3171 = vmatpush1.bf16.msra.mxu0 %v2245
    %3172 = vmatprep.subr.bf16.mxu0 0
    %3173 = vmatpush1.bf16.msra.mxu0 %v2246
    %3174 = vmatprep.subr.bf16.mxu0 0
    %3175 = vmatpush1.bf16.msra.mxu0 %v2247
    %3176 = vmatprep.subr.bf16.mxu0 0
    %3177 = vmatpush1.bf16.msra.mxu0 %v2248
    %3178 = vmatprep.subr.bf16.mxu0 0
    %3179 = vmatpush1.bf16.msra.mxu0 %v2249
    %3180 = vmatprep.subr.bf16.mxu0 0
    %3181 = vmatpush1.bf16.msra.mxu0 %v2250
    %3182 = vmatprep.subr.bf16.mxu0 0
    %3183 = vmatpush1.bf16.msra.mxu0 %v2251
    %3184 = vmatprep.subr.bf16.mxu0 0
    %3185 = vmatpush1.bf16.msra.mxu0 %v2252
    %3186 = vmatprep.subr.bf16.mxu0 0
    %3187 = vmatpush1.bf16.msra.mxu0 %v2253
    %3188 = vmatprep.subr.bf16.mxu0 0
    %3189 = vmatpush1.bf16.msra.mxu0 %v2254
    %3190 = vmatprep.subr.bf16.mxu0 0
    %3191 = vmatpush1.bf16.msra.mxu0 %v2255
    %3192 = vmatprep.subr.bf16.mxu0 0
    %3193 = vmatpush1.bf16.msra.mxu0 %v2256
    %3194 = vmatprep.mubr.bf16.mxu0 %v152
    %3195 = vmatmul.mubr.bf16.gmra.mrb[0].mxu0 %v151
    %v3196 = vpop.f32.mrb[0].mxu0
    %v3197 = vadd.f32 %v3157, %v3196
    %v3198 = vpop.f32.mrb[0].mxu0
    %v3199 = vpop.f32.mrb[0].mxu0
    %v3200 = vpop.f32.mrb[0].mxu0
    %3201 = vdwg.mxu0
    %3202 = vmatprep.subr.bf16.mxu0 0
    %3203 = vmatpush1.bf16.msra.mxu0 %v2257
    %3204 = vmatprep.subr.bf16.mxu0 0
    %3205 = vmatpush1.bf16.msra.mxu0 %v2258
    %3206 = vmatprep.subr.bf16.mxu0 0
    %3207 = vmatpush1.bf16.msra.mxu0 %v2259
    %3208 = vmatprep.subr.bf16.mxu0 0
    %3209 = vmatpush1.bf16.msra.mxu0 %v2260
    %3210 = vmatprep.subr.bf16.mxu0 0
    %3211 = vmatpush1.bf16.msra.mxu0 %v2261
    %3212 = vmatprep.subr.bf16.mxu0 0
    %3213 = vmatpush1.bf16.msra.mxu0 %v2262
    %3214 = vmatprep.subr.bf16.mxu0 0
    %3215 = vmatpush1.bf16.msra.mxu0 %v2263
    %3216 = vmatprep.subr.bf16.mxu0 0
    %3217 = vmatpush1.bf16.msra.mxu0 %v2264
    %3218 = vmatprep.subr.bf16.mxu0 0
    %3219 = vmatpush1.bf16.msra.mxu0 %v2265
    %3220 = vmatprep.subr.bf16.mxu0 0
    %3221 = vmatpush1.bf16.msra.mxu0 %v2266
    %3222 = vmatprep.subr.bf16.mxu0 0
    %3223 = vmatpush1.bf16.msra.mxu0 %v2267
    %3224 = vmatprep.subr.bf16.mxu0 0
    %3225 = vmatpush1.bf16.msra.mxu0 %v2268
    %3226 = vmatprep.subr.bf16.mxu0 0
    %3227 = vmatpush1.bf16.msra.mxu0 %v2269
    %3228 = vmatprep.subr.bf16.mxu0 0
    %3229 = vmatpush1.bf16.msra.mxu0 %v2270
    %3230 = vmatprep.subr.bf16.mxu0 0
    %3231 = vmatpush1.bf16.msra.mxu0 %v2271
    %3232 = vmatprep.subr.bf16.mxu0 0
    %3233 = vmatpush1.bf16.msra.mxu0 %v2272
    %3234 = vmatprep.mubr.bf16.mxu0 %v154
    %3235 = vmatmul.mubr.bf16.gmra.mrb[0].mxu0 %v153
    %v3236 = vpop.f32.mrb[0].mxu0
    %v3237 = vadd.f32 %v3197, %v3236
    %v3238 = vpop.f32.mrb[0].mxu0
    %v3239 = vpop.f32.mrb[0].mxu0
    %v3240 = vpop.f32.mrb[0].mxu0
    %3241 = vdwg.mxu0
    %3242 = vmatprep.subr.bf16.mxu0 0
    %3243 = vmatpush1.bf16.msra.mxu0 %v2273
    %3244 = vmatprep.subr.bf16.mxu0 0
    %3245 = vmatpush1.bf16.msra.mxu0 %v2274
    %3246 = vmatprep.subr.bf16.mxu0 0
    %3247 = vmatpush1.bf16.msra.mxu0 %v2275
    %3248 = vmatprep.subr.bf16.mxu0 0
    %3249 = vmatpush1.bf16.msra.mxu0 %v2276
    %3250 = vmatprep.subr.bf16.mxu0 0
    %3251 = vmatpush1.bf16.msra.mxu0 %v2277
    %3252 = vmatprep.subr.bf16.mxu0 0
    %3253 = vmatpush1.bf16.msra.mxu0 %v2278
    %3254 = vmatprep.subr.bf16.mxu0 0
    %3255 = vmatpush1.bf16.msra.mxu0 %v2279
    %3256 = vmatprep.subr.bf16.mxu0 0
    %3257 = vmatpush1.bf16.msra.mxu0 %v2280
    %3258 = vmatprep.subr.bf16.mxu0 0
    %3259 = vmatpush1.bf16.msra.mxu0 %v2281
    %3260 = vmatprep.subr.bf16.mxu0 0
    %3261 = vmatpush1.bf16.msra.mxu0 %v2282
    %3262 = vmatprep.subr.bf16.mxu0 0
    %3263 = vmatpush1.bf16.msra.mxu0 %v2283
    %3264 = vmatprep.subr.bf16.mxu0 0
    %3265 = vmatpush1.bf16.msra.mxu0 %v2284
    %3266 = vmatprep.subr.bf16.mxu0 0
    %3267 = vmatpush1.bf16.msra.mxu0 %v2285
    %3268 = vmatprep.subr.bf16.mxu0 0
    %3269 = vmatpush1.bf16.msra.mxu0 %v2286
    %3270 = vmatprep.subr.bf16.mxu0 0
    %3271 = vmatpush1.bf16.msra.mxu0 %v2287
    %3272 = vmatprep.subr.bf16.mxu0 0
    %3273 = vmatpush1.bf16.msra.mxu0 %v2288
    %3274 = vmatprep.mubr.bf16.mxu0 %v156
    %3275 = vmatmul.mubr.bf16.gmra.mrb[0].mxu0 %v155
    %v3276 = vpop.f32.mrb[0].mxu0
    %v3277 = vadd.f32 %v3237, %v3276
    %v3278 = vpop.f32.mrb[0].mxu0
    %v3279 = vpop.f32.mrb[0].mxu0
    %v3280 = vpop.f32.mrb[0].mxu0
    %3281 = vdwg.mxu0
    %3282 = vmatprep.subr.bf16.mxu0 0
    %3283 = vmatpush1.bf16.msra.mxu0 %v2289
    %3284 = vmatprep.subr.bf16.mxu0 0
    %3285 = vmatpush1.bf16.msra.mxu0 %v2290
    %3286 = vmatprep.subr.bf16.mxu0 0
    %3287 = vmatpush1.bf16.msra.mxu0 %v2291
    %3288 = vmatprep.subr.bf16.mxu0 0
    %3289 = vmatpush1.bf16.msra.mxu0 %v2292
    %3290 = vmatprep.subr.bf16.mxu0 0
    %3291 = vmatpush1.bf16.msra.mxu0 %v2293
    %3292 = vmatprep.subr.bf16.mxu0 0
    %3293 = vmatpush1.bf16.msra.mxu0 %v2294
    %3294 = vmatprep.subr.bf16.mxu0 0
    %3295 = vmatpush1.bf16.msra.mxu0 %v2295
    %3296 = vmatprep.subr.bf16.mxu0 0
    %3297 = vmatpush1.bf16.msra.mxu0 %v2296
    %3298 = vmatprep.subr.bf16.mxu0 0
    %3299 = vmatpush1.bf16.msra.mxu0 %v2297
    %3300 = vmatprep.subr.bf16.mxu0 0
    %3301 = vmatpush1.bf16.msra.mxu0 %v2298
    %3302 = vmatprep.subr.bf16.mxu0 0
    %3303 = vmatpush1.bf16.msra.mxu0 %v2299
    %3304 = vmatprep.subr.bf16.mxu0 0
    %3305 = vmatpush1.bf16.msra.mxu0 %v2300
    %3306 = vmatprep.subr.bf16.mxu0 0
    %3307 = vmatpush1.bf16.msra.mxu0 %v2301
    %3308 = vmatprep.subr.bf16.mxu0 0
    %3309 = vmatpush1.bf16.msra.mxu0 %v2302
    %3310 = vmatprep.subr.bf16.mxu0 0
    %3311 = vmatpush1.bf16.msra.mxu0 %v2303
    %3312 = vmatprep.subr.bf16.mxu0 0
    %3313 = vmatpush1.bf16.msra.mxu0 %v2304
    %3314 = vmatprep.mubr.bf16.mxu0 %v158
    %3315 = vmatmul.mubr.bf16.gmra.mrb[0].mxu0 %v157
    %v3316 = vpop.f32.mrb[0].mxu0
    %v3317 = vadd.f32 %v3277, %v3316
    %v3318 = vpop.f32.mrb[0].mxu0
    %v3319 = vpop.f32.mrb[0].mxu0
    %v3320 = vpop.f32.mrb[0].mxu0
    %3321 = vdwg.mxu0
    %3322 = vmatprep.subr.bf16.mxu0 0
    %3323 = vmatpush1.bf16.msra.mxu0 %v2305
    %3324 = vmatprep.subr.bf16.mxu0 0
    %3325 = vmatpush1.bf16.msra.mxu0 %v2306
    %3326 = vmatprep.subr.bf16.mxu0 0
    %3327 = vmatpush1.bf16.msra.mxu0 %v2307
    %3328 = vmatprep.subr.bf16.mxu0 0
    %3329 = vmatpush1.bf16.msra.mxu0 %v2308
    %3330 = vmatprep.subr.bf16.mxu0 0
    %3331 = vmatpush1.bf16.msra.mxu0 %v2309
    %3332 = vmatprep.subr.bf16.mxu0 0
    %3333 = vmatpush1.bf16.msra.mxu0 %v2310
    %3334 = vmatprep.subr.bf16.mxu0 0
    %3335 = vmatpush1.bf16.msra.mxu0 %v2311
    %3336 = vmatprep.subr.bf16.mxu0 0
    %3337 = vmatpush1.bf16.msra.mxu0 %v2312
    %3338 = vmatprep.subr.bf16.mxu0 0
    %3339 = vmatpush1.bf16.msra.mxu0 %v2313
    %3340 = vmatprep.subr.bf16.mxu0 0
    %3341 = vmatpush1.bf16.msra.mxu0 %v2314
    %3342 = vmatprep.subr.bf16.mxu0 0
    %3343 = vmatpush1.bf16.msra.mxu0 %v2315
    %3344 = vmatprep.subr.bf16.mxu0 0
    %3345 = vmatpush1.bf16.msra.mxu0 %v2316
    %3346 = vmatprep.subr.bf16.mxu0 0
    %3347 = vmatpush1.bf16.msra.mxu0 %v2317
    %3348 = vmatprep.subr.bf16.mxu0 0
    %3349 = vmatpush1.bf16.msra.mxu0 %v2318
    %3350 = vmatprep.subr.bf16.mxu0 0
    %3351 = vmatpush1.bf16.msra.mxu0 %v2319
    %3352 = vmatprep.subr.bf16.mxu0 0
    %3353 = vmatpush1.bf16.msra.mxu0 %v2320
    %3354 = vmatprep.mubr.bf16.mxu0 %v160
    %3355 = vmatmul.mubr.bf16.gmra.mrb[0].mxu0 %v159
    %v3356 = vpop.f32.mrb[0].mxu0
    %v3357 = vadd.f32 %v3317, %v3356
    %v3358 = vpop.f32.mrb[0].mxu0
    %v3359 = vpop.f32.mrb[0].mxu0
    %v3360 = vpop.f32.mrb[0].mxu0
    %3361 = vdwg.mxu0
    %3362 = vmatprep.subr.bf16.mxu0 0
    %3363 = vmatpush1.bf16.msra.mxu0 %v2321
    %3364 = vmatprep.subr.bf16.mxu0 0
    %3365 = vmatpush1.bf16.msra.mxu0 %v2322
    %3366 = vmatprep.subr.bf16.mxu0 0
    %3367 = vmatpush1.bf16.msra.mxu0 %v2323
    %3368 = vmatprep.subr.bf16.mxu0 0
    %3369 = vmatpush1.bf16.msra.mxu0 %v2324
    %3370 = vmatprep.subr.bf16.mxu0 0
    %3371 = vmatpush1.bf16.msra.mxu0 %v2325
    %3372 = vmatprep.subr.bf16.mxu0 0
    %3373 = vmatpush1.bf16.msra.mxu0 %v2326
    %3374 = vmatprep.subr.bf16.mxu0 0
    %3375 = vmatpush1.bf16.msra.mxu0 %v2327
    %3376 = vmatprep.subr.bf16.mxu0 0
    %3377 = vmatpush1.bf16.msra.mxu0 %v2328
    %3378 = vmatprep.subr.bf16.mxu0 0
    %3379 = vmatpush1.bf16.msra.mxu0 %v2329
    %3380 = vmatprep.subr.bf16.mxu0 0
    %3381 = vmatpush1.bf16.msra.mxu0 %v2330
    %3382 = vmatprep.subr.bf16.mxu0 0
    %3383 = vmatpush1.bf16.msra.mxu0 %v2331
    %3384 = vmatprep.subr.bf16.mxu0 0
    %3385 = vmatpush1.bf16.msra.mxu0 %v2332
    %3386 = vmatprep.subr.bf16.mxu0 0
    %3387 = vmatpush1.bf16.msra.mxu0 %v2333
    %3388 = vmatprep.subr.bf16.mxu0 0
    %3389 = vmatpush1.bf16.msra.mxu0 %v2334
    %3390 = vmatprep.subr.bf16.mxu0 0
    %3391 = vmatpush1.bf16.msra.mxu0 %v2335
    %3392 = vmatprep.subr.bf16.mxu0 0
    %3393 = vmatpush1.bf16.msra.mxu0 %v2336
    %3394 = vmatprep.mubr.bf16.mxu0 %v162
    %3395 = vmatmul.mubr.bf16.gmra.mrb[0].mxu0 %v161
    %v3396 = vpop.f32.mrb[0].mxu0
    %v3397 = vadd.f32 %v3357, %v3396
    %v3398 = vpop.f32.mrb[0].mxu0
    %v3399 = vpop.f32.mrb[0].mxu0
    %v3400 = vpop.f32.mrb[0].mxu0
    %3401 = vdwg.mxu0
    %3402 = vmatprep.subr.bf16.mxu0 0
    %3403 = vmatpush1.bf16.msra.mxu0 %v2337
    %3404 = vmatprep.subr.bf16.mxu0 0
    %3405 = vmatpush1.bf16.msra.mxu0 %v2338
    %3406 = vmatprep.subr.bf16.mxu0 0
    %3407 = vmatpush1.bf16.msra.mxu0 %v2339
    %3408 = vmatprep.subr.bf16.mxu0 0
    %3409 = vmatpush1.bf16.msra.mxu0 %v2340
    %3410 = vmatprep.subr.bf16.mxu0 0
    %3411 = vmatpush1.bf16.msra.mxu0 %v2341
    %3412 = vmatprep.subr.bf16.mxu0 0
    %3413 = vmatpush1.bf16.msra.mxu0 %v2342
    %3414 = vmatprep.subr.bf16.mxu0 0
    %3415 = vmatpush1.bf16.msra.mxu0 %v2343
    %3416 = vmatprep.subr.bf16.mxu0 0
    %3417 = vmatpush1.bf16.msra.mxu0 %v2344
    %3418 = vmatprep.subr.bf16.mxu0 0
    %3419 = vmatpush1.bf16.msra.mxu0 %v2345
    %3420 = vmatprep.subr.bf16.mxu0 0
    %3421 = vmatpush1.bf16.msra.mxu0 %v2346
    %3422 = vmatprep.subr.bf16.mxu0 0
    %3423 = vmatpush1.bf16.msra.mxu0 %v2347
    %3424 = vmatprep.subr.bf16.mxu0 0
    %3425 = vmatpush1.bf16.msra.mxu0 %v2348
    %3426 = vmatprep.subr.bf16.mxu0 0
    %3427 = vmatpush1.bf16.msra.mxu0 %v2349
    %3428 = vmatprep.subr.bf16.mxu0 0
    %3429 = vmatpush1.bf16.msra.mxu0 %v2350
    %3430 = vmatprep.subr.bf16.mxu0 0
    %3431 = vmatpush1.bf16.msra.mxu0 %v2351
    %3432 = vmatprep.subr.bf16.mxu0 0
    %3433 = vmatpush1.bf16.msra.mxu0 %v2352
    %3434 = vmatprep.mubr.bf16.mxu0 %v164
    %3435 = vmatmul.mubr.bf16.gmra.mrb[0].mxu0 %v163
    %v3436 = vpop.f32.mrb[0].mxu0
    %v3437 = vadd.f32 %v3397, %v3436
    %v3438 = vpop.f32.mrb[0].mxu0
    %v3439 = vpop.f32.mrb[0].mxu0
    %v3440 = vpop.f32.mrb[0].mxu0
    %3441 = vdwg.mxu0
    %3442 = vmatprep.subr.bf16.mxu0 0
    %3443 = vmatpush1.bf16.msra.mxu0 %v2353
    %3444 = vmatprep.subr.bf16.mxu0 0
    %3445 = vmatpush1.bf16.msra.mxu0 %v2354
    %3446 = vmatprep.subr.bf16.mxu0 0
    %3447 = vmatpush1.bf16.msra.mxu0 %v2355
    %3448 = vmatprep.subr.bf16.mxu0 0
    %3449 = vmatpush1.bf16.msra.mxu0 %v2356
    %3450 = vmatprep.subr.bf16.mxu0 0
    %3451 = vmatpush1.bf16.msra.mxu0 %v2357
    %3452 = vmatprep.subr.bf16.mxu0 0
    %3453 = vmatpush1.bf16.msra.mxu0 %v2358
    %3454 = vmatprep.subr.bf16.mxu0 0
    %3455 = vmatpush1.bf16.msra.mxu0 %v2359
    %3456 = vmatprep.subr.bf16.mxu0 0
    %3457 = vmatpush1.bf16.msra.mxu0 %v2360
    %3458 = vmatprep.subr.bf16.mxu0 0
    %3459 = vmatpush1.bf16.msra.mxu0 %v2680
    %3460 = vmatprep.subr.bf16.mxu0 0
    %3461 = vmatpush1.bf16.msra.mxu0 0
    %3462 = vmatprep.subr.bf16.mxu0 0
    %3463 = vmatpush1.bf16.msra.mxu0 0
    %3464 = vmatprep.subr.bf16.mxu0 0
    %3465 = vmatpush1.bf16.msra.mxu0 0
    %3466 = vmatprep.subr.bf16.mxu0 0
    %3467 = vmatpush1.bf16.msra.mxu0 0
    %3468 = vmatprep.subr.bf16.mxu0 0
    %3469 = vmatpush1.bf16.msra.mxu0 0
    %3470 = vmatprep.subr.bf16.mxu0 0
    %3471 = vmatpush1.bf16.msra.mxu0 0
    %3472 = vmatprep.subr.bf16.mxu0 0
    %3473 = vmatpush1.bf16.msra.mxu0 0
    %3474 = vmatprep.mubr.bf16.mxu0 %v2676
    %3475 = vmatmul.mubr.bf16.gmra.mrb[0].mxu0 %v165
    %v3476 = vpop.f32.mrb[0].mxu0
    %v3477 = vadd.f32 %v3437, %v3476
    %v3478 = vpop.f32.mrb[0].mxu0
    %v3479 = vpop.f32.mrb[0].mxu0
    %v3480 = vpop.f32.mrb[0].mxu0
    %3481 = vdwg.mxu0
    %v3482 = vmax.f32 %v3477, 0.0
    %v3483 = vpack.c.bf16 %v3482, %v3482
    %v3484 = vld [vmem:[%s3] sm:$0xf]
    %v3485 = vld [vmem:[%s3 + $0x4] sm:$0xf]
    %v3486 = vld [vmem:[%s3 + $0x8] sm:$0xf]
    %v3487 = vld [vmem:[%s3 + $0xc] sm:$0xf]
    %v3488 = vld [vmem:[%s3 + $0x10] sm:$0xf]
    %v3489 = vld [vmem:[%s3 + $0x14] sm:$0xf]
    %v3490 = vld [vmem:[%s3 + $0x18] sm:$0xf]
    %v3491 = vld [vmem:[%s3 + $0x1c] sm:$0xf]
    %v3492 = vld [vmem:[%s3 + $0x20] sm:$0xf]
    %v3493 = vld [vmem:[%s3 + $0x24] sm:$0xf]
    %v3494 = vld [vmem:[%s3 + $0x28] sm:$0xf]
    %v3495 = vld [vmem:[%s3 + $0x2c] sm:$0xf]
    %v3496 = vld [vmem:[%s3 + $0x30] sm:$0xf]
    %v3497 = vld [vmem:[%s3 + $0x34] sm:$0xf]
    %v3498 = vld [vmem:[%s3 + $0x38] sm:$0xf]
    %v3499 = vld [vmem:[%s3 + $0x3c] sm:$0xf]
    %v3500 = vld [vmem:[#allocation7] sm:$0x1]
    %v3502 = vlaneseq
    %v3503 = vshrl.u32 %v3502, 7
    %v3504 = vsub.s32 0, %v3503
    %v3505 = vrot.slane %v3500, %v3504
    %v3523 = vunpack.c.l.b16 %v3484
    %v3524 = vunpack.c.l.b16 %v3485
    %v3525 = vunpack.c.l.b16 %v3486
    %v3526 = vunpack.c.l.b16 %v3487
    %v3527 = vunpack.c.l.b16 %v3488
    %v3528 = vunpack.c.l.b16 %v3489
    %v3529 = vunpack.c.l.b16 %v3490
    %v3530 = vunpack.c.l.b16 %v3491
    %v3531 = vunpack.c.l.b16 %v3492
    %v3532 = vunpack.c.l.b16 %v3493
    %v3533 = vunpack.c.l.b16 %v3494
    %v3534 = vunpack.c.l.b16 %v3495
    %v3535 = vunpack.c.l.b16 %v3496
    %v3536 = vunpack.c.l.b16 %v3497
    %v3537 = vunpack.c.l.b16 %v3498
    %v3538 = vunpack.c.l.b16 %v3499
    %v3539 = vpack.c.b16 %v3524, %v3523
    %v3540 = vpack.c.b16 %v3526, %v3525
    %v3541 = vpack.c.b16 %v3528, %v3527
    %v3542 = vpack.c.b16 %v3530, %v3529
    %v3543 = vpack.c.b16 %v3532, %v3531
    %v3544 = vpack.c.b16 %v3534, %v3533
    %v3545 = vpack.c.b16 %v3536, %v3535
    %v3546 = vpack.c.b16 %v3538, %v3537
    %3555 = vmatprep.subr.bf16.mxu0 0
    %3556 = vmatpush1.bf16.msra.mxu0 %v3539
    %3557 = vmatprep.subr.bf16.mxu0 0
    %3558 = vmatpush1.bf16.msra.mxu0 %v3540
    %3559 = vmatprep.subr.bf16.mxu0 0
    %3560 = vmatpush1.bf16.msra.mxu0 %v3541
    %3561 = vmatprep.subr.bf16.mxu0 0
    %3562 = vmatpush1.bf16.msra.mxu0 %v3542
    %3563 = vmatprep.subr.bf16.mxu0 0
    %3564 = vmatpush1.bf16.msra.mxu0 %v3543
    %3565 = vmatprep.subr.bf16.mxu0 0
    %3566 = vmatpush1.bf16.msra.mxu0 %v3544
    %3567 = vmatprep.subr.bf16.mxu0 0
    %3568 = vmatpush1.bf16.msra.mxu0 %v3545
    %3569 = vmatprep.subr.bf16.mxu0 0
    %3570 = vmatpush1.bf16.msra.mxu0 %v3546
    %3571 = vmatprep.subr.bf16.mxu0 0
    %3572 = vmatpush1.bf16.msra.mxu0 0
    %3573 = vmatprep.subr.bf16.mxu0 0
    %3574 = vmatpush1.bf16.msra.mxu0 0
    %3575 = vmatprep.subr.bf16.mxu0 0
    %3576 = vmatpush1.bf16.msra.mxu0 0
    %3577 = vmatprep.subr.bf16.mxu0 0
    %3578 = vmatpush1.bf16.msra.mxu0 0
    %3579 = vmatprep.subr.bf16.mxu0 0
    %3580 = vmatpush1.bf16.msra.mxu0 0
    %3581 = vmatprep.subr.bf16.mxu0 0
    %3582 = vmatpush1.bf16.msra.mxu0 0
    %3583 = vmatprep.subr.bf16.mxu0 0
    %3584 = vmatpush1.bf16.msra.mxu0 0
    %3585 = vmatprep.subr.bf16.mxu0 0
    %3586 = vmatpush1.bf16.msra.mxu0 0
    %3587 = vmatprep.mubr.bf16.mxu0 0
    %3588 = vmatmul.mubr.bf16.gmra.mrb[0].mxu0 %v3483
    %v3589 = vpop.f32.mrb[0].mxu0
    %v3590 = vadd.f32 %v3505, %v3589
    %v3591 = vpop.f32.mrb[0].mxu0
    %v3592 = vpop.f32.mrb[0].mxu0
    %v3593 = vpop.f32.mrb[0].mxu0
    %3594 = vdwg.mxu0
    %v3595 = vmax.f32 %v3590, 0.0
    %v3596 = vpack.c.bf16 %v3595, %v3595
    %v3597 = vld [vmem:[%s5] sm:$0xf]
    %v3598 = vld [vmem:[%s5 + $0x4] sm:$0x1]
    %v3599 = vld [vmem:[#allocation9] sm:$0x1]
    %v3601 = vlaneseq
    %v3602 = vshrl.u32 %v3601, 7
    %v3603 = vsub.s32 0, %v3602
    %v3604 = vrot.slane %v3599, %v3603
    %v3608 = vunpack.c.l.b16 %v3597
    %v3609 = vunpack.c.l.b16 %v3598
    %v3610 = vpack.c.b16 %v3609, %v3608
    %vm3611 = vcmask 80896
    %v3613 = vsel %vm3611, %v3596, 0
    %vm3615 = vcmask 1044480
    %v3617 = vsel %vm3615, %v3610, 0
    %3619 = vmatprep.subr.bf16.mxu0 0
    %3620 = vmatpush1.bf16.msra.mxu0 %v3617
    %3621 = vmatprep.subr.bf16.mxu0 0
    %3622 = vmatpush1.bf16.msra.mxu0 0
    %3623 = vmatprep.subr.bf16.mxu0 0
    %3624 = vmatpush1.bf16.msra.mxu0 0
    %3625 = vmatprep.subr.bf16.mxu0 0
    %3626 = vmatpush1.bf16.msra.mxu0 0
    %3627 = vmatprep.subr.bf16.mxu0 0
    %3628 = vmatpush1.bf16.msra.mxu0 0
    %3629 = vmatprep.subr.bf16.mxu0 0
    %3630 = vmatpush1.bf16.msra.mxu0 0
    %3631 = vmatprep.subr.bf16.mxu0 0
    %3632 = vmatpush1.bf16.msra.mxu0 0
    %3633 = vmatprep.subr.bf16.mxu0 0
    %3634 = vmatpush1.bf16.msra.mxu0 0
    %3635 = vmatprep.subr.bf16.mxu0 0
    %3636 = vmatpush1.bf16.msra.mxu0 0
    %3637 = vmatprep.subr.bf16.mxu0 0
    %3638 = vmatpush1.bf16.msra.mxu0 0
    %3639 = vmatprep.subr.bf16.mxu0 0
    %3640 = vmatpush1.bf16.msra.mxu0 0
    %3641 = vmatprep.subr.bf16.mxu0 0
    %3642 = vmatpush1.bf16.msra.mxu0 0
    %3643 = vmatprep.subr.bf16.mxu0 0
    %3644 = vmatpush1.bf16.msra.mxu0 0
    %3645 = vmatprep.subr.bf16.mxu0 0
    %3646 = vmatpush1.bf16.msra.mxu0 0
    %3647 = vmatprep.subr.bf16.mxu0 0
    %3648 = vmatpush1.bf16.msra.mxu0 0
    %3649 = vmatprep.subr.bf16.mxu0 0
    %3650 = vmatpush1.bf16.msra.mxu0 0
    %3651 = vmatprep.mubr.bf16.mxu0 0
    %3652 = vmatmul.mubr.bf16.gmra.mrb[0].mxu0 %v3613
    %v3653 = vpop.f32.mrb[0].mxu0
    %v3654 = vadd.f32 %v3604, %v3653
    %v3655 = vpop.f32.mrb[0].mxu0
    %v3656 = vpop.f32.mrb[0].mxu0
    %v3657 = vpop.f32.mrb[0].mxu0
    %3658 = vdwg.mxu0
    %vm3659 = vcmask 15360
    %3660 = vst.msk [vmem:[%s7] sm:$0xff] %vm3659, %v3654
    // Predicated region
    $region50: #{tpu_custom_call.1} parent=1 // pred_check
      _
    $region51: #{tpu_custom_call.1} parent=1 // pred_check_branch
      %3662 = sbr.rel (0) target = $region53
    $region52: #{tpu_custom_call.1} parent=1 // pred_region
      _
    $region53: #{tpu_custom_call.1} parent=1 // pred_fallthru
      _
    // Predicated region
    $region54: #{tpu_custom_call.1} parent=1 // pred_check
      _
    $region55: #{tpu_custom_call.1} parent=1 // pred_check_branch
      %3664 = sbr.rel (0) target = $region57
    $region56: #{tpu_custom_call.1} parent=1 // pred_region
      _
    $region57: #{tpu_custom_call.1} parent=1 // pred_fallthru
      _
    %3665 = vsyncpa [#allocation3], 1
    %3666 = vsyncpa [#allocation5], 1
    %3667 = vsyncpa [#allocation8], 1

</llo_original>
